<compile_context>
chip_gen: v7x
topology: tpu7x:2x2x1
jax: 0.10.0
libtpu: 0.0.40
codegen_flags: <defaults>
</compile_context>

<pallas_src>
import functools
import jax
import jax.numpy as jnp
from jax.experimental import pallas as pl
from jax.experimental.pallas import tpu as pltpu


def _swap01(t):
    """(a, b, c) -> (b, a, c); minor (lane) dim untouched."""
    if hasattr(pltpu, "einshape"):
        return pltpu.einshape("abc->bac", t)
    return jnp.transpose(t, (1, 0, 2))


def block_kernel(*refs, num_heads, head_dim, eps, seq_len, has_bias, approx_gelu):
    if has_bias:
        (x_ref, bias_ref, ln1_w_ref, ln1_b_ref, qkv_w_ref, qkv_b_ref,
         proj_w_ref, proj_b_ref, ln2_w_ref, ln2_b_ref,
         fc1_w_ref, fc1_b_ref, fc2_w_ref, fc2_b_ref, out_ref) = refs
    else:
        (x_ref, ln1_w_ref, ln1_b_ref, qkv_w_ref, qkv_b_ref,
         proj_w_ref, proj_b_ref, ln2_w_ref, ln2_b_ref,
         fc1_w_ref, fc1_b_ref, fc2_w_ref, fc2_b_ref, out_ref) = refs
        bias_ref = None

    N = x_ref.shape[1]                       # padded sequence length
    C = num_heads * head_dim
    x = x_ref[0].astype(jnp.float32)         # (N, C) fp32

    def layernorm(v, w, b):                  # fused-stats fp32 LayerNorm
        mu = jnp.mean(v, axis=-1, keepdims=True)
        var = jnp.maximum(jnp.mean(v * v, axis=-1, keepdims=True) - mu * mu, 0.0)
        return (v - mu) * jax.lax.rsqrt(var + eps) * w + b

    # ---- attention branch ---------------------------------------------------
    xn = layernorm(x, ln1_w_ref[0], ln1_b_ref[0])
    # attention scale is pre-folded into the q columns of qkv_w / qkv_b.
    qkv = jnp.dot(xn.astype(jnp.bfloat16), qkv_w_ref[...],
                  preferred_element_type=jnp.float32) + qkv_b_ref[0]

    def heads(sl):                           # (N, C) -> (H, N, d) bf16
        return _swap01(sl.astype(jnp.bfloat16).reshape(N, num_heads, head_dim))

    q = heads(qkv[:, 0:C])
    k = heads(qkv[:, C:2 * C])
    v = heads(qkv[:, 2 * C:3 * C])

    s = jnp.einsum('hnd,hmd->hnm', q, k,
                   preferred_element_type=jnp.float32)       # (H, N, N) fp32
    if has_bias:
        s = s + bias_ref[...].astype(jnp.float32)            # rel-pos (+ pad mask) bias
    elif seq_len < N:
        # pad-key mask generated in-kernel: no (H, N, N) tensor DMA'd at all.
        col = jax.lax.broadcasted_iota(jnp.int32, (N, N), 1)
        s = s + jnp.where(col >= seq_len, -1e9, 0.0).astype(jnp.float32)

    m = jnp.max(s, axis=-1, keepdims=True)
    p = jnp.exp(s - m)
    l = jnp.sum(p, axis=-1, keepdims=True)
    attn = (p * pl.reciprocal(l, approx=True)).astype(jnp.bfloat16)
    ctx = jnp.einsum('hnm,hmd->hnd', attn, v,
                     preferred_element_type=jnp.float32)     # (H, N, d) fp32
    ctx = _swap01(ctx).reshape(N, C).astype(jnp.bfloat16)    # (N, C) bf16

    # gamma_1 is pre-folded into proj_w / proj_b.
    attn_out = jnp.dot(ctx, proj_w_ref[...],
                       preferred_element_type=jnp.float32) + proj_b_ref[0]
    x1 = x + attn_out

    # ---- MLP branch ---------------------------------------------------------
    xn2 = layernorm(x1, ln2_w_ref[0], ln2_b_ref[0])
    hdn = jnp.dot(xn2.astype(jnp.bfloat16), fc1_w_ref[...],
                  preferred_element_type=jnp.float32) + fc1_b_ref[0]
    hdn = jax.nn.gelu(hdn, approximate=approx_gelu)          # tanh GELU -> EUP slot
    mlp_out = jnp.dot(hdn.astype(jnp.bfloat16), fc2_w_ref[...],
                      preferred_element_type=jnp.float32) + fc2_b_ref[0]

    # gamma_2 is pre-folded into fc2_w / fc2_b.
    out_ref[0] = (x1 + mlp_out).astype(out_ref.dtype)


def beit_block(x, rel_pos_bias, params, *, num_heads, eps=1e-5, approx_gelu=True):
    B, N, C = x.shape
    head_dim = C // num_heads
    scale = head_dim ** -0.5
    Hm = params["fc1_w"].shape[1]
    f32, bf16 = jnp.float32, jnp.bfloat16

    # --- pad tokens to a sublane-friendly multiple of 16 (masked + sliced off) ---
    mult = 16
    Np = ((N + mult - 1) // mult) * mult
    pad = Np - N
    xp = jnp.pad(x, ((0, 0), (0, pad), (0, 0))) if pad else x

    has_bias = rel_pos_bias is not None
    if has_bias:
        bias = jnp.pad(rel_pos_bias, ((0, 0), (0, pad), (0, pad))) if pad else rel_pos_bias
        if pad:
            key_is_pad = jnp.arange(Np) >= N
            bias = jnp.where(key_is_pad[None, None, :], -1e9, bias)
        bias = bias.astype(bf16)             # halve bias VMEM / DMA

    # --- fold constants into weights; store matmul weights in bf16 --------------
    col_scale = jnp.concatenate([jnp.full((C,), scale, f32), jnp.ones((2 * C,), f32)])
    qkv_w = (params["qkv_w"].astype(f32) * col_scale[None, :]).astype(bf16)
    qkv_b = (params["qkv_b"].reshape(-1).astype(f32) * col_scale).reshape(1, 3 * C)
    g1 = params["gamma1"].reshape(-1).astype(f32)
    proj_w = (params["proj_w"].astype(f32) * g1[None, :]).astype(bf16)
    proj_b = (params["proj_b"].reshape(-1).astype(f32) * g1).reshape(1, C)
    g2 = params["gamma2"].reshape(-1).astype(f32)
    fc2_w = (params["fc2_w"].astype(f32) * g2[None, :]).astype(bf16)
    fc2_b = (params["fc2_b"].reshape(-1).astype(f32) * g2).reshape(1, C)
    fc1_w = params["fc1_w"].astype(bf16)
    fc1_b = params["fc1_b"].reshape(1, Hm).astype(f32)
    ln1_w = params["ln1_w"].reshape(1, C).astype(f32)
    ln1_b = params["ln1_b"].reshape(1, C).astype(f32)
    ln2_w = params["ln2_w"].reshape(1, C).astype(f32)
    ln2_b = params["ln2_b"].reshape(1, C).astype(f32)

    const_operands = (ln1_w, ln1_b, qkv_w, qkv_b, proj_w, proj_b,
                      ln2_w, ln2_b, fc1_w, fc1_b, fc2_w, fc2_b)
    const_shapes = [tuple(a.shape) for a in const_operands]
    operands = (xp,) + ((bias,) if has_bias else ()) + const_operands

    # --- VMEM budget: constants (x nbuf) + pipelined x/out tiles + fp32 temps ---
    bytes_const = sum(int(a.size) * a.dtype.itemsize for a in const_operands)
    if has_bias:
        bytes_const += int(bias.size) * bias.dtype.itemsize
    bytes_tiles = 2 * 2 * Np * C * x.dtype.itemsize          # x + out, double-buffered
    bytes_interm = 4 * (Np * 3 * C + 2 * num_heads * Np * Np + Np * Hm + 6 * Np * C)
    try:
        cap = int(0.8 * int(pltpu.get_tpu_info().vmem_capacity_bytes))
    except Exception:
        cap = 48 << 20                                        # conservative (v7x-safe)
    if cap <= 0:
        cap = 48 << 20

    kernel = functools.partial(block_kernel, num_heads=num_heads, head_dim=head_dim,
                               eps=eps, seq_len=N, has_bias=has_bias,
                               approx_gelu=approx_gelu)

    def run(single_buffer_consts):
        nbuf = 1 if single_buffer_consts else 2
        est = nbuf * bytes_const + bytes_tiles + bytes_interm + (2 << 20)
        vmem_limit = int(min(cap, max(16 << 20, est)))

        def const_spec(shp):
            idx = (lambda b, _n=len(shp): (0,) * _n)
            if single_buffer_consts:
                # constant index_map -> fetched once; no point double-buffering.
                return pl.BlockSpec(shp, idx, pipeline_mode=pl.Buffered(1))
            return pl.BlockSpec(shp, idx)

        in_specs = [pl.BlockSpec((1, Np, C), lambda b: (b, 0, 0))]   # x: 1 batch / step
        if has_bias:
            in_specs.append(const_spec((num_heads, Np, Np)))         # additive attn bias
        in_specs += [const_spec(shp) for shp in const_shapes]

        return pl.pallas_call(
            kernel,
            out_shape=jax.ShapeDtypeStruct((B, Np, C), x.dtype),
            grid=(B,),
            in_specs=in_specs,
            out_specs=pl.BlockSpec((1, Np, C), lambda b: (b, 0, 0)),
            compiler_params=pltpu.CompilerParams(
                dimension_semantics=("parallel",),
                vmem_limit_bytes=vmem_limit),
        )(*operands)

    try:
        out = run(True)
    except Exception:
        # pipeline_mode=pl.Buffered(1) unsupported on this jax build -> default buffering.
        out = run(False)
    return out[:, :N, :] if pad else out


def reference(x, rel_pos_bias, p, num_heads, eps=1e-5):
    B, N, C = x.shape
    hd = C // num_heads
    scale = hd ** -0.5

    def ln(v, w, b):
        mu = v.mean(-1, keepdims=True)
        var = ((v - mu) ** 2).mean(-1, keepdims=True)
        return (v - mu) / jnp.sqrt(var + eps) * w + b

    xn = ln(x, p["ln1_w"][0], p["ln1_b"][0])
    qkv = xn @ p["qkv_w"] + p["qkv_b"][0]
    qkv = qkv.reshape(B, N, 3, num_heads, hd).transpose(2, 0, 3, 1, 4)
    q, k, v = qkv[0] * scale, qkv[1], qkv[2]
    attn = jnp.einsum('bhnd,bhmd->bhnm', q, k)
    if rel_pos_bias is not None:
        attn = attn + rel_pos_bias[None]
    attn = jax.nn.softmax(attn, -1)
    o = jnp.einsum('bhnm,bhmd->bhnd', attn, v).transpose(0, 2, 1, 3).reshape(B, N, C)
    o = o @ p["proj_w"] + p["proj_b"][0]
    x1 = x + p["gamma1"][0] * o
    xn2 = ln(x1, p["ln2_w"][0], p["ln2_b"][0])
    h = jax.nn.gelu(xn2 @ p["fc1_w"] + p["fc1_b"][0], approximate=False)
    m = h @ p["fc2_w"] + p["fc2_b"][0]
    return x1 + p["gamma2"][0] * m


if __name__ == "__main__":
    B, N, C = 2, 8, 32
    num_heads = 4
    mlp_hidden = int(C * 4.0)
    init_values = 0.1                                 # gamma_1 / gamma_2 present

    key = jax.random.PRNGKey(0)
    ks = jax.random.split(key, 15)

    x = jax.random.normal(ks[0], (B, N, C), jnp.float32)

    # nn.Linear(dim, 3*dim, bias=False) weight is (3C, C); store transposed (C, 3C).
    qkv_w = (jax.random.normal(ks[1], (3 * C, C), jnp.float32) * 0.05).T
    q_bias = jax.random.normal(ks[2], (C,), jnp.float32) * 0.02
    v_bias = jax.random.normal(ks[3], (C,), jnp.float32) * 0.02
    qkv_b = jnp.concatenate([q_bias, jnp.zeros_like(q_bias), v_bias])  # k-bias is zero

    params = {
        "ln1_w": (1.0 + 0.05 * jax.random.normal(ks[4], (C,))).reshape(1, C),
        "ln1_b": (0.02 * jax.random.normal(ks[5], (C,))).reshape(1, C),
        "qkv_w": qkv_w,
        "qkv_b": qkv_b.reshape(1, 3 * C),
        "proj_w": (jax.random.normal(ks[6], (C, C), jnp.float32) * 0.05).T,
        "proj_b": (0.02 * jax.random.normal(ks[7], (C,))).reshape(1, C),
        "gamma1": jnp.full((1, C), init_values, jnp.float32),
        "ln2_w": (1.0 + 0.05 * jax.random.normal(ks[8], (C,))).reshape(1, C),
        "ln2_b": (0.02 * jax.random.normal(ks[9], (C,))).reshape(1, C),
        "fc1_w": (jax.random.normal(ks[10], (mlp_hidden, C), jnp.float32) * 0.05).T,
        "fc1_b": (0.02 * jax.random.normal(ks[11], (mlp_hidden,))).reshape(1, mlp_hidden),
        "fc2_w": (jax.random.normal(ks[12], (C, mlp_hidden), jnp.float32) * 0.05).T,
        "fc2_b": (0.02 * jax.random.normal(ks[13], (C,))).reshape(1, C),
        "gamma2": jnp.full((1, C), init_values, jnp.float32),
    }

    # Path 1: window_size=None and rel_pos_bias=None (as in the PyTorch default):
    # no bias operand at all, pad-key mask generated in-kernel.
    out = jax.block_until_ready(beit_block(x, None, params, num_heads=num_heads))
    ref = reference(x, None, params, num_heads)
    assert out.shape == (B, N, C)
    err = float(jnp.max(jnp.abs(out - ref)))
    # bf16 matmuls (fp32 acc), approx reciprocal, tanh GELU -> loosened tolerance.
    assert jnp.allclose(out, ref, atol=2e-2, rtol=2e-2), err

    # Path 2: caller-supplied shared rel_pos_bias (the rel_pos_bias=... forward arg).
    rel_pos_bias = 0.05 * jax.random.normal(ks[14], (num_heads, N, N), jnp.float32)
    out2 = jax.block_until_ready(beit_block(x, rel_pos_bias, params, num_heads=num_heads))
    ref2 = reference(x, rel_pos_bias, params, num_heads)
    err2 = float(jnp.max(jnp.abs(out2 - ref2)))
    assert jnp.allclose(out2, ref2, atol=2e-2, rtol=2e-2), err2

    print("KERNEL_OK")
</pallas_src>

<mosaic_0001>
module attributes {stable_mosaic.version = 11 : i64} {
  func.func @block_kernel(%arg0: i32, %arg1: memref<1x16x32xf32, #tpu.memory_space<vmem>>, %arg2: memref<1x32xf32, #tpu.memory_space<vmem>>, %arg3: memref<1x32xf32, #tpu.memory_space<vmem>>, %arg4: memref<32x96xbf16, #tpu.memory_space<vmem>>, %arg5: memref<1x96xf32, #tpu.memory_space<vmem>>, %arg6: memref<32x32xbf16, #tpu.memory_space<vmem>>, %arg7: memref<1x32xf32, #tpu.memory_space<vmem>>, %arg8: memref<1x32xf32, #tpu.memory_space<vmem>>, %arg9: memref<1x32xf32, #tpu.memory_space<vmem>>, %arg10: memref<32x128xbf16, #tpu.memory_space<vmem>>, %arg11: memref<1x128xf32, #tpu.memory_space<vmem>>, %arg12: memref<128x32xbf16, #tpu.memory_space<vmem>>, %arg13: memref<1x32xf32, #tpu.memory_space<vmem>>, %arg14: memref<1x16x32xf32, #tpu.memory_space<vmem>>) attributes {dimension_semantics = [#tpu.dimension_semantics<parallel>], iteration_bounds = array<i64: 2>, scalar_prefetch = 0 : i64, scratch_operands = 0 : i64, tpu.core_type = #tpu.core_type<tc>, window_params = [{transform_indices = @transform_0, window_bounds = array<i64: 1, 16, 32>}, {pipeline_mode = #tpu.pipeline_mode<synchronous>, transform_indices = @transform_1, window_bounds = array<i64: 1, 32>}, {pipeline_mode = #tpu.pipeline_mode<synchronous>, transform_indices = @transform_2, window_bounds = array<i64: 1, 32>}, {pipeline_mode = #tpu.pipeline_mode<synchronous>, transform_indices = @transform_3, window_bounds = array<i64: 32, 96>}, {pipeline_mode = #tpu.pipeline_mode<synchronous>, transform_indices = @transform_4, window_bounds = array<i64: 1, 96>}, {pipeline_mode = #tpu.pipeline_mode<synchronous>, transform_indices = @transform_5, window_bounds = array<i64: 32, 32>}, {pipeline_mode = #tpu.pipeline_mode<synchronous>, transform_indices = @transform_6, window_bounds = array<i64: 1, 32>}, {pipeline_mode = #tpu.pipeline_mode<synchronous>, transform_indices = @transform_7, window_bounds = array<i64: 1, 32>}, {pipeline_mode = #tpu.pipeline_mode<synchronous>, transform_indices = @transform_8, window_bounds = array<i64: 1, 32>}, {pipeline_mode = #tpu.pipeline_mode<synchronous>, transform_indices = @transform_9, window_bounds = array<i64: 32, 128>}, {pipeline_mode = #tpu.pipeline_mode<synchronous>, transform_indices = @transform_10, window_bounds = array<i64: 1, 128>}, {pipeline_mode = #tpu.pipeline_mode<synchronous>, transform_indices = @transform_11, window_bounds = array<i64: 128, 32>}, {pipeline_mode = #tpu.pipeline_mode<synchronous>, transform_indices = @transform_12, window_bounds = array<i64: 1, 32>}, {transform_indices = @transform_13, window_bounds = array<i64: 1, 16, 32>}]} {
    %c0 = arith.constant 0 : index
    %c0_0 = arith.constant 0 : index
    %c0_1 = arith.constant 0 : index
    %0 = vector.load %arg1[%c0, %c0_0, %c0_1] : memref<1x16x32xf32, #tpu.memory_space<vmem>>, vector<1x16x32xf32>
    %1 = vector.shape_cast %0 : vector<1x16x32xf32> to vector<16x32xf32>
    %c0_2 = arith.constant 0 : index
    %c0_3 = arith.constant 0 : index
    %2 = vector.load %arg2[%c0_2, %c0_3] : memref<1x32xf32, #tpu.memory_space<vmem>>, vector<1x32xf32>
    %3 = vector.shape_cast %2 : vector<1x32xf32> to vector<32xf32>
    %c0_4 = arith.constant 0 : index
    %c0_5 = arith.constant 0 : index
    %4 = vector.load %arg3[%c0_4, %c0_5] : memref<1x32xf32, #tpu.memory_space<vmem>>, vector<1x32xf32>
    %5 = vector.shape_cast %4 : vector<1x32xf32> to vector<32xf32>
    %cst = arith.constant dense<0.000000e+00> : vector<16xf32>
    %6 = vector.multi_reduction <add>, %1, %cst [1] : vector<16x32xf32> to vector<16xf32>
    %7 = vector.shape_cast %6 : vector<16xf32> to vector<16x1xf32>
    %cst_6 = arith.constant 3.200000e+01 : f32
    %8 = vector.broadcast %cst_6 : f32 to vector<16x1xf32>
    %9 = arith.divf %7, %8 : vector<16x1xf32>
    %10 = arith.mulf %1, %1 : vector<16x32xf32>
    %cst_7 = arith.constant dense<0.000000e+00> : vector<16xf32>
    %11 = vector.multi_reduction <add>, %10, %cst_7 [1] : vector<16x32xf32> to vector<16xf32>
    %12 = vector.shape_cast %11 : vector<16xf32> to vector<16x1xf32>
    %cst_8 = arith.constant 3.200000e+01 : f32
    %13 = vector.broadcast %cst_8 : f32 to vector<16x1xf32>
    %14 = arith.divf %12, %13 : vector<16x1xf32>
    %15 = arith.mulf %9, %9 : vector<16x1xf32>
    %16 = arith.subf %14, %15 : vector<16x1xf32>
    %cst_9 = arith.constant 0.000000e+00 : f32
    %17 = vector.broadcast %cst_9 : f32 to vector<16x1xf32>
    %18 = arith.maximumf %16, %17 : vector<16x1xf32>
    %19 = vector.broadcast %9 : vector<16x1xf32> to vector<16x32xf32>
    %20 = arith.subf %1, %19 : vector<16x32xf32>
    %cst_10 = arith.constant 9.99999974E-6 : f32
    %21 = vector.broadcast %cst_10 : f32 to vector<16x1xf32>
    %22 = arith.addf %18, %21 : vector<16x1xf32>
    %23 = math.rsqrt %22 : vector<16x1xf32>
    %24 = vector.broadcast %23 : vector<16x1xf32> to vector<16x32xf32>
    %25 = arith.mulf %20, %24 : vector<16x32xf32>
    %26 = vector.shape_cast %3 : vector<32xf32> to vector<1x32xf32>
    %27 = vector.broadcast %26 : vector<1x32xf32> to vector<16x32xf32>
    %28 = arith.mulf %25, %27 : vector<16x32xf32>
    %29 = vector.shape_cast %5 : vector<32xf32> to vector<1x32xf32>
    %30 = vector.broadcast %29 : vector<1x32xf32> to vector<16x32xf32>
    %31 = arith.addf %28, %30 : vector<16x32xf32>
    %32 = arith.truncf %31 : vector<16x32xf32> to vector<16x32xbf16>
    %c0_11 = arith.constant 0 : index
    %c0_12 = arith.constant 0 : index
    %33 = vector.load %arg4[%c0_11, %c0_12] : memref<32x96xbf16, #tpu.memory_space<vmem>>, vector<32x96xbf16>
    %cst_13 = arith.constant dense<0.000000e+00> : vector<16x96xf32>
    %34 = tpu.matmul %32, %33, %cst_13 {dimension_numbers = #tpu.dot_dimension_numbers<[1], [0], [0], [1], [0, 0, 1, 1], [], []>} : vector<16x32xbf16>, vector<32x96xbf16>, vector<16x96xf32> -> vector<16x96xf32>
    %c0_14 = arith.constant 0 : index
    %c0_15 = arith.constant 0 : index
    %35 = vector.load %arg5[%c0_14, %c0_15] : memref<1x96xf32, #tpu.memory_space<vmem>>, vector<1x96xf32>
    %36 = vector.shape_cast %35 : vector<1x96xf32> to vector<96xf32>
    %37 = vector.shape_cast %36 : vector<96xf32> to vector<1x96xf32>
    %38 = vector.broadcast %37 : vector<1x96xf32> to vector<16x96xf32>
    %39 = arith.addf %34, %38 : vector<16x96xf32>
    %40 = vector.extract_strided_slice %39 {offsets = [0, 0], sizes = [16, 32], strides = [1, 1]} : vector<16x96xf32> to vector<16x32xf32>
    %41 = arith.truncf %40 : vector<16x32xf32> to vector<16x32xbf16>
    %42 = vector.shape_cast %41 : vector<16x32xbf16> to vector<16x4x8xbf16>
    %43 = tpu.transpose %42, [1, 0, 2] : vector<16x4x8xbf16> -> vector<4x16x8xbf16>
    %44 = vector.extract_strided_slice %39 {offsets = [0, 32], sizes = [16, 32], strides = [1, 1]} : vector<16x96xf32> to vector<16x32xf32>
    %45 = arith.truncf %44 : vector<16x32xf32> to vector<16x32xbf16>
    %46 = vector.shape_cast %45 : vector<16x32xbf16> to vector<16x4x8xbf16>
    %47 = tpu.transpose %46, [1, 0, 2] : vector<16x4x8xbf16> -> vector<4x16x8xbf16>
    %48 = vector.extract_strided_slice %39 {offsets = [0, 64], sizes = [16, 32], strides = [1, 1]} : vector<16x96xf32> to vector<16x32xf32>
    %49 = arith.truncf %48 : vector<16x32xf32> to vector<16x32xbf16>
    %50 = vector.shape_cast %49 : vector<16x32xbf16> to vector<16x4x8xbf16>
    %51 = tpu.transpose %50, [1, 0, 2] : vector<16x4x8xbf16> -> vector<4x16x8xbf16>
    "tpu.trace_start"() <{level = 10 : i32, message = "hnd,hmd->hnm"}> : () -> ()
    %cst_16 = arith.constant dense<0.000000e+00> : vector<4x16x16xf32>
    %52 = tpu.matmul %43, %47, %cst_16 {dimension_numbers = #tpu.dot_dimension_numbers<[2], [2], [1], [1], [0, 0, 0, 1, 1, 1], [0], [0]>} : vector<4x16x8xbf16>, vector<4x16x8xbf16>, vector<4x16x16xf32> -> vector<4x16x16xf32>
    "tpu.trace_stop"() : () -> ()
    %53 = tpu.iota {dimensions = array<i32: 1>} : vector<16x16xi32>
    %c8_i32 = arith.constant 8 : i32
    %54 = vector.broadcast %c8_i32 : i32 to vector<16x16xi32>
    %55 = arith.cmpi sge, %53, %54 : vector<16x16xi32>
    %cst_17 = arith.constant -1.000000e+09 : f32
    %cst_18 = arith.constant 0.000000e+00 : f32
    %56 = vector.broadcast %cst_17 : f32 to vector<16x16xf32>
    %57 = vector.broadcast %cst_18 : f32 to vector<16x16xf32>
    %58 = arith.select %55, %56, %57 : vector<16x16xi1>, vector<16x16xf32>
    %59 = vector.shape_cast %58 : vector<16x16xf32> to vector<1x16x16xf32>
    %60 = vector.broadcast %59 : vector<1x16x16xf32> to vector<4x16x16xf32>
    %61 = arith.addf %52, %60 : vector<4x16x16xf32>
    %cst_19 = arith.constant dense<0xFF800000> : vector<4x16xf32>
    %62 = vector.multi_reduction <maximumf>, %61, %cst_19 [2] : vector<4x16x16xf32> to vector<4x16xf32>
    %63 = vector.shape_cast %62 : vector<4x16xf32> to vector<4x16x1xf32>
    %64 = vector.broadcast %63 : vector<4x16x1xf32> to vector<4x16x16xf32>
    %65 = arith.subf %61, %64 : vector<4x16x16xf32>
    %66 = math.exp %65 : vector<4x16x16xf32>
    %cst_20 = arith.constant dense<0.000000e+00> : vector<4x16xf32>
    %67 = vector.multi_reduction <add>, %66, %cst_20 [2] : vector<4x16x16xf32> to vector<4x16xf32>
    %68 = vector.shape_cast %67 : vector<4x16xf32> to vector<4x16x1xf32>
    %69 = tpu.reciprocal %68 {approx = true} : vector<4x16x1xf32> -> vector<4x16x1xf32>
    %70 = vector.broadcast %69 : vector<4x16x1xf32> to vector<4x16x16xf32>
    %71 = arith.mulf %66, %70 : vector<4x16x16xf32>
    %72 = arith.truncf %71 : vector<4x16x16xf32> to vector<4x16x16xbf16>
    "tpu.trace_start"() <{level = 10 : i32, message = "hnm,hmd->hnd"}> : () -> ()
    %cst_21 = arith.constant dense<0.000000e+00> : vector<4x16x8xf32>
    %73 = tpu.matmul %72, %51, %cst_21 {dimension_numbers = #tpu.dot_dimension_numbers<[2], [1], [1], [2], [0, 0, 0, 1, 1, 2], [0], [0]>} : vector<4x16x16xbf16>, vector<4x16x8xbf16>, vector<4x16x8xf32> -> vector<4x16x8xf32>
    "tpu.trace_stop"() : () -> ()
    %74 = tpu.transpose %73, [1, 0, 2] : vector<4x16x8xf32> -> vector<16x4x8xf32>
    %75 = vector.shape_cast %74 : vector<16x4x8xf32> to vector<16x32xf32>
    %76 = arith.truncf %75 : vector<16x32xf32> to vector<16x32xbf16>
    %c0_22 = arith.constant 0 : index
    %c0_23 = arith.constant 0 : index
    %77 = vector.load %arg6[%c0_22, %c0_23] : memref<32x32xbf16, #tpu.memory_space<vmem>>, vector<32x32xbf16>
    %cst_24 = arith.constant dense<0.000000e+00> : vector<16x32xf32>
    %78 = tpu.matmul %76, %77, %cst_24 {dimension_numbers = #tpu.dot_dimension_numbers<[1], [0], [0], [1], [0, 0, 1, 1], [], []>} : vector<16x32xbf16>, vector<32x32xbf16>, vector<16x32xf32> -> vector<16x32xf32>
    %c0_25 = arith.constant 0 : index
    %c0_26 = arith.constant 0 : index
    %79 = vector.load %arg7[%c0_25, %c0_26] : memref<1x32xf32, #tpu.memory_space<vmem>>, vector<1x32xf32>
    %80 = vector.shape_cast %79 : vector<1x32xf32> to vector<32xf32>
    %81 = vector.shape_cast %80 : vector<32xf32> to vector<1x32xf32>
    %82 = vector.broadcast %81 : vector<1x32xf32> to vector<16x32xf32>
    %83 = arith.addf %78, %82 : vector<16x32xf32>
    %84 = arith.addf %1, %83 : vector<16x32xf32>
    %c0_27 = arith.constant 0 : index
    %c0_28 = arith.constant 0 : index
    %85 = vector.load %arg8[%c0_27, %c0_28] : memref<1x32xf32, #tpu.memory_space<vmem>>, vector<1x32xf32>
    %86 = vector.shape_cast %85 : vector<1x32xf32> to vector<32xf32>
    %c0_29 = arith.constant 0 : index
    %c0_30 = arith.constant 0 : index
    %87 = vector.load %arg9[%c0_29, %c0_30] : memref<1x32xf32, #tpu.memory_space<vmem>>, vector<1x32xf32>
    %88 = vector.shape_cast %87 : vector<1x32xf32> to vector<32xf32>
    %cst_31 = arith.constant dense<0.000000e+00> : vector<16xf32>
    %89 = vector.multi_reduction <add>, %84, %cst_31 [1] : vector<16x32xf32> to vector<16xf32>
    %90 = vector.shape_cast %89 : vector<16xf32> to vector<16x1xf32>
    %cst_32 = arith.constant 3.200000e+01 : f32
    %91 = vector.broadcast %cst_32 : f32 to vector<16x1xf32>
    %92 = arith.divf %90, %91 : vector<16x1xf32>
    %93 = arith.mulf %84, %84 : vector<16x32xf32>
    %cst_33 = arith.constant dense<0.000000e+00> : vector<16xf32>
    %94 = vector.multi_reduction <add>, %93, %cst_33 [1] : vector<16x32xf32> to vector<16xf32>
    %95 = vector.shape_cast %94 : vector<16xf32> to vector<16x1xf32>
    %cst_34 = arith.constant 3.200000e+01 : f32
    %96 = vector.broadcast %cst_34 : f32 to vector<16x1xf32>
    %97 = arith.divf %95, %96 : vector<16x1xf32>
    %98 = arith.mulf %92, %92 : vector<16x1xf32>
    %99 = arith.subf %97, %98 : vector<16x1xf32>
    %cst_35 = arith.constant 0.000000e+00 : f32
    %100 = vector.broadcast %cst_35 : f32 to vector<16x1xf32>
    %101 = arith.maximumf %99, %100 : vector<16x1xf32>
    %102 = vector.broadcast %92 : vector<16x1xf32> to vector<16x32xf32>
    %103 = arith.subf %84, %102 : vector<16x32xf32>
    %cst_36 = arith.constant 9.99999974E-6 : f32
    %104 = vector.broadcast %cst_36 : f32 to vector<16x1xf32>
    %105 = arith.addf %101, %104 : vector<16x1xf32>
    %106 = math.rsqrt %105 : vector<16x1xf32>
    %107 = vector.broadcast %106 : vector<16x1xf32> to vector<16x32xf32>
    %108 = arith.mulf %103, %107 : vector<16x32xf32>
    %109 = vector.shape_cast %86 : vector<32xf32> to vector<1x32xf32>
    %110 = vector.broadcast %109 : vector<1x32xf32> to vector<16x32xf32>
    %111 = arith.mulf %108, %110 : vector<16x32xf32>
    %112 = vector.shape_cast %88 : vector<32xf32> to vector<1x32xf32>
    %113 = vector.broadcast %112 : vector<1x32xf32> to vector<16x32xf32>
    %114 = arith.addf %111, %113 : vector<16x32xf32>
    %115 = arith.truncf %114 : vector<16x32xf32> to vector<16x32xbf16>
    %c0_37 = arith.constant 0 : index
    %c0_38 = arith.constant 0 : index
    %116 = vector.load %arg10[%c0_37, %c0_38] : memref<32x128xbf16, #tpu.memory_space<vmem>>, vector<32x128xbf16>
    %cst_39 = arith.constant dense<0.000000e+00> : vector<16x128xf32>
    %117 = tpu.matmul %115, %116, %cst_39 {dimension_numbers = #tpu.dot_dimension_numbers<[1], [0], [0], [1], [0, 0, 1, 1], [], []>} : vector<16x32xbf16>, vector<32x128xbf16>, vector<16x128xf32> -> vector<16x128xf32>
    %c0_40 = arith.constant 0 : index
    %c0_41 = arith.constant 0 : index
    %118 = vector.load %arg11[%c0_40, %c0_41] : memref<1x128xf32, #tpu.memory_space<vmem>>, vector<1x128xf32>
    %119 = vector.shape_cast %118 : vector<1x128xf32> to vector<128xf32>
    %120 = vector.shape_cast %119 : vector<128xf32> to vector<1x128xf32>
    %121 = vector.broadcast %120 : vector<1x128xf32> to vector<16x128xf32>
    %122 = arith.addf %117, %121 : vector<16x128xf32>
    %123 = arith.mulf %122, %122 : vector<16x128xf32>
    %124 = arith.mulf %122, %123 : vector<16x128xf32>
    %cst_42 = arith.constant 4.471500e-02 : f32
    %125 = vector.broadcast %cst_42 : f32 to vector<16x128xf32>
    %126 = arith.mulf %125, %124 : vector<16x128xf32>
    %127 = arith.addf %122, %126 : vector<16x128xf32>
    %cst_43 = arith.constant 0.797884583 : f32
    %128 = vector.broadcast %cst_43 : f32 to vector<16x128xf32>
    %129 = arith.mulf %128, %127 : vector<16x128xf32>
    %130 = math.tanh %129 : vector<16x128xf32>
    %cst_44 = arith.constant 1.000000e+00 : f32
    %131 = vector.broadcast %cst_44 : f32 to vector<16x128xf32>
    %132 = arith.addf %131, %130 : vector<16x128xf32>
    %cst_45 = arith.constant 5.000000e-01 : f32
    %133 = vector.broadcast %cst_45 : f32 to vector<16x128xf32>
    %134 = arith.mulf %133, %132 : vector<16x128xf32>
    %135 = arith.mulf %122, %134 : vector<16x128xf32>
    %136 = arith.truncf %135 : vector<16x128xf32> to vector<16x128xbf16>
    %c0_46 = arith.constant 0 : index
    %c0_47 = arith.constant 0 : index
    %137 = vector.load %arg12[%c0_46, %c0_47] : memref<128x32xbf16, #tpu.memory_space<vmem>>, vector<128x32xbf16>
    %cst_48 = arith.constant dense<0.000000e+00> : vector<16x32xf32>
    %138 = tpu.matmul %136, %137, %cst_48 {dimension_numbers = #tpu.dot_dimension_numbers<[1], [0], [0], [1], [0, 0, 1, 1], [], []>} : vector<16x128xbf16>, vector<128x32xbf16>, vector<16x32xf32> -> vector<16x32xf32>
    %c0_49 = arith.constant 0 : index
    %c0_50 = arith.constant 0 : index
    %139 = vector.load %arg13[%c0_49, %c0_50] : memref<1x32xf32, #tpu.memory_space<vmem>>, vector<1x32xf32>
    %140 = vector.shape_cast %139 : vector<1x32xf32> to vector<32xf32>
    %141 = vector.shape_cast %140 : vector<32xf32> to vector<1x32xf32>
    %142 = vector.broadcast %141 : vector<1x32xf32> to vector<16x32xf32>
    %143 = arith.addf %138, %142 : vector<16x32xf32>
    %144 = arith.addf %84, %143 : vector<16x32xf32>
    %c0_51 = arith.constant 0 : index
    %c0_52 = arith.constant 0 : index
    %c0_53 = arith.constant 0 : index
    %145 = vector.load %arg14[%c0_51, %c0_52, %c0_53] : memref<1x16x32xf32, #tpu.memory_space<vmem>>, vector<1x16x32xf32>
    %146 = vector.shape_cast %145 : vector<1x16x32xf32> to vector<16x32xf32>
    %147 = vector.shape_cast %144 : vector<16x32xf32> to vector<1x16x32xf32>
    tpu.vector_store %arg14[%c0_51, %c0_52, %c0_53], %147 {strides = array<i32>} : memref<1x16x32xf32, #tpu.memory_space<vmem>>, vector<1x16x32xf32>,
    return
  }
  func.func @transform_0(%arg0: i32) -> (i32, i32, i32) {
    %c0_i32 = arith.constant 0 : i32
    %c0_i32_0 = arith.constant 0 : i32
    %c0_i32_1 = arith.constant 0 : i32
    return %arg0, %c0_i32, %c0_i32_0 : i32, i32, i32
  }
  func.func @transform_1(%arg0: i32) -> (i32, i32) {
    %c0_i32 = arith.constant 0 : i32
    %c0_i32_0 = arith.constant 0 : i32
    %c0_i32_1 = arith.constant 0 : i32
    return %c0_i32, %c0_i32_0 : i32, i32
  }
  func.func @transform_2(%arg0: i32) -> (i32, i32) {
    %c0_i32 = arith.constant 0 : i32
    %c0_i32_0 = arith.constant 0 : i32
    %c0_i32_1 = arith.constant 0 : i32
    return %c0_i32, %c0_i32_0 : i32, i32
  }
  func.func @transform_3(%arg0: i32) -> (i32, i32) {
    %c0_i32 = arith.constant 0 : i32
    %c0_i32_0 = arith.constant 0 : i32
    %c0_i32_1 = arith.constant 0 : i32
    return %c0_i32, %c0_i32_0 : i32, i32
  }
  func.func @transform_4(%arg0: i32) -> (i32, i32) {
    %c0_i32 = arith.constant 0 : i32
    %c0_i32_0 = arith.constant 0 : i32
    %c0_i32_1 = arith.constant 0 : i32
    return %c0_i32, %c0_i32_0 : i32, i32
  }
  func.func @transform_5(%arg0: i32) -> (i32, i32) {
    %c0_i32 = arith.constant 0 : i32
    %c0_i32_0 = arith.constant 0 : i32
    %c0_i32_1 = arith.constant 0 : i32
    return %c0_i32, %c0_i32_0 : i32, i32
  }
  func.func @transform_6(%arg0: i32) -> (i32, i32) {
    %c0_i32 = arith.constant 0 : i32
    %c0_i32_0 = arith.constant 0 : i32
    %c0_i32_1 = arith.constant 0 : i32
    return %c0_i32, %c0_i32_0 : i32, i32
  }
  func.func @transform_7(%arg0: i32) -> (i32, i32) {
    %c0_i32 = arith.constant 0 : i32
    %c0_i32_0 = arith.constant 0 : i32
    %c0_i32_1 = arith.constant 0 : i32
    return %c0_i32, %c0_i32_0 : i32, i32
  }
  func.func @transform_8(%arg0: i32) -> (i32, i32) {
    %c0_i32 = arith.constant 0 : i32
    %c0_i32_0 = arith.constant 0 : i32
    %c0_i32_1 = arith.constant 0 : i32
    return %c0_i32, %c0_i32_0 : i32, i32
  }
  func.func @transform_9(%arg0: i32) -> (i32, i32) {
    %c0_i32 = arith.constant 0 : i32
    %c0_i32_0 = arith.constant 0 : i32
    %c0_i32_1 = arith.constant 0 : i32
    return %c0_i32, %c0_i32_0 : i32, i32
  }
  func.func @transform_10(%arg0: i32) -> (i32, i32) {
    %c0_i32 = arith.constant 0 : i32
    %c0_i32_0 = arith.constant 0 : i32
    %c0_i32_1 = arith.constant 0 : i32
    return %c0_i32, %c0_i32_0 : i32, i32
  }
  func.func @transform_11(%arg0: i32) -> (i32, i32) {
    %c0_i32 = arith.constant 0 : i32
    %c0_i32_0 = arith.constant 0 : i32
    %c0_i32_1 = arith.constant 0 : i32
    return %c0_i32, %c0_i32_0 : i32, i32
  }
  func.func @transform_12(%arg0: i32) -> (i32, i32) {
    %c0_i32 = arith.constant 0 : i32
    %c0_i32_0 = arith.constant 0 : i32
    %c0_i32_1 = arith.constant 0 : i32
    return %c0_i32, %c0_i32_0 : i32, i32
  }
  func.func @transform_13(%arg0: i32) -> (i32, i32, i32) {
    %c0_i32 = arith.constant 0 : i32
    %c0_i32_0 = arith.constant 0 : i32
    %c0_i32_1 = arith.constant 0 : i32
    return %arg0, %c0_i32, %c0_i32_0 : i32, i32, i32
  }
}

module attributes {stable_mosaic.version = 11 : i64} {
  func.func @block_kernel(%arg0: i32, %arg1: memref<1x16x32xf32, #tpu.memory_space<vmem>>, %arg2: memref<1x32xf32, #tpu.memory_space<vmem>>, %arg3: memref<1x32xf32, #tpu.memory_space<vmem>>, %arg4: memref<32x96xbf16, #tpu.memory_space<vmem>>, %arg5: memref<1x96xf32, #tpu.memory_space<vmem>>, %arg6: memref<32x32xbf16, #tpu.memory_space<vmem>>, %arg7: memref<1x32xf32, #tpu.memory_space<vmem>>, %arg8: memref<1x32xf32, #tpu.memory_space<vmem>>, %arg9: memref<1x32xf32, #tpu.memory_space<vmem>>, %arg10: memref<32x128xbf16, #tpu.memory_space<vmem>>, %arg11: memref<1x128xf32, #tpu.memory_space<vmem>>, %arg12: memref<128x32xbf16, #tpu.memory_space<vmem>>, %arg13: memref<1x32xf32, #tpu.memory_space<vmem>>, %arg14: memref<1x16x32xf32, #tpu.memory_space<vmem>>) attributes {dimension_semantics = [#tpu.dimension_semantics<parallel>], iteration_bounds = array<i64: 2>, scalar_prefetch = 0 : i64, scratch_operands = 0 : i64, tpu.core_type = #tpu.core_type<tc>, window_params = [{transform_indices = @transform_0, window_bounds = array<i64: 1, 16, 32>}, {pipeline_mode = #tpu.pipeline_mode<synchronous>, transform_indices = @transform_1, window_bounds = array<i64: 1, 32>}, {pipeline_mode = #tpu.pipeline_mode<synchronous>, transform_indices = @transform_2, window_bounds = array<i64: 1, 32>}, {pipeline_mode = #tpu.pipeline_mode<synchronous>, transform_indices = @transform_3, window_bounds = array<i64: 32, 96>}, {pipeline_mode = #tpu.pipeline_mode<synchronous>, transform_indices = @transform_4, window_bounds = array<i64: 1, 96>}, {pipeline_mode = #tpu.pipeline_mode<synchronous>, transform_indices = @transform_5, window_bounds = array<i64: 32, 32>}, {pipeline_mode = #tpu.pipeline_mode<synchronous>, transform_indices = @transform_6, window_bounds = array<i64: 1, 32>}, {pipeline_mode = #tpu.pipeline_mode<synchronous>, transform_indices = @transform_7, window_bounds = array<i64: 1, 32>}, {pipeline_mode = #tpu.pipeline_mode<synchronous>, transform_indices = @transform_8, window_bounds = array<i64: 1, 32>}, {pipeline_mode = #tpu.pipeline_mode<synchronous>, transform_indices = @transform_9, window_bounds = array<i64: 32, 128>}, {pipeline_mode = #tpu.pipeline_mode<synchronous>, transform_indices = @transform_10, window_bounds = array<i64: 1, 128>}, {pipeline_mode = #tpu.pipeline_mode<synchronous>, transform_indices = @transform_11, window_bounds = array<i64: 128, 32>}, {pipeline_mode = #tpu.pipeline_mode<synchronous>, transform_indices = @transform_12, window_bounds = array<i64: 1, 32>}, {transform_indices = @transform_13, window_bounds = array<i64: 1, 16, 32>}]} {
    %c0 = arith.constant 0 : index
    %c0_0 = arith.constant 0 : index
    %c0_1 = arith.constant 0 : index
    %0 = vector.load %arg1[%c0, %c0_0, %c0_1] : memref<1x16x32xf32, #tpu.memory_space<vmem>>, vector<1x16x32xf32>
    %1 = vector.shape_cast %0 : vector<1x16x32xf32> to vector<16x32xf32>
    %c0_2 = arith.constant 0 : index
    %c0_3 = arith.constant 0 : index
    %2 = vector.load %arg2[%c0_2, %c0_3] : memref<1x32xf32, #tpu.memory_space<vmem>>, vector<1x32xf32>
    %3 = vector.shape_cast %2 : vector<1x32xf32> to vector<32xf32>
    %c0_4 = arith.constant 0 : index
    %c0_5 = arith.constant 0 : index
    %4 = vector.load %arg3[%c0_4, %c0_5] : memref<1x32xf32, #tpu.memory_space<vmem>>, vector<1x32xf32>
    %5 = vector.shape_cast %4 : vector<1x32xf32> to vector<32xf32>
    %cst = arith.constant dense<0.000000e+00> : vector<16xf32>
    %6 = vector.multi_reduction <add>, %1, %cst [1] : vector<16x32xf32> to vector<16xf32>
    %7 = vector.shape_cast %6 : vector<16xf32> to vector<16x1xf32>
    %cst_6 = arith.constant 3.200000e+01 : f32
    %8 = vector.broadcast %cst_6 : f32 to vector<16x1xf32>
    %9 = arith.divf %7, %8 : vector<16x1xf32>
    %10 = arith.mulf %1, %1 : vector<16x32xf32>
    %cst_7 = arith.constant dense<0.000000e+00> : vector<16xf32>
    %11 = vector.multi_reduction <add>, %10, %cst_7 [1] : vector<16x32xf32> to vector<16xf32>
    %12 = vector.shape_cast %11 : vector<16xf32> to vector<16x1xf32>
    %cst_8 = arith.constant 3.200000e+01 : f32
    %13 = vector.broadcast %cst_8 : f32 to vector<16x1xf32>
    %14 = arith.divf %12, %13 : vector<16x1xf32>
    %15 = arith.mulf %9, %9 : vector<16x1xf32>
    %16 = arith.subf %14, %15 : vector<16x1xf32>
    %cst_9 = arith.constant 0.000000e+00 : f32
    %17 = vector.broadcast %cst_9 : f32 to vector<16x1xf32>
    %18 = arith.maximumf %16, %17 : vector<16x1xf32>
    %19 = vector.broadcast %9 : vector<16x1xf32> to vector<16x32xf32>
    %20 = arith.subf %1, %19 : vector<16x32xf32>
    %cst_10 = arith.constant 9.99999974E-6 : f32
    %21 = vector.broadcast %cst_10 : f32 to vector<16x1xf32>
    %22 = arith.addf %18, %21 : vector<16x1xf32>
    %23 = math.rsqrt %22 : vector<16x1xf32>
    %24 = vector.broadcast %23 : vector<16x1xf32> to vector<16x32xf32>
    %25 = arith.mulf %20, %24 : vector<16x32xf32>
    %26 = vector.shape_cast %3 : vector<32xf32> to vector<1x32xf32>
    %27 = vector.broadcast %26 : vector<1x32xf32> to vector<16x32xf32>
    %28 = arith.mulf %25, %27 : vector<16x32xf32>
    %29 = vector.shape_cast %5 : vector<32xf32> to vector<1x32xf32>
    %30 = vector.broadcast %29 : vector<1x32xf32> to vector<16x32xf32>
    %31 = arith.addf %28, %30 : vector<16x32xf32>
    %32 = arith.truncf %31 : vector<16x32xf32> to vector<16x32xbf16>
    %c0_11 = arith.constant 0 : index
    %c0_12 = arith.constant 0 : index
    %33 = vector.load %arg4[%c0_11, %c0_12] : memref<32x96xbf16, #tpu.memory_space<vmem>>, vector<32x96xbf16>
    %cst_13 = arith.constant dense<0.000000e+00> : vector<16x96xf32>
    %34 = tpu.matmul %32, %33, %cst_13 {dimension_numbers = #tpu.dot_dimension_numbers<[1], [0], [0], [1], [0, 0, 1, 1], [], []>} : vector<16x32xbf16>, vector<32x96xbf16>, vector<16x96xf32> -> vector<16x96xf32>
    %c0_14 = arith.constant 0 : index
    %c0_15 = arith.constant 0 : index
    %35 = vector.load %arg5[%c0_14, %c0_15] : memref<1x96xf32, #tpu.memory_space<vmem>>, vector<1x96xf32>
    %36 = vector.shape_cast %35 : vector<1x96xf32> to vector<96xf32>
    %37 = vector.shape_cast %36 : vector<96xf32> to vector<1x96xf32>
    %38 = vector.broadcast %37 : vector<1x96xf32> to vector<16x96xf32>
    %39 = arith.addf %34, %38 : vector<16x96xf32>
    %40 = vector.extract_strided_slice %39 {offsets = [0, 0], sizes = [16, 32], strides = [1, 1]} : vector<16x96xf32> to vector<16x32xf32>
    %41 = arith.truncf %40 : vector<16x32xf32> to vector<16x32xbf16>
    %42 = vector.shape_cast %41 : vector<16x32xbf16> to vector<16x4x8xbf16>
    %43 = tpu.transpose %42, [1, 0, 2] : vector<16x4x8xbf16> -> vector<4x16x8xbf16>
    %44 = vector.extract_strided_slice %39 {offsets = [0, 32], sizes = [16, 32], strides = [1, 1]} : vector<16x96xf32> to vector<16x32xf32>
    %45 = arith.truncf %44 : vector<16x32xf32> to vector<16x32xbf16>
    %46 = vector.shape_cast %45 : vector<16x32xbf16> to vector<16x4x8xbf16>
    %47 = tpu.transpose %46, [1, 0, 2] : vector<16x4x8xbf16> -> vector<4x16x8xbf16>
    %48 = vector.extract_strided_slice %39 {offsets = [0, 64], sizes = [16, 32], strides = [1, 1]} : vector<16x96xf32> to vector<16x32xf32>
    %49 = arith.truncf %48 : vector<16x32xf32> to vector<16x32xbf16>
    %50 = vector.shape_cast %49 : vector<16x32xbf16> to vector<16x4x8xbf16>
    %51 = tpu.transpose %50, [1, 0, 2] : vector<16x4x8xbf16> -> vector<4x16x8xbf16>
    "tpu.trace_start"() <{level = 10 : i32, message = "hnd,hmd->hnm"}> : () -> ()
    %cst_16 = arith.constant dense<0.000000e+00> : vector<4x16x16xf32>
    %52 = tpu.matmul %43, %47, %cst_16 {dimension_numbers = #tpu.dot_dimension_numbers<[2], [2], [1], [1], [0, 0, 0, 1, 1, 1], [0], [0]>} : vector<4x16x8xbf16>, vector<4x16x8xbf16>, vector<4x16x16xf32> -> vector<4x16x16xf32>
    "tpu.trace_stop"() : () -> ()
    %53 = tpu.iota {dimensions = array<i32: 1>} : vector<16x16xi32>
    %c8_i32 = arith.constant 8 : i32
    %54 = vector.broadcast %c8_i32 : i32 to vector<16x16xi32>
    %55 = arith.cmpi sge, %53, %54 : vector<16x16xi32>
    %cst_17 = arith.constant -1.000000e+09 : f32
    %cst_18 = arith.constant 0.000000e+00 : f32
    %56 = vector.broadcast %cst_17 : f32 to vector<16x16xf32>
    %57 = vector.broadcast %cst_18 : f32 to vector<16x16xf32>
    %58 = arith.select %55, %56, %57 : vector<16x16xi1>, vector<16x16xf32>
    %59 = vector.shape_cast %58 : vector<16x16xf32> to vector<1x16x16xf32>
    %60 = vector.broadcast %59 : vector<1x16x16xf32> to vector<4x16x16xf32>
    %61 = arith.addf %52, %60 : vector<4x16x16xf32>
    %cst_19 = arith.constant dense<0xFF800000> : vector<4x16xf32>
    %62 = vector.multi_reduction <maximumf>, %61, %cst_19 [2] : vector<4x16x16xf32> to vector<4x16xf32>
    %63 = vector.shape_cast %62 : vector<4x16xf32> to vector<4x16x1xf32>
    %64 = vector.broadcast %63 : vector<4x16x1xf32> to vector<4x16x16xf32>
    %65 = arith.subf %61, %64 : vector<4x16x16xf32>
    %66 = math.exp %65 : vector<4x16x16xf32>
    %cst_20 = arith.constant dense<0.000000e+00> : vector<4x16xf32>
    %67 = vector.multi_reduction <add>, %66, %cst_20 [2] : vector<4x16x16xf32> to vector<4x16xf32>
    %68 = vector.shape_cast %67 : vector<4x16xf32> to vector<4x16x1xf32>
    %69 = tpu.reciprocal %68 {approx = true} : vector<4x16x1xf32> -> vector<4x16x1xf32>
    %70 = vector.broadcast %69 : vector<4x16x1xf32> to vector<4x16x16xf32>
    %71 = arith.mulf %66, %70 : vector<4x16x16xf32>
    %72 = arith.truncf %71 : vector<4x16x16xf32> to vector<4x16x16xbf16>
    "tpu.trace_start"() <{level = 10 : i32, message = "hnm,hmd->hnd"}> : () -> ()
    %cst_21 = arith.constant dense<0.000000e+00> : vector<4x16x8xf32>
    %73 = tpu.matmul %72, %51, %cst_21 {dimension_numbers = #tpu.dot_dimension_numbers<[2], [1], [1], [2], [0, 0, 0, 1, 1, 2], [0], [0]>} : vector<4x16x16xbf16>, vector<4x16x8xbf16>, vector<4x16x8xf32> -> vector<4x16x8xf32>
    "tpu.trace_stop"() : () -> ()
    %74 = tpu.transpose %73, [1, 0, 2] : vector<4x16x8xf32> -> vector<16x4x8xf32>
    %75 = vector.shape_cast %74 : vector<16x4x8xf32> to vector<16x32xf32>
    %76 = arith.truncf %75 : vector<16x32xf32> to vector<16x32xbf16>
    %c0_22 = arith.constant 0 : index
    %c0_23 = arith.constant 0 : index
    %77 = vector.load %arg6[%c0_22, %c0_23] : memref<32x32xbf16, #tpu.memory_space<vmem>>, vector<32x32xbf16>
    %cst_24 = arith.constant dense<0.000000e+00> : vector<16x32xf32>
    %78 = tpu.matmul %76, %77, %cst_24 {dimension_numbers = #tpu.dot_dimension_numbers<[1], [0], [0], [1], [0, 0, 1, 1], [], []>} : vector<16x32xbf16>, vector<32x32xbf16>, vector<16x32xf32> -> vector<16x32xf32>
    %c0_25 = arith.constant 0 : index
    %c0_26 = arith.constant 0 : index
    %79 = vector.load %arg7[%c0_25, %c0_26] : memref<1x32xf32, #tpu.memory_space<vmem>>, vector<1x32xf32>
    %80 = vector.shape_cast %79 : vector<1x32xf32> to vector<32xf32>
    %81 = vector.shape_cast %80 : vector<32xf32> to vector<1x32xf32>
    %82 = vector.broadcast %81 : vector<1x32xf32> to vector<16x32xf32>
    %83 = arith.addf %78, %82 : vector<16x32xf32>
    %84 = arith.addf %1, %83 : vector<16x32xf32>
    %c0_27 = arith.constant 0 : index
    %c0_28 = arith.constant 0 : index
    %85 = vector.load %arg8[%c0_27, %c0_28] : memref<1x32xf32, #tpu.memory_space<vmem>>, vector<1x32xf32>
    %86 = vector.shape_cast %85 : vector<1x32xf32> to vector<32xf32>
    %c0_29 = arith.constant 0 : index
    %c0_30 = arith.constant 0 : index
    %87 = vector.load %arg9[%c0_29, %c0_30] : memref<1x32xf32, #tpu.memory_space<vmem>>, vector<1x32xf32>
    %88 = vector.shape_cast %87 : vector<1x32xf32> to vector<32xf32>
    %cst_31 = arith.constant dense<0.000000e+00> : vector<16xf32>
    %89 = vector.multi_reduction <add>, %84, %cst_31 [1] : vector<16x32xf32> to vector<16xf32>
    %90 = vector.shape_cast %89 : vector<16xf32> to vector<16x1xf32>
    %cst_32 = arith.constant 3.200000e+01 : f32
    %91 = vector.broadcast %cst_32 : f32 to vector<16x1xf32>
    %92 = arith.divf %90, %91 : vector<16x1xf32>
    %93 = arith.mulf %84, %84 : vector<16x32xf32>
    %cst_33 = arith.constant dense<0.000000e+00> : vector<16xf32>
    %94 = vector.multi_reduction <add>, %93, %cst_33 [1] : vector<16x32xf32> to vector<16xf32>
    %95 = vector.shape_cast %94 : vector<16xf32> to vector<16x1xf32>
    %cst_34 = arith.constant 3.200000e+01 : f32
    %96 = vector.broadcast %cst_34 : f32 to vector<16x1xf32>
    %97 = arith.divf %95, %96 : vector<16x1xf32>
    %98 = arith.mulf %92, %92 : vector<16x1xf32>
    %99 = arith.subf %97, %98 : vector<16x1xf32>
    %cst_35 = arith.constant 0.000000e+00 : f32
    %100 = vector.broadcast %cst_35 : f32 to vector<16x1xf32>
    %101 = arith.maximumf %99, %100 : vector<16x1xf32>
    %102 = vector.broadcast %92 : vector<16x1xf32> to vector<16x32xf32>
    %103 = arith.subf %84, %102 : vector<16x32xf32>
    %cst_36 = arith.constant 9.99999974E-6 : f32
    %104 = vector.broadcast %cst_36 : f32 to vector<16x1xf32>
    %105 = arith.addf %101, %104 : vector<16x1xf32>
    %106 = math.rsqrt %105 : vector<16x1xf32>
    %107 = vector.broadcast %106 : vector<16x1xf32> to vector<16x32xf32>
    %108 = arith.mulf %103, %107 : vector<16x32xf32>
    %109 = vector.shape_cast %86 : vector<32xf32> to vector<1x32xf32>
    %110 = vector.broadcast %109 : vector<1x32xf32> to vector<16x32xf32>
    %111 = arith.mulf %108, %110 : vector<16x32xf32>
    %112 = vector.shape_cast %88 : vector<32xf32> to vector<1x32xf32>
    %113 = vector.broadcast %112 : vector<1x32xf32> to vector<16x32xf32>
    %114 = arith.addf %111, %113 : vector<16x32xf32>
    %115 = arith.truncf %114 : vector<16x32xf32> to vector<16x32xbf16>
    %c0_37 = arith.constant 0 : index
    %c0_38 = arith.constant 0 : index
    %116 = vector.load %arg10[%c0_37, %c0_38] : memref<32x128xbf16, #tpu.memory_space<vmem>>, vector<32x128xbf16>
    %cst_39 = arith.constant dense<0.000000e+00> : vector<16x128xf32>
    %117 = tpu.matmul %115, %116, %cst_39 {dimension_numbers = #tpu.dot_dimension_numbers<[1], [0], [0], [1], [0, 0, 1, 1], [], []>} : vector<16x32xbf16>, vector<32x128xbf16>, vector<16x128xf32> -> vector<16x128xf32>
    %c0_40 = arith.constant 0 : index
    %c0_41 = arith.constant 0 : index
    %118 = vector.load %arg11[%c0_40, %c0_41] : memref<1x128xf32, #tpu.memory_space<vmem>>, vector<1x128xf32>
    %119 = vector.shape_cast %118 : vector<1x128xf32> to vector<128xf32>
    %120 = vector.shape_cast %119 : vector<128xf32> to vector<1x128xf32>
    %121 = vector.broadcast %120 : vector<1x128xf32> to vector<16x128xf32>
    %122 = arith.addf %117, %121 : vector<16x128xf32>
    %123 = arith.mulf %122, %122 : vector<16x128xf32>
    %124 = arith.mulf %122, %123 : vector<16x128xf32>
    %cst_42 = arith.constant 4.471500e-02 : f32
    %125 = vector.broadcast %cst_42 : f32 to vector<16x128xf32>
    %126 = arith.mulf %125, %124 : vector<16x128xf32>
    %127 = arith.addf %122, %126 : vector<16x128xf32>
    %cst_43 = arith.constant 0.797884583 : f32
    %128 = vector.broadcast %cst_43 : f32 to vector<16x128xf32>
    %129 = arith.mulf %128, %127 : vector<16x128xf32>
    %130 = math.tanh %129 : vector<16x128xf32>
    %cst_44 = arith.constant 1.000000e+00 : f32
    %131 = vector.broadcast %cst_44 : f32 to vector<16x128xf32>
    %132 = arith.addf %131, %130 : vector<16x128xf32>
    %cst_45 = arith.constant 5.000000e-01 : f32
    %133 = vector.broadcast %cst_45 : f32 to vector<16x128xf32>
    %134 = arith.mulf %133, %132 : vector<16x128xf32>
    %135 = arith.mulf %122, %134 : vector<16x128xf32>
    %136 = arith.truncf %135 : vector<16x128xf32> to vector<16x128xbf16>
    %c0_46 = arith.constant 0 : index
    %c0_47 = arith.constant 0 : index
    %137 = vector.load %arg12[%c0_46, %c0_47] : memref<128x32xbf16, #tpu.memory_space<vmem>>, vector<128x32xbf16>
    %cst_48 = arith.constant dense<0.000000e+00> : vector<16x32xf32>
    %138 = tpu.matmul %136, %137, %cst_48 {dimension_numbers = #tpu.dot_dimension_numbers<[1], [0], [0], [1], [0, 0, 1, 1], [], []>} : vector<16x128xbf16>, vector<128x32xbf16>, vector<16x32xf32> -> vector<16x32xf32>
    %c0_49 = arith.constant 0 : index
    %c0_50 = arith.constant 0 : index
    %139 = vector.load %arg13[%c0_49, %c0_50] : memref<1x32xf32, #tpu.memory_space<vmem>>, vector<1x32xf32>
    %140 = vector.shape_cast %139 : vector<1x32xf32> to vector<32xf32>
    %141 = vector.shape_cast %140 : vector<32xf32> to vector<1x32xf32>
    %142 = vector.broadcast %141 : vector<1x32xf32> to vector<16x32xf32>
    %143 = arith.addf %138, %142 : vector<16x32xf32>
    %144 = arith.addf %84, %143 : vector<16x32xf32>
    %c0_51 = arith.constant 0 : index
    %c0_52 = arith.constant 0 : index
    %c0_53 = arith.constant 0 : index
    %145 = vector.load %arg14[%c0_51, %c0_52, %c0_53] : memref<1x16x32xf32, #tpu.memory_space<vmem>>, vector<1x16x32xf32>
    %146 = vector.shape_cast %145 : vector<1x16x32xf32> to vector<16x32xf32>
    %147 = vector.shape_cast %144 : vector<16x32xf32> to vector<1x16x32xf32>
    tpu.vector_store %arg14[%c0_51, %c0_52, %c0_53], %147 {strides = array<i32>} : memref<1x16x32xf32, #tpu.memory_space<vmem>>, vector<1x16x32xf32>,
    return
  }
  func.func @transform_0(%arg0: i32) -> (i32, i32, i32) {
    %c0_i32 = arith.constant 0 : i32
    %c0_i32_0 = arith.constant 0 : i32
    %c0_i32_1 = arith.constant 0 : i32
    return %arg0, %c0_i32, %c0_i32_0 : i32, i32, i32
  }
  func.func @transform_1(%arg0: i32) -> (i32, i32) {
    %c0_i32 = arith.constant 0 : i32
    %c0_i32_0 = arith.constant 0 : i32
    %c0_i32_1 = arith.constant 0 : i32
    return %c0_i32, %c0_i32_0 : i32, i32
  }
  func.func @transform_2(%arg0: i32) -> (i32, i32) {
    %c0_i32 = arith.constant 0 : i32
    %c0_i32_0 = arith.constant 0 : i32
    %c0_i32_1 = arith.constant 0 : i32
    return %c0_i32, %c0_i32_0 : i32, i32
  }
  func.func @transform_3(%arg0: i32) -> (i32, i32) {
    %c0_i32 = arith.constant 0 : i32
    %c0_i32_0 = arith.constant 0 : i32
    %c0_i32_1 = arith.constant 0 : i32
    return %c0_i32, %c0_i32_0 : i32, i32
  }
  func.func @transform_4(%arg0: i32) -> (i32, i32) {
    %c0_i32 = arith.constant 0 : i32
    %c0_i32_0 = arith.constant 0 : i32
    %c0_i32_1 = arith.constant 0 : i32
    return %c0_i32, %c0_i32_0 : i32, i32
  }
  func.func @transform_5(%arg0: i32) -> (i32, i32) {
    %c0_i32 = arith.constant 0 : i32
    %c0_i32_0 = arith.constant 0 : i32
    %c0_i32_1 = arith.constant 0 : i32
    return %c0_i32, %c0_i32_0 : i32, i32
  }
  func.func @transform_6(%arg0: i32) -> (i32, i32) {
    %c0_i32 = arith.constant 0 : i32
    %c0_i32_0 = arith.constant 0 : i32
    %c0_i32_1 = arith.constant 0 : i32
    return %c0_i32, %c0_i32_0 : i32, i32
  }
  func.func @transform_7(%arg0: i32) -> (i32, i32) {
    %c0_i32 = arith.constant 0 : i32
    %c0_i32_0 = arith.constant 0 : i32
    %c0_i32_1 = arith.constant 0 : i32
    return %c0_i32, %c0_i32_0 : i32, i32
  }
  func.func @transform_8(%arg0: i32) -> (i32, i32) {
    %c0_i32 = arith.constant 0 : i32
    %c0_i32_0 = arith.constant 0 : i32
    %c0_i32_1 = arith.constant 0 : i32
    return %c0_i32, %c0_i32_0 : i32, i32
  }
  func.func @transform_9(%arg0: i32) -> (i32, i32) {
    %c0_i32 = arith.constant 0 : i32
    %c0_i32_0 = arith.constant 0 : i32
    %c0_i32_1 = arith.constant 0 : i32
    return %c0_i32, %c0_i32_0 : i32, i32
  }
  func.func @transform_10(%arg0: i32) -> (i32, i32) {
    %c0_i32 = arith.constant 0 : i32
    %c0_i32_0 = arith.constant 0 : i32
    %c0_i32_1 = arith.constant 0 : i32
    return %c0_i32, %c0_i32_0 : i32, i32
  }
  func.func @transform_11(%arg0: i32) -> (i32, i32) {
    %c0_i32 = arith.constant 0 : i32
    %c0_i32_0 = arith.constant 0 : i32
    %c0_i32_1 = arith.constant 0 : i32
    return %c0_i32, %c0_i32_0 : i32, i32
  }
  func.func @transform_12(%arg0: i32) -> (i32, i32) {
    %c0_i32 = arith.constant 0 : i32
    %c0_i32_0 = arith.constant 0 : i32
    %c0_i32_1 = arith.constant 0 : i32
    return %c0_i32, %c0_i32_0 : i32, i32
  }
  func.func @transform_13(%arg0: i32) -> (i32, i32, i32) {
    %c0_i32 = arith.constant 0 : i32
    %c0_i32_0 = arith.constant 0 : i32
    %c0_i32_1 = arith.constant 0 : i32
    return %arg0, %c0_i32, %c0_i32_0 : i32, i32, i32
  }
}

</mosaic_0001>

<llo_original>
// kernel: tpu_custom_call.1
$region0: #{tpu_custom_call.1}
  #allocation0 [shape = 'u32[]', space=smem, size = 0x4, offset = 0x4, fixed_abs, tag = 'smem constant byte address 0x4 - core index']
  #allocation1 [shape = 'u32[144,128]{1,0:T(1,128)}', space=vmem, size = 0x12000, scoped, tag = 'internal scratch']
  %s0 = inlined_call_operand.vmem [shape: f32[2,16,32], index: 0, kind: input, shape index: {}]
  %s1 = inlined_call_operand.vmem [shape: f32[1,32], index: 1, kind: input, shape index: {}]
  %s2 = inlined_call_operand.vmem [shape: f32[1,32], index: 2, kind: input, shape index: {}]
  %s3 = inlined_call_operand.vmem [shape: bf16[32,96], index: 3, kind: input, shape index: {}]
  %s4 = inlined_call_operand.vmem [shape: f32[1,96], index: 4, kind: input, shape index: {}]
  %s5 = inlined_call_operand.vmem [shape: bf16[32,32], index: 5, kind: input, shape index: {}]
  %s6 = inlined_call_operand.vmem [shape: f32[1,32], index: 6, kind: input, shape index: {}]
  %s7 = inlined_call_operand.vmem [shape: f32[1,32], index: 7, kind: input, shape index: {}]
  %s8 = inlined_call_operand.vmem [shape: f32[1,32], index: 8, kind: input, shape index: {}]
  %s9 = inlined_call_operand.vmem [shape: bf16[32,128], index: 9, kind: input, shape index: {}]
  %s10 = inlined_call_operand.vmem [shape: f32[1,128], index: 10, kind: input, shape index: {}]
  %s11 = inlined_call_operand.vmem [shape: bf16[128,32], index: 11, kind: input, shape index: {}]
  %s12 = inlined_call_operand.vmem [shape: f32[1,32], index: 12, kind: input, shape index: {}]
  %s13 = inlined_call_operand.hbm [shape: f32[2,16,32], index: 13, kind: output, shape index: {}]
  %s14 = sld [smem:[#allocation0]]
  $region85: #{tpu_custom_call.1} parent=0
    _
  %s16 = ssub.s32 1, %s14
  %s17 = scalar_select 0, %s16, %s14
  $region1: #{tpu_custom_call.1} parent=0
    #allocation2 [shape = 'u8[16384]{0}', space=vmem, size = 0x4000, scoped, tag = 'output window, operand 0']
    #allocation3 [shape = 's32[2]{0}', space=sflag, size = 0x8, scoped, tag = 'scoped memory for tpu_custom_call.1']
    %18 = vsyncpa [#allocation3], 0
    %s19 = scalar_lea.sflag [#allocation3], 1
    %20 = vsyncpa %s19, 0
    loop: start=0, step=1, limit=4
    $region2: #{tpu_custom_call.1} parent=1 // loop_pre_header
      _
    $region3: #{tpu_custom_call.1} parent=1 // loop_header
      %s22 = sphi 0, %s26
      %p23 = scmp.ge.s32.totalorder %s22, 4
      %s32 = sphi 0, %s34
      %s35 = sphi 0, %s32
      %s36 = sphi 0, %s35
      %s52 = sphi 0, %s36
      %s56 = sphi 0, %s56
      %s58 = sphi 0, %s56
      %s59 = sphi 0, %s58
      %s73 = sphi 0, %s59
      %s77 = sphi 0, %s77
      %s79 = sphi 0, %s77
      %s80 = sphi 0, %s79
      %s94 = sphi 0, %s80
      %s98 = sphi 0, %s98
      %s100 = sphi 0, %s98
      %s101 = sphi 0, %s100
      %s115 = sphi 0, %s101
      %s119 = sphi 0, %s119
      %s121 = sphi 0, %s119
      %s122 = sphi 0, %s121
      %s136 = sphi 0, %s122
      %s140 = sphi 0, %s140
      %s142 = sphi 0, %s140
      %s143 = sphi 0, %s142
      %s157 = sphi 0, %s143
      %s161 = sphi 0, %s161
      %s163 = sphi 0, %s161
      %s164 = sphi 0, %s163
      %s178 = sphi 0, %s164
      %s182 = sphi 0, %s182
      %s184 = sphi 0, %s182
      %s185 = sphi 0, %s184
      %s199 = sphi 0, %s185
      %s203 = sphi 0, %s203
      %s205 = sphi 0, %s203
      %s206 = sphi 0, %s205
      %s220 = sphi 0, %s206
      %s224 = sphi 0, %s224
      %s226 = sphi 0, %s224
      %s227 = sphi 0, %s226
      %s241 = sphi 0, %s227
      %s245 = sphi 0, %s245
      %s247 = sphi 0, %s245
      %s248 = sphi 0, %s247
      %s262 = sphi 0, %s248
      %s266 = sphi 0, %s266
      %s268 = sphi 0, %s266
      %s269 = sphi 0, %s268
      %s283 = sphi 0, %s269
      %s287 = sphi 0, %s287
      %s289 = sphi 0, %s287
      %s290 = sphi 0, %s289
      %s304 = sphi 0, %s290
      %s310 = sphi 0, %s312
      %s313 = sphi 0, %s310
      %s314 = sphi 0, %s313
      %s330 = sphi 0, %s314
    $region4: #{tpu_custom_call.1} parent=1 // loop_header_branch
      %25 = sbr.rel (%p23) target = $region8
    $region5: #{tpu_custom_call.1} parent=1 // loop_body
      %s27 = ssub.s32 %s22, 1
      %s28 = ssub.s32 %s22, 2
      %s29 = sadd.s32 %s22, 1
      %s30 = ssub.s32 %s22, %s29
      %p31 = scmp.eq.s32.totalorder %s30, 0
      %s33 = sadd.s32 %s32, 1
      %s34 = scalar_select %p31, %s32, %s33
      %p37 = pneg %p31
      %p38 = scmp.eq.s32.totalorder %s22, 1
      %p39 = por %p37, %p38
      %p40 = scmp.ne.s32.totalorder %s32, %s35
      %p41 = scmp.eq.s32.totalorder %s22, 0
      %p42 = por %p40, %p41
      %p43 = scmp.ne.s32.totalorder %s32, %s35
      %p44 = scmp.eq.s32.totalorder %s27, 1
      %p45 = por %p43, %p44
      %p46 = scmp.ne.s32.totalorder %s35, %s36
      %p47 = scmp.eq.s32.totalorder %s27, 0
      %p48 = por %p46, %p47
      %p49 = scmp.ne.s32.totalorder %s35, %s36
      %p50 = scmp.eq.s32.totalorder %s28, 1
      %p51 = por %p49, %p50
      %p53 = scmp.ne.s32.totalorder %s36, %s52
      %p54 = scmp.eq.s32.totalorder %s28, 0
      %p55 = por %p53, %p54
      %s57 = sadd.s32 %s56, 1
      %p60 = scmp.eq.s32.totalorder %s22, 1
      %p61 = scmp.ne.s32.totalorder %s56, %s58
      %p62 = scmp.eq.s32.totalorder %s22, 0
      %p63 = por %p61, %p62
      %p64 = scmp.ne.s32.totalorder %s56, %s58
      %p65 = scmp.eq.s32.totalorder %s27, 1
      %p66 = por %p64, %p65
      %p67 = scmp.ne.s32.totalorder %s58, %s59
      %p68 = scmp.eq.s32.totalorder %s27, 0
      %p69 = por %p67, %p68
      %p70 = scmp.ne.s32.totalorder %s58, %s59
      %p71 = scmp.eq.s32.totalorder %s28, 1
      %p72 = por %p70, %p71
      %p74 = scmp.ne.s32.totalorder %s59, %s73
      %p75 = scmp.eq.s32.totalorder %s28, 0
      %p76 = por %p74, %p75
      %s78 = sadd.s32 %s77, 1
      %p81 = scmp.eq.s32.totalorder %s22, 1
      %p82 = scmp.ne.s32.totalorder %s77, %s79
      %p83 = scmp.eq.s32.totalorder %s22, 0
      %p84 = por %p82, %p83
      %p85 = scmp.ne.s32.totalorder %s77, %s79
      %p86 = scmp.eq.s32.totalorder %s27, 1
      %p87 = por %p85, %p86
      %p88 = scmp.ne.s32.totalorder %s79, %s80
      %p89 = scmp.eq.s32.totalorder %s27, 0
      %p90 = por %p88, %p89
      %p91 = scmp.ne.s32.totalorder %s79, %s80
      %p92 = scmp.eq.s32.totalorder %s28, 1
      %p93 = por %p91, %p92
      %p95 = scmp.ne.s32.totalorder %s80, %s94
      %p96 = scmp.eq.s32.totalorder %s28, 0
      %p97 = por %p95, %p96
      %s99 = sadd.s32 %s98, 1
      %p102 = scmp.eq.s32.totalorder %s22, 1
      %p103 = scmp.ne.s32.totalorder %s98, %s100
      %p104 = scmp.eq.s32.totalorder %s22, 0
      %p105 = por %p103, %p104
      %p106 = scmp.ne.s32.totalorder %s98, %s100
      %p107 = scmp.eq.s32.totalorder %s27, 1
      %p108 = por %p106, %p107
      %p109 = scmp.ne.s32.totalorder %s100, %s101
      %p110 = scmp.eq.s32.totalorder %s27, 0
      %p111 = por %p109, %p110
      %p112 = scmp.ne.s32.totalorder %s100, %s101
      %p113 = scmp.eq.s32.totalorder %s28, 1
      %p114 = por %p112, %p113
      %p116 = scmp.ne.s32.totalorder %s101, %s115
      %p117 = scmp.eq.s32.totalorder %s28, 0
      %p118 = por %p116, %p117
      %s120 = sadd.s32 %s119, 1
      %p123 = scmp.eq.s32.totalorder %s22, 1
      %p124 = scmp.ne.s32.totalorder %s119, %s121
      %p125 = scmp.eq.s32.totalorder %s22, 0
      %p126 = por %p124, %p125
      %p127 = scmp.ne.s32.totalorder %s119, %s121
      %p128 = scmp.eq.s32.totalorder %s27, 1
      %p129 = por %p127, %p128
      %p130 = scmp.ne.s32.totalorder %s121, %s122
      %p131 = scmp.eq.s32.totalorder %s27, 0
      %p132 = por %p130, %p131
      %p133 = scmp.ne.s32.totalorder %s121, %s122
      %p134 = scmp.eq.s32.totalorder %s28, 1
      %p135 = por %p133, %p134
      %p137 = scmp.ne.s32.totalorder %s122, %s136
      %p138 = scmp.eq.s32.totalorder %s28, 0
      %p139 = por %p137, %p138
      %s141 = sadd.s32 %s140, 1
      %p144 = scmp.eq.s32.totalorder %s22, 1
      %p145 = scmp.ne.s32.totalorder %s140, %s142
      %p146 = scmp.eq.s32.totalorder %s22, 0
      %p147 = por %p145, %p146
      %p148 = scmp.ne.s32.totalorder %s140, %s142
      %p149 = scmp.eq.s32.totalorder %s27, 1
      %p150 = por %p148, %p149
      %p151 = scmp.ne.s32.totalorder %s142, %s143
      %p152 = scmp.eq.s32.totalorder %s27, 0
      %p153 = por %p151, %p152
      %p154 = scmp.ne.s32.totalorder %s142, %s143
      %p155 = scmp.eq.s32.totalorder %s28, 1
      %p156 = por %p154, %p155
      %p158 = scmp.ne.s32.totalorder %s143, %s157
      %p159 = scmp.eq.s32.totalorder %s28, 0
      %p160 = por %p158, %p159
      %s162 = sadd.s32 %s161, 1
      %p165 = scmp.eq.s32.totalorder %s22, 1
      %p166 = scmp.ne.s32.totalorder %s161, %s163
      %p167 = scmp.eq.s32.totalorder %s22, 0
      %p168 = por %p166, %p167
      %p169 = scmp.ne.s32.totalorder %s161, %s163
      %p170 = scmp.eq.s32.totalorder %s27, 1
      %p171 = por %p169, %p170
      %p172 = scmp.ne.s32.totalorder %s163, %s164
      %p173 = scmp.eq.s32.totalorder %s27, 0
      %p174 = por %p172, %p173
      %p175 = scmp.ne.s32.totalorder %s163, %s164
      %p176 = scmp.eq.s32.totalorder %s28, 1
      %p177 = por %p175, %p176
      %p179 = scmp.ne.s32.totalorder %s164, %s178
      %p180 = scmp.eq.s32.totalorder %s28, 0
      %p181 = por %p179, %p180
      %s183 = sadd.s32 %s182, 1
      %p186 = scmp.eq.s32.totalorder %s22, 1
      %p187 = scmp.ne.s32.totalorder %s182, %s184
      %p188 = scmp.eq.s32.totalorder %s22, 0
      %p189 = por %p187, %p188
      %p190 = scmp.ne.s32.totalorder %s182, %s184
      %p191 = scmp.eq.s32.totalorder %s27, 1
      %p192 = por %p190, %p191
      %p193 = scmp.ne.s32.totalorder %s184, %s185
      %p194 = scmp.eq.s32.totalorder %s27, 0
      %p195 = por %p193, %p194
      %p196 = scmp.ne.s32.totalorder %s184, %s185
      %p197 = scmp.eq.s32.totalorder %s28, 1
      %p198 = por %p196, %p197
      %p200 = scmp.ne.s32.totalorder %s185, %s199
      %p201 = scmp.eq.s32.totalorder %s28, 0
      %p202 = por %p200, %p201
      %s204 = sadd.s32 %s203, 1
      %p207 = scmp.eq.s32.totalorder %s22, 1
      %p208 = scmp.ne.s32.totalorder %s203, %s205
      %p209 = scmp.eq.s32.totalorder %s22, 0
      %p210 = por %p208, %p209
      %p211 = scmp.ne.s32.totalorder %s203, %s205
      %p212 = scmp.eq.s32.totalorder %s27, 1
      %p213 = por %p211, %p212
      %p214 = scmp.ne.s32.totalorder %s205, %s206
      %p215 = scmp.eq.s32.totalorder %s27, 0
      %p216 = por %p214, %p215
      %p217 = scmp.ne.s32.totalorder %s205, %s206
      %p218 = scmp.eq.s32.totalorder %s28, 1
      %p219 = por %p217, %p218
      %p221 = scmp.ne.s32.totalorder %s206, %s220
      %p222 = scmp.eq.s32.totalorder %s28, 0
      %p223 = por %p221, %p222
      %s225 = sadd.s32 %s224, 1
      %p228 = scmp.eq.s32.totalorder %s22, 1
      %p229 = scmp.ne.s32.totalorder %s224, %s226
      %p230 = scmp.eq.s32.totalorder %s22, 0
      %p231 = por %p229, %p230
      %p232 = scmp.ne.s32.totalorder %s224, %s226
      %p233 = scmp.eq.s32.totalorder %s27, 1
      %p234 = por %p232, %p233
      %p235 = scmp.ne.s32.totalorder %s226, %s227
      %p236 = scmp.eq.s32.totalorder %s27, 0
      %p237 = por %p235, %p236
      %p238 = scmp.ne.s32.totalorder %s226, %s227
      %p239 = scmp.eq.s32.totalorder %s28, 1
      %p240 = por %p238, %p239
      %p242 = scmp.ne.s32.totalorder %s227, %s241
      %p243 = scmp.eq.s32.totalorder %s28, 0
      %p244 = por %p242, %p243
      %s246 = sadd.s32 %s245, 1
      %p249 = scmp.eq.s32.totalorder %s22, 1
      %p250 = scmp.ne.s32.totalorder %s245, %s247
      %p251 = scmp.eq.s32.totalorder %s22, 0
      %p252 = por %p250, %p251
      %p253 = scmp.ne.s32.totalorder %s245, %s247
      %p254 = scmp.eq.s32.totalorder %s27, 1
      %p255 = por %p253, %p254
      %p256 = scmp.ne.s32.totalorder %s247, %s248
      %p257 = scmp.eq.s32.totalorder %s27, 0
      %p258 = por %p256, %p257
      %p259 = scmp.ne.s32.totalorder %s247, %s248
      %p260 = scmp.eq.s32.totalorder %s28, 1
      %p261 = por %p259, %p260
      %p263 = scmp.ne.s32.totalorder %s248, %s262
      %p264 = scmp.eq.s32.totalorder %s28, 0
      %p265 = por %p263, %p264
      %s267 = sadd.s32 %s266, 1
      %p270 = scmp.eq.s32.totalorder %s22, 1
      %p271 = scmp.ne.s32.totalorder %s266, %s268
      %p272 = scmp.eq.s32.totalorder %s22, 0
      %p273 = por %p271, %p272
      %p274 = scmp.ne.s32.totalorder %s266, %s268
      %p275 = scmp.eq.s32.totalorder %s27, 1
      %p276 = por %p274, %p275
      %p277 = scmp.ne.s32.totalorder %s268, %s269
      %p278 = scmp.eq.s32.totalorder %s27, 0
      %p279 = por %p277, %p278
      %p280 = scmp.ne.s32.totalorder %s268, %s269
      %p281 = scmp.eq.s32.totalorder %s28, 1
      %p282 = por %p280, %p281
      %p284 = scmp.ne.s32.totalorder %s269, %s283
      %p285 = scmp.eq.s32.totalorder %s28, 0
      %p286 = por %p284, %p285
      %s288 = sadd.s32 %s287, 1
      %p291 = scmp.eq.s32.totalorder %s22, 1
      %p292 = scmp.ne.s32.totalorder %s287, %s289
      %p293 = scmp.eq.s32.totalorder %s22, 0
      %p294 = por %p292, %p293
      %p295 = scmp.ne.s32.totalorder %s287, %s289
      %p296 = scmp.eq.s32.totalorder %s27, 1
      %p297 = por %p295, %p296
      %p298 = scmp.ne.s32.totalorder %s289, %s290
      %p299 = scmp.eq.s32.totalorder %s27, 0
      %p300 = por %p298, %p299
      %p301 = scmp.ne.s32.totalorder %s289, %s290
      %p302 = scmp.eq.s32.totalorder %s28, 1
      %p303 = por %p301, %p302
      %p305 = scmp.ne.s32.totalorder %s290, %s304
      %p306 = scmp.eq.s32.totalorder %s28, 0
      %p307 = por %p305, %p306
      %s308 = ssub.s32 %s22, %s29
      %p309 = scmp.eq.s32.totalorder %s308, 0
      %s311 = sadd.s32 %s310, 1
      %s312 = scalar_select %p309, %s310, %s311
      %p315 = pneg %p309
      %p316 = scmp.eq.s32.totalorder %s22, 1
      %p317 = por %p315, %p316
      %p318 = scmp.ne.s32.totalorder %s310, %s313
      %p319 = scmp.eq.s32.totalorder %s22, 0
      %p320 = por %p318, %p319
      %p321 = scmp.ne.s32.totalorder %s310, %s313
      %p322 = scmp.eq.s32.totalorder %s27, 1
      %p323 = por %p321, %p322
      %p324 = scmp.ne.s32.totalorder %s313, %s314
      %p325 = scmp.eq.s32.totalorder %s27, 0
      %p326 = por %p324, %p325
      %p327 = scmp.ne.s32.totalorder %s313, %s314
      %p328 = scmp.eq.s32.totalorder %s28, 1
      %p329 = por %p327, %p328
      %p331 = scmp.ne.s32.totalorder %s314, %s330
      %p332 = scmp.eq.s32.totalorder %s28, 0
      %p333 = por %p331, %p332
      %p334 = scmp.le.s32.totalorder 1, %s22
      %p335 = scmp.lt.s32.totalorder %s22, 3
      %p336 = pnand %p334, %p335
      %p337 = pneg %p336
      // Predicated region
      $region9: #{tpu_custom_call.1} parent=5 // pred_check
        _
      $region10: #{tpu_custom_call.1} parent=5 // pred_check_branch
        %339 = sbr.rel (%p336) target = $region12
      $region11: #{tpu_custom_call.1} parent=5 // pred_region
        %s340 = ssub.s32 %s22, 1
        // Predicated region
        $region13: #{tpu_custom_call.1} parent=11 // pred_check
          %p341 = pneg %p69
        $region14: #{tpu_custom_call.1} parent=11 // pred_check_branch
          %343 = sbr.rel (%p341) target = $region16
        $region15: #{tpu_custom_call.1} parent=11 // pred_region
          _
        $region16: #{tpu_custom_call.1} parent=11 // pred_fallthru
          _
        // Predicated region
        $region17: #{tpu_custom_call.1} parent=11 // pred_check
          %p344 = pneg %p90
        $region18: #{tpu_custom_call.1} parent=11 // pred_check_branch
          %346 = sbr.rel (%p344) target = $region20
        $region19: #{tpu_custom_call.1} parent=11 // pred_region
          _
        $region20: #{tpu_custom_call.1} parent=11 // pred_fallthru
          _
        // Predicated region
        $region21: #{tpu_custom_call.1} parent=11 // pred_check
          %p347 = pneg %p111
        $region22: #{tpu_custom_call.1} parent=11 // pred_check_branch
          %349 = sbr.rel (%p347) target = $region24
        $region23: #{tpu_custom_call.1} parent=11 // pred_region
          _
        $region24: #{tpu_custom_call.1} parent=11 // pred_fallthru
          _
        // Predicated region
        $region25: #{tpu_custom_call.1} parent=11 // pred_check
          %p350 = pneg %p132
        $region26: #{tpu_custom_call.1} parent=11 // pred_check_branch
          %352 = sbr.rel (%p350) target = $region28
        $region27: #{tpu_custom_call.1} parent=11 // pred_region
          _
        $region28: #{tpu_custom_call.1} parent=11 // pred_fallthru
          _
        // Predicated region
        $region29: #{tpu_custom_call.1} parent=11 // pred_check
          %p353 = pneg %p153
        $region30: #{tpu_custom_call.1} parent=11 // pred_check_branch
          %355 = sbr.rel (%p353) target = $region32
        $region31: #{tpu_custom_call.1} parent=11 // pred_region
          _
        $region32: #{tpu_custom_call.1} parent=11 // pred_fallthru
          _
        // Predicated region
        $region33: #{tpu_custom_call.1} parent=11 // pred_check
          %p356 = pneg %p174
        $region34: #{tpu_custom_call.1} parent=11 // pred_check_branch
          %358 = sbr.rel (%p356) target = $region36
        $region35: #{tpu_custom_call.1} parent=11 // pred_region
          _
        $region36: #{tpu_custom_call.1} parent=11 // pred_fallthru
          _
        // Predicated region
        $region37: #{tpu_custom_call.1} parent=11 // pred_check
          %p359 = pneg %p195
        $region38: #{tpu_custom_call.1} parent=11 // pred_check_branch
          %361 = sbr.rel (%p359) target = $region40
        $region39: #{tpu_custom_call.1} parent=11 // pred_region
          _
        $region40: #{tpu_custom_call.1} parent=11 // pred_fallthru
          _
        // Predicated region
        $region41: #{tpu_custom_call.1} parent=11 // pred_check
          %p362 = pneg %p216
        $region42: #{tpu_custom_call.1} parent=11 // pred_check_branch
          %364 = sbr.rel (%p362) target = $region44
        $region43: #{tpu_custom_call.1} parent=11 // pred_region
          _
        $region44: #{tpu_custom_call.1} parent=11 // pred_fallthru
          _
        // Predicated region
        $region45: #{tpu_custom_call.1} parent=11 // pred_check
          %p365 = pneg %p237
        $region46: #{tpu_custom_call.1} parent=11 // pred_check_branch
          %367 = sbr.rel (%p365) target = $region48
        $region47: #{tpu_custom_call.1} parent=11 // pred_region
          _
        $region48: #{tpu_custom_call.1} parent=11 // pred_fallthru
          _
        // Predicated region
        $region49: #{tpu_custom_call.1} parent=11 // pred_check
          %p368 = pneg %p258
        $region50: #{tpu_custom_call.1} parent=11 // pred_check_branch
          %370 = sbr.rel (%p368) target = $region52
        $region51: #{tpu_custom_call.1} parent=11 // pred_region
          _
        $region52: #{tpu_custom_call.1} parent=11 // pred_fallthru
          _
        // Predicated region
        $region53: #{tpu_custom_call.1} parent=11 // pred_check
          %p371 = pneg %p279
        $region54: #{tpu_custom_call.1} parent=11 // pred_check_branch
          %373 = sbr.rel (%p371) target = $region56
        $region55: #{tpu_custom_call.1} parent=11 // pred_region
          _
        $region56: #{tpu_custom_call.1} parent=11 // pred_fallthru
          _
        // Predicated region
        $region57: #{tpu_custom_call.1} parent=11 // pred_check
          %p374 = pneg %p300
        $region58: #{tpu_custom_call.1} parent=11 // pred_check_branch
          %376 = sbr.rel (%p374) target = $region60
        $region59: #{tpu_custom_call.1} parent=11 // pred_region
          _
        $region60: #{tpu_custom_call.1} parent=11 // pred_fallthru
          _
      $region12: #{tpu_custom_call.1} parent=5 // pred_fallthru
        _
      %p377 = scmp.lt.s32.totalorder %s22, 2
      // Predicated region
      $region61: #{tpu_custom_call.1} parent=5 // pred_check
        %p378 = pneg %p377
      $region62: #{tpu_custom_call.1} parent=5 // pred_check_branch
        %380 = sbr.rel (%p378) target = $region64
      $region63: #{tpu_custom_call.1} parent=5 // pred_region
        // Predicated region
        $region65: #{tpu_custom_call.1} parent=63 // pred_check
          %p381 = pneg %p42
        $region66: #{tpu_custom_call.1} parent=63 // pred_check_branch
          %383 = sbr.rel (%p381) target = $region68
        $region67: #{tpu_custom_call.1} parent=63 // pred_region
          %p384 = scmp.lt.s32.totalorder %s22, 1
          %s385 = scalar_select %p384, %s22, 1
          %s386 = smul.addr %s385, 2
          %s387 = smul.addr %s386, 8
          %s388 = scalar_lea.vmem %s0, %s387
        $region68: #{tpu_custom_call.1} parent=63 // pred_fallthru
          _
      $region64: #{tpu_custom_call.1} parent=5 // pred_fallthru
        _
      %p389 = scmp.le.s32.totalorder 1, %s22
      %p390 = scmp.lt.s32.totalorder %s22, 3
      %p391 = pnand %p389, %p390
      %p392 = pneg %p391
      // Predicated region
      $region69: #{tpu_custom_call.1} parent=5 // pred_check
        _
      $region70: #{tpu_custom_call.1} parent=5 // pred_check_branch
        %394 = sbr.rel (%p391) target = $region72
      $region71: #{tpu_custom_call.1} parent=5 // pred_region
        %s395 = ssub.s32 %s22, 1
        %p396 = scmp.lt.s32.totalorder %s27, 1
        %s397 = scalar_select %p396, %s27, 1
        %s398 = smul.addr %s397, 2
        %s399 = smul.addr %s398, 8
        %s400 = scalar_lea.vmem %s0, %s399
        %p401 = pneg %p48
        %p402 = pneg %p45
        %p403 = pneg %p69
        %p404 = pneg %p66
        %p405 = pneg %p90
        %p406 = pneg %p87
        %p407 = pneg %p111
        %p408 = pneg %p108
        %p409 = pneg %p132
        %p410 = pneg %p129
        %p411 = pneg %p153
        %p412 = pneg %p150
        %p413 = pneg %p174
        %p414 = pneg %p171
        %p415 = pneg %p195
        %p416 = pneg %p192
        %p417 = pneg %p216
        %p418 = pneg %p213
        %p419 = pneg %p237
        %p420 = pneg %p234
        %p421 = pneg %p258
        %p422 = pneg %p255
        %p423 = pneg %p279
        %p424 = pneg %p276
        %p425 = pneg %p300
        %p426 = pneg %p297
        %p427 = pneg %p326
        %p428 = pneg %p323
        %s429 = sand.u32 %s313, 1
        %s430 = scalar_lea.sflag [#allocation3], %s429
        %s431 = sand.u32 %s313, 1
        %s432 = smul.addr %s431, 16
        %s433 = scalar_lea.vmem [#allocation2], %s432
        %p434 = scmp.lt.s32.totalorder %s27, 1
        %s435 = scalar_select %p434, %s27, 1
        %s436 = smul.addr %s435, 2
        %s437 = smul.addr %s436, 8
        %s438 = scalar_lea.vmem %s0, %s437
        %v440 = vld [vmem:[%s438] sm:$0xff]
        %v441 = vld [vmem:[%s438 + $0x8] sm:$0xff]
        %v442 = vld [vmem:[%s1] sm:$0x1]
        %v443 = vld [vmem:[%s2] sm:$0x1]
        %vm444 = vcmask 261120
        %v445 = vsel %vm444, %v440, 0.0
        %446 = vadd.xlane.f32.xlu0 %v445
        %v447 = vpop.xlane.xlu0 %446
        %v448 = vsel %vm444, %v441, 0.0
        %449 = vadd.xlane.f32.xlu0 %v448
        %v450 = vpop.xlane.xlu0 %449
        %v451 = vrcp.pop 32.0
        %v452 = vmul.f32 %v447, %v451
        %v453 = vmul.f32 %v450, %v451
        %v454 = vmul.f32 %v440, %v440
        %v455 = vmul.f32 %v441, %v441
        %v456 = vsel %vm444, %v454, 0.0
        %457 = vadd.xlane.f32.xlu0 %v456
        %v458 = vpop.xlane.xlu0 %457
        %v459 = vsel %vm444, %v455, 0.0
        %460 = vadd.xlane.f32.xlu0 %v459
        %v461 = vpop.xlane.xlu0 %460
        %v462 = vmul.f32 %v458, %v451
        %v463 = vmul.f32 %v461, %v451
        %v464 = vmul.f32 %v452, %v452
        %v465 = vmul.f32 %v453, %v453
        %v466 = vsub.f32 %v462, %v464
        %v467 = vsub.f32 %v463, %v465
        %v468 = vmax.f32 %v466, 0.0
        %v469 = vmax.f32 %v467, 0.0
        %v470 = vsub.f32 %v440, %v452
        %v471 = vsub.f32 %v441, %v453
        %v472 = vadd.f32 %v468, 1e-05
        %v473 = vadd.f32 %v469, 1e-05
        %v474 = vrsqrt.pop %v472
        %v475 = vrsqrt.pop %v473
        %v476 = vmul.f32 %v470, %v474
        %v477 = vmul.f32 %v471, %v475
        %v479 = vlaneseq
        %v480 = vshrl.u32 %v479, 7
        %v481 = vsub.s32 0, %v480
        %v482 = vrot.slane %v442, %v481
        %v484 = vmul.f32 %v476, %v482
        %v485 = vmul.f32 %v477, %v482
        %v487 = vlaneseq
        %v488 = vshrl.u32 %v487, 7
        %v489 = vsub.s32 0, %v488
        %v490 = vrot.slane %v443, %v489
        %v492 = vadd.f32 %v484, %v490
        %v493 = vadd.f32 %v485, %v490
        %v494 = vpack.c.bf16 %v493, %v492
        %v495 = vld [vmem:[%s3] sm:$0xf]
        %v496 = vld [vmem:[%s3 + $0x4] sm:$0xf]
        %v497 = vld [vmem:[%s3 + $0x8] sm:$0xf]
        %v498 = vld [vmem:[%s3 + $0xc] sm:$0xf]
        %v499 = vld [vmem:[%s4] sm:$0x1]
        %v501 = vlaneseq
        %v502 = vshrl.u32 %v501, 7
        %v503 = vsub.s32 0, %v502
        %v504 = vrot.slane %v499, %v503
        %v510 = vunpack.c.l.b16 %v495
        %v511 = vunpack.c.l.b16 %v496
        %v512 = vunpack.c.l.b16 %v497
        %v513 = vunpack.c.l.b16 %v498
        %v514 = vpack.c.b16 %v511, %v510
        %v515 = vpack.c.b16 %v513, %v512
        %v519 = vsel %vm444, %v494, 0
        %521 = vmatprep.subr.bf16.mxu0 0
        %522 = vmatpush1.bf16.msra.mxu0 %v514
        %523 = vmatprep.subr.bf16.mxu0 0
        %524 = vmatpush1.bf16.msra.mxu0 %v515
        %525 = vmatprep.subr.bf16.mxu0 0
        %526 = vmatpush1.bf16.msra.mxu0 0
        %527 = vmatprep.subr.bf16.mxu0 0
        %528 = vmatpush1.bf16.msra.mxu0 0
        %529 = vmatprep.subr.bf16.mxu0 0
        %530 = vmatpush1.bf16.msra.mxu0 0
        %531 = vmatprep.subr.bf16.mxu0 0
        %532 = vmatpush1.bf16.msra.mxu0 0
        %533 = vmatprep.subr.bf16.mxu0 0
        %534 = vmatpush1.bf16.msra.mxu0 0
        %535 = vmatprep.subr.bf16.mxu0 0
        %536 = vmatpush1.bf16.msra.mxu0 0
        %537 = vmatprep.subr.bf16.mxu0 0
        %538 = vmatpush1.bf16.msra.mxu0 0
        %539 = vmatprep.subr.bf16.mxu0 0
        %540 = vmatpush1.bf16.msra.mxu0 0
        %541 = vmatprep.subr.bf16.mxu0 0
        %542 = vmatpush1.bf16.msra.mxu0 0
        %543 = vmatprep.subr.bf16.mxu0 0
        %544 = vmatpush1.bf16.msra.mxu0 0
        %545 = vmatprep.subr.bf16.mxu0 0
        %546 = vmatpush1.bf16.msra.mxu0 0
        %547 = vmatprep.subr.bf16.mxu0 0
        %548 = vmatpush1.bf16.msra.mxu0 0
        %549 = vmatprep.subr.bf16.mxu0 0
        %550 = vmatpush1.bf16.msra.mxu0 0
        %551 = vmatprep.subr.bf16.mxu0 0
        %552 = vmatpush1.bf16.msra.mxu0 0
        %553 = vmatprep.mubr.bf16.mxu0 0
        %554 = vmatmul.mubr.bf16.gmra.mrb[0].mxu0 %v519
        %v555 = vpop.f32.mrb[0].mxu0
        %v556 = vadd.f32 %v504, %v555
        %v557 = vpop.f32.mrb[0].mxu0
        %v558 = vpop.f32.mrb[0].mxu0
        %v559 = vadd.f32 %v504, %v558
        %v560 = vpop.f32.mrb[0].mxu0
        %561 = vdwg.mxu0
        %v562 = vpack.c.bf16 %v559, %v556
        %564 = vrot.lane.b32.xlu0 %v562, 120
        %v565 = vpop.permute.xlu0 %564
        %566 = vrot.lane.b32.xlu0 %v562, 112
        %v567 = vpop.permute.xlu0 %566
        %568 = vrot.lane.b32.xlu0 %v562, 104
        %v569 = vpop.permute.xlu0 %568
        %v572 = vpack.i.b16 %v565, %v562
        %v574 = vshrl.u32 %v562, 16
        %v575 = vshrl.u32 %v565, 16
        %v576 = vpack.i.b16 %v575, %v574
        %v580 = vpack.i.b16 %v569, %v567
        %v582 = vshrl.u32 %v567, 16
        %v583 = vshrl.u32 %v569, 16
        %v584 = vpack.i.b16 %v583, %v582
        %v587 = vpack.i.b16 0, 0
        %v589 = vshrl.u32 0, 16
        %v590 = vpack.i.b16 %v589, %v589
        %v592 = vcombine.high %v572, %v587
        %v594 = vunpack.c.l.s4 1983009808
        %v595 = vunpack.c.0.s8 %v594
        %v596 = vlaneseq
        %v597 = vshrl.u32 %v596, 7
        %v598 = vsub.s32 %v595, %v597
        %v599 = vrot.slane %v572, %v598
        %v601 = vunpack.c.l.s4 1983009808
        %v602 = vunpack.c.0.s8 %v601
        %v603 = vlaneseq
        %v604 = vshrl.u32 %v603, 7
        %v605 = vsub.s32 %v602, %v604
        %v606 = vrot.slane %v592, %v605
        %v607 = vcombine.high %v580, %v587
        %v609 = vunpack.c.l.s4 1983009808
        %v610 = vunpack.c.0.s8 %v609
        %v611 = vlaneseq
        %v612 = vshrl.u32 %v611, 7
        %v613 = vsub.s32 %v610, %v612
        %v614 = vrot.slane %v580, %v613
        %v616 = vunpack.c.l.s4 1983009808
        %v617 = vunpack.c.0.s8 %v616
        %v618 = vlaneseq
        %v619 = vshrl.u32 %v618, 7
        %v620 = vsub.s32 %v617, %v619
        %v621 = vrot.slane %v607, %v620
        %v622 = vcombine.low %v599, %v614
        %v623 = vcombine.high %v599, %v614
        %v625 = vunpack.c.l.s4 1934713408
        %v626 = vunpack.c.0.s8 %v625
        %v627 = vlaneseq
        %v628 = vshrl.u32 %v627, 7
        %v629 = vsub.s32 %v626, %v628
        %v630 = vrot.slane %v622, %v629
        %v632 = vunpack.c.l.s4 1934713408
        %v633 = vunpack.c.0.s8 %v632
        %v634 = vlaneseq
        %v635 = vshrl.u32 %v634, 7
        %v636 = vsub.s32 %v633, %v635
        %v637 = vrot.slane %v623, %v636
        %v638 = vcombine.low %v606, %v621
        %v639 = vcombine.high %v606, %v621
        %v641 = vunpack.c.l.s4 1934713408
        %v642 = vunpack.c.0.s8 %v641
        %v643 = vlaneseq
        %v644 = vshrl.u32 %v643, 7
        %v645 = vsub.s32 %v642, %v644
        %v646 = vrot.slane %v638, %v645
        %v648 = vunpack.c.l.s4 1934713408
        %v649 = vunpack.c.0.s8 %v648
        %v650 = vlaneseq
        %v651 = vshrl.u32 %v650, 7
        %v652 = vsub.s32 %v649, %v651
        %v653 = vrot.slane %v639, %v652
        %v654 = vcombine.high %v630, 0
        %v655 = vcombine.high %v637, 0
        %v656 = vcombine.high %v646, 0
        %v657 = vcombine.high %v653, 0
        %v658 = vcombine.high %v576, %v590
        %v660 = vunpack.c.l.s4 1983009808
        %v661 = vunpack.c.0.s8 %v660
        %v662 = vlaneseq
        %v663 = vshrl.u32 %v662, 7
        %v664 = vsub.s32 %v661, %v663
        %v665 = vrot.slane %v576, %v664
        %v667 = vunpack.c.l.s4 1983009808
        %v668 = vunpack.c.0.s8 %v667
        %v669 = vlaneseq
        %v670 = vshrl.u32 %v669, 7
        %v671 = vsub.s32 %v668, %v670
        %v672 = vrot.slane %v658, %v671
        %v673 = vcombine.high %v584, %v590
        %v675 = vunpack.c.l.s4 1983009808
        %v676 = vunpack.c.0.s8 %v675
        %v677 = vlaneseq
        %v678 = vshrl.u32 %v677, 7
        %v679 = vsub.s32 %v676, %v678
        %v680 = vrot.slane %v584, %v679
        %v682 = vunpack.c.l.s4 1983009808
        %v683 = vunpack.c.0.s8 %v682
        %v684 = vlaneseq
        %v685 = vshrl.u32 %v684, 7
        %v686 = vsub.s32 %v683, %v685
        %v687 = vrot.slane %v673, %v686
        %v688 = vcombine.low %v665, %v680
        %v689 = vcombine.high %v665, %v680
        %v691 = vunpack.c.l.s4 1934713408
        %v692 = vunpack.c.0.s8 %v691
        %v693 = vlaneseq
        %v694 = vshrl.u32 %v693, 7
        %v695 = vsub.s32 %v692, %v694
        %v696 = vrot.slane %v688, %v695
        %v698 = vunpack.c.l.s4 1934713408
        %v699 = vunpack.c.0.s8 %v698
        %v700 = vlaneseq
        %v701 = vshrl.u32 %v700, 7
        %v702 = vsub.s32 %v699, %v701
        %v703 = vrot.slane %v689, %v702
        %v704 = vcombine.low %v672, %v687
        %v705 = vcombine.high %v672, %v687
        %v707 = vunpack.c.l.s4 1934713408
        %v708 = vunpack.c.0.s8 %v707
        %v709 = vlaneseq
        %v710 = vshrl.u32 %v709, 7
        %v711 = vsub.s32 %v708, %v710
        %v712 = vrot.slane %v704, %v711
        %v714 = vunpack.c.l.s4 1934713408
        %v715 = vunpack.c.0.s8 %v714
        %v716 = vlaneseq
        %v717 = vshrl.u32 %v716, 7
        %v718 = vsub.s32 %v715, %v717
        %v719 = vrot.slane %v705, %v718
        %v720 = vcombine.high %v696, 0
        %v721 = vcombine.high %v703, 0
        %v722 = vcombine.high %v712, 0
        %v723 = vcombine.high %v719, 0
        %v724 = vcombine.low %v630, %v637
        %v726 = vunpack.c.l.s4 1983009808
        %v727 = vunpack.c.0.s8 %v726
        %v728 = vlaneseq
        %v729 = vshrl.u32 %v728, 7
        %v730 = vsub.s32 %v727, %v729
        %v731 = vrot.slane %v724, %v730
        %v732 = vcombine.low %v654, %v655
        %v734 = vunpack.c.l.s4 1983009808
        %v735 = vunpack.c.0.s8 %v734
        %v736 = vlaneseq
        %v737 = vshrl.u32 %v736, 7
        %v738 = vsub.s32 %v735, %v737
        %v739 = vrot.slane %v732, %v738
        %v740 = vcombine.low %v646, %v653
        %v742 = vunpack.c.l.s4 1983009808
        %v743 = vunpack.c.0.s8 %v742
        %v744 = vlaneseq
        %v745 = vshrl.u32 %v744, 7
        %v746 = vsub.s32 %v743, %v745
        %v747 = vrot.slane %v740, %v746
        %v748 = vcombine.low %v656, %v657
        %v750 = vunpack.c.l.s4 1983009808
        %v751 = vunpack.c.0.s8 %v750
        %v752 = vlaneseq
        %v753 = vshrl.u32 %v752, 7
        %v754 = vsub.s32 %v751, %v753
        %v755 = vrot.slane %v748, %v754
        %v756 = vcombine.low %v731, %v739
        %v758 = vunpack.c.l.s4 1934713408
        %v759 = vunpack.c.0.s8 %v758
        %v760 = vlaneseq
        %v761 = vshrl.u32 %v760, 7
        %v762 = vsub.s32 %v759, %v761
        %v763 = vrot.slane %v756, %v762
        %v764 = vcombine.low %v747, %v755
        %v766 = vunpack.c.l.s4 1934713408
        %v767 = vunpack.c.0.s8 %v766
        %v768 = vlaneseq
        %v769 = vshrl.u32 %v768, 7
        %v770 = vsub.s32 %v767, %v769
        %v771 = vrot.slane %v764, %v770
        %v772 = vcombine.low %v763, %v771
        %v773 = vcombine.high %v763, %v771
        %v774 = vcombine.low %v696, %v703
        %v776 = vunpack.c.l.s4 1983009808
        %v777 = vunpack.c.0.s8 %v776
        %v778 = vlaneseq
        %v779 = vshrl.u32 %v778, 7
        %v780 = vsub.s32 %v777, %v779
        %v781 = vrot.slane %v774, %v780
        %v782 = vcombine.low %v720, %v721
        %v784 = vunpack.c.l.s4 1983009808
        %v785 = vunpack.c.0.s8 %v784
        %v786 = vlaneseq
        %v787 = vshrl.u32 %v786, 7
        %v788 = vsub.s32 %v785, %v787
        %v789 = vrot.slane %v782, %v788
        %v790 = vcombine.low %v712, %v719
        %v792 = vunpack.c.l.s4 1983009808
        %v793 = vunpack.c.0.s8 %v792
        %v794 = vlaneseq
        %v795 = vshrl.u32 %v794, 7
        %v796 = vsub.s32 %v793, %v795
        %v797 = vrot.slane %v790, %v796
        %v798 = vcombine.low %v722, %v723
        %v800 = vunpack.c.l.s4 1983009808
        %v801 = vunpack.c.0.s8 %v800
        %v802 = vlaneseq
        %v803 = vshrl.u32 %v802, 7
        %v804 = vsub.s32 %v801, %v803
        %v805 = vrot.slane %v798, %v804
        %v806 = vcombine.low %v781, %v789
        %v808 = vunpack.c.l.s4 1934713408
        %v809 = vunpack.c.0.s8 %v808
        %v810 = vlaneseq
        %v811 = vshrl.u32 %v810, 7
        %v812 = vsub.s32 %v809, %v811
        %v813 = vrot.slane %v806, %v812
        %v814 = vcombine.low %v797, %v805
        %v816 = vunpack.c.l.s4 1934713408
        %v817 = vunpack.c.0.s8 %v816
        %v818 = vlaneseq
        %v819 = vshrl.u32 %v818, 7
        %v820 = vsub.s32 %v817, %v819
        %v821 = vrot.slane %v814, %v820
        %v822 = vcombine.low %v813, %v821
        %v823 = vcombine.high %v813, %v821
        %v826 = vpack.i.b16 %v822, %v772
        %v827 = vshrl.u32 %v772, 16
        %v828 = vshrl.u32 %v822, 16
        %v829 = vpack.i.b16 %v828, %v827
        %v832 = vpack.i.b16 %v823, %v773
        %v833 = vshrl.u32 %v773, 16
        %v834 = vshrl.u32 %v823, 16
        %v835 = vpack.i.b16 %v834, %v833
        %836 = vrot.lane.b32.xlu0 %v562, 96
        %v837 = vpop.permute.xlu0 %836
        %838 = vrot.lane.b32.xlu0 %v565, 96
        %v839 = vpop.permute.xlu0 %838
        %840 = vrot.lane.b32.xlu0 %v567, 96
        %v841 = vpop.permute.xlu0 %840
        %842 = vrot.lane.b32.xlu0 %v569, 96
        %v843 = vpop.permute.xlu0 %842
        %v846 = vpack.i.b16 %v839, %v837
        %v848 = vshrl.u32 %v837, 16
        %v849 = vshrl.u32 %v839, 16
        %v850 = vpack.i.b16 %v849, %v848
        %v854 = vpack.i.b16 %v843, %v841
        %v856 = vshrl.u32 %v841, 16
        %v857 = vshrl.u32 %v843, 16
        %v858 = vpack.i.b16 %v857, %v856
        %v860 = vcombine.high %v846, %v587
        %v862 = vunpack.c.l.s4 1983009808
        %v863 = vunpack.c.0.s8 %v862
        %v864 = vlaneseq
        %v865 = vshrl.u32 %v864, 7
        %v866 = vsub.s32 %v863, %v865
        %v867 = vrot.slane %v846, %v866
        %v869 = vunpack.c.l.s4 1983009808
        %v870 = vunpack.c.0.s8 %v869
        %v871 = vlaneseq
        %v872 = vshrl.u32 %v871, 7
        %v873 = vsub.s32 %v870, %v872
        %v874 = vrot.slane %v860, %v873
        %v875 = vcombine.high %v854, %v587
        %v877 = vunpack.c.l.s4 1983009808
        %v878 = vunpack.c.0.s8 %v877
        %v879 = vlaneseq
        %v880 = vshrl.u32 %v879, 7
        %v881 = vsub.s32 %v878, %v880
        %v882 = vrot.slane %v854, %v881
        %v884 = vunpack.c.l.s4 1983009808
        %v885 = vunpack.c.0.s8 %v884
        %v886 = vlaneseq
        %v887 = vshrl.u32 %v886, 7
        %v888 = vsub.s32 %v885, %v887
        %v889 = vrot.slane %v875, %v888
        %v890 = vcombine.low %v867, %v882
        %v891 = vcombine.high %v867, %v882
        %v893 = vunpack.c.l.s4 1934713408
        %v894 = vunpack.c.0.s8 %v893
        %v895 = vlaneseq
        %v896 = vshrl.u32 %v895, 7
        %v897 = vsub.s32 %v894, %v896
        %v898 = vrot.slane %v890, %v897
        %v900 = vunpack.c.l.s4 1934713408
        %v901 = vunpack.c.0.s8 %v900
        %v902 = vlaneseq
        %v903 = vshrl.u32 %v902, 7
        %v904 = vsub.s32 %v901, %v903
        %v905 = vrot.slane %v891, %v904
        %v906 = vcombine.low %v874, %v889
        %v907 = vcombine.high %v874, %v889
        %v909 = vunpack.c.l.s4 1934713408
        %v910 = vunpack.c.0.s8 %v909
        %v911 = vlaneseq
        %v912 = vshrl.u32 %v911, 7
        %v913 = vsub.s32 %v910, %v912
        %v914 = vrot.slane %v906, %v913
        %v916 = vunpack.c.l.s4 1934713408
        %v917 = vunpack.c.0.s8 %v916
        %v918 = vlaneseq
        %v919 = vshrl.u32 %v918, 7
        %v920 = vsub.s32 %v917, %v919
        %v921 = vrot.slane %v907, %v920
        %v922 = vcombine.high %v898, 0
        %v923 = vcombine.high %v905, 0
        %v924 = vcombine.high %v914, 0
        %v925 = vcombine.high %v921, 0
        %v926 = vcombine.high %v850, %v590
        %v928 = vunpack.c.l.s4 1983009808
        %v929 = vunpack.c.0.s8 %v928
        %v930 = vlaneseq
        %v931 = vshrl.u32 %v930, 7
        %v932 = vsub.s32 %v929, %v931
        %v933 = vrot.slane %v850, %v932
        %v935 = vunpack.c.l.s4 1983009808
        %v936 = vunpack.c.0.s8 %v935
        %v937 = vlaneseq
        %v938 = vshrl.u32 %v937, 7
        %v939 = vsub.s32 %v936, %v938
        %v940 = vrot.slane %v926, %v939
        %v941 = vcombine.high %v858, %v590
        %v943 = vunpack.c.l.s4 1983009808
        %v944 = vunpack.c.0.s8 %v943
        %v945 = vlaneseq
        %v946 = vshrl.u32 %v945, 7
        %v947 = vsub.s32 %v944, %v946
        %v948 = vrot.slane %v858, %v947
        %v950 = vunpack.c.l.s4 1983009808
        %v951 = vunpack.c.0.s8 %v950
        %v952 = vlaneseq
        %v953 = vshrl.u32 %v952, 7
        %v954 = vsub.s32 %v951, %v953
        %v955 = vrot.slane %v941, %v954
        %v956 = vcombine.low %v933, %v948
        %v957 = vcombine.high %v933, %v948
        %v959 = vunpack.c.l.s4 1934713408
        %v960 = vunpack.c.0.s8 %v959
        %v961 = vlaneseq
        %v962 = vshrl.u32 %v961, 7
        %v963 = vsub.s32 %v960, %v962
        %v964 = vrot.slane %v956, %v963
        %v966 = vunpack.c.l.s4 1934713408
        %v967 = vunpack.c.0.s8 %v966
        %v968 = vlaneseq
        %v969 = vshrl.u32 %v968, 7
        %v970 = vsub.s32 %v967, %v969
        %v971 = vrot.slane %v957, %v970
        %v972 = vcombine.low %v940, %v955
        %v973 = vcombine.high %v940, %v955
        %v975 = vunpack.c.l.s4 1934713408
        %v976 = vunpack.c.0.s8 %v975
        %v977 = vlaneseq
        %v978 = vshrl.u32 %v977, 7
        %v979 = vsub.s32 %v976, %v978
        %v980 = vrot.slane %v972, %v979
        %v982 = vunpack.c.l.s4 1934713408
        %v983 = vunpack.c.0.s8 %v982
        %v984 = vlaneseq
        %v985 = vshrl.u32 %v984, 7
        %v986 = vsub.s32 %v983, %v985
        %v987 = vrot.slane %v973, %v986
        %v988 = vcombine.high %v964, 0
        %v989 = vcombine.high %v971, 0
        %v990 = vcombine.high %v980, 0
        %v991 = vcombine.high %v987, 0
        %v992 = vcombine.low %v898, %v905
        %v994 = vunpack.c.l.s4 1983009808
        %v995 = vunpack.c.0.s8 %v994
        %v996 = vlaneseq
        %v997 = vshrl.u32 %v996, 7
        %v998 = vsub.s32 %v995, %v997
        %v999 = vrot.slane %v992, %v998
        %v1000 = vcombine.low %v922, %v923
        %v1002 = vunpack.c.l.s4 1983009808
        %v1003 = vunpack.c.0.s8 %v1002
        %v1004 = vlaneseq
        %v1005 = vshrl.u32 %v1004, 7
        %v1006 = vsub.s32 %v1003, %v1005
        %v1007 = vrot.slane %v1000, %v1006
        %v1008 = vcombine.low %v914, %v921
        %v1010 = vunpack.c.l.s4 1983009808
        %v1011 = vunpack.c.0.s8 %v1010
        %v1012 = vlaneseq
        %v1013 = vshrl.u32 %v1012, 7
        %v1014 = vsub.s32 %v1011, %v1013
        %v1015 = vrot.slane %v1008, %v1014
        %v1016 = vcombine.low %v924, %v925
        %v1018 = vunpack.c.l.s4 1983009808
        %v1019 = vunpack.c.0.s8 %v1018
        %v1020 = vlaneseq
        %v1021 = vshrl.u32 %v1020, 7
        %v1022 = vsub.s32 %v1019, %v1021
        %v1023 = vrot.slane %v1016, %v1022
        %v1024 = vcombine.low %v999, %v1007
        %v1026 = vunpack.c.l.s4 1934713408
        %v1027 = vunpack.c.0.s8 %v1026
        %v1028 = vlaneseq
        %v1029 = vshrl.u32 %v1028, 7
        %v1030 = vsub.s32 %v1027, %v1029
        %v1031 = vrot.slane %v1024, %v1030
        %v1032 = vcombine.low %v1015, %v1023
        %v1034 = vunpack.c.l.s4 1934713408
        %v1035 = vunpack.c.0.s8 %v1034
        %v1036 = vlaneseq
        %v1037 = vshrl.u32 %v1036, 7
        %v1038 = vsub.s32 %v1035, %v1037
        %v1039 = vrot.slane %v1032, %v1038
        %v1040 = vcombine.low %v1031, %v1039
        %v1041 = vcombine.high %v1031, %v1039
        %v1042 = vcombine.low %v964, %v971
        %v1044 = vunpack.c.l.s4 1983009808
        %v1045 = vunpack.c.0.s8 %v1044
        %v1046 = vlaneseq
        %v1047 = vshrl.u32 %v1046, 7
        %v1048 = vsub.s32 %v1045, %v1047
        %v1049 = vrot.slane %v1042, %v1048
        %v1050 = vcombine.low %v988, %v989
        %v1052 = vunpack.c.l.s4 1983009808
        %v1053 = vunpack.c.0.s8 %v1052
        %v1054 = vlaneseq
        %v1055 = vshrl.u32 %v1054, 7
        %v1056 = vsub.s32 %v1053, %v1055
        %v1057 = vrot.slane %v1050, %v1056
        %v1058 = vcombine.low %v980, %v987
        %v1060 = vunpack.c.l.s4 1983009808
        %v1061 = vunpack.c.0.s8 %v1060
        %v1062 = vlaneseq
        %v1063 = vshrl.u32 %v1062, 7
        %v1064 = vsub.s32 %v1061, %v1063
        %v1065 = vrot.slane %v1058, %v1064
        %v1066 = vcombine.low %v990, %v991
        %v1068 = vunpack.c.l.s4 1983009808
        %v1069 = vunpack.c.0.s8 %v1068
        %v1070 = vlaneseq
        %v1071 = vshrl.u32 %v1070, 7
        %v1072 = vsub.s32 %v1069, %v1071
        %v1073 = vrot.slane %v1066, %v1072
        %v1074 = vcombine.low %v1049, %v1057
        %v1076 = vunpack.c.l.s4 1934713408
        %v1077 = vunpack.c.0.s8 %v1076
        %v1078 = vlaneseq
        %v1079 = vshrl.u32 %v1078, 7
        %v1080 = vsub.s32 %v1077, %v1079
        %v1081 = vrot.slane %v1074, %v1080
        %v1082 = vcombine.low %v1065, %v1073
        %v1084 = vunpack.c.l.s4 1934713408
        %v1085 = vunpack.c.0.s8 %v1084
        %v1086 = vlaneseq
        %v1087 = vshrl.u32 %v1086, 7
        %v1088 = vsub.s32 %v1085, %v1087
        %v1089 = vrot.slane %v1082, %v1088
        %v1090 = vcombine.low %v1081, %v1089
        %v1091 = vcombine.high %v1081, %v1089
        %v1094 = vpack.i.b16 %v1090, %v1040
        %v1095 = vshrl.u32 %v1040, 16
        %v1096 = vshrl.u32 %v1090, 16
        %v1097 = vpack.i.b16 %v1096, %v1095
        %v1100 = vpack.i.b16 %v1091, %v1041
        %v1101 = vshrl.u32 %v1041, 16
        %v1102 = vshrl.u32 %v1091, 16
        %v1103 = vpack.i.b16 %v1102, %v1101
        %1104 = vrot.lane.b32.xlu0 %v562, 64
        %v1105 = vpop.permute.xlu0 %1104
        %1106 = vrot.lane.b32.xlu0 %v565, 64
        %v1107 = vpop.permute.xlu0 %1106
        %1108 = vrot.lane.b32.xlu0 %v567, 64
        %v1109 = vpop.permute.xlu0 %1108
        %1110 = vrot.lane.b32.xlu0 %v569, 64
        %v1111 = vpop.permute.xlu0 %1110
        %v1114 = vpack.i.b16 %v1107, %v1105
        %v1116 = vshrl.u32 %v1105, 16
        %v1117 = vshrl.u32 %v1107, 16
        %v1118 = vpack.i.b16 %v1117, %v1116
        %v1122 = vpack.i.b16 %v1111, %v1109
        %v1124 = vshrl.u32 %v1109, 16
        %v1125 = vshrl.u32 %v1111, 16
        %v1126 = vpack.i.b16 %v1125, %v1124
        %v1128 = vcombine.high %v1114, %v587
        %v1130 = vunpack.c.l.s4 1983009808
        %v1131 = vunpack.c.0.s8 %v1130
        %v1132 = vlaneseq
        %v1133 = vshrl.u32 %v1132, 7
        %v1134 = vsub.s32 %v1131, %v1133
        %v1135 = vrot.slane %v1114, %v1134
        %v1137 = vunpack.c.l.s4 1983009808
        %v1138 = vunpack.c.0.s8 %v1137
        %v1139 = vlaneseq
        %v1140 = vshrl.u32 %v1139, 7
        %v1141 = vsub.s32 %v1138, %v1140
        %v1142 = vrot.slane %v1128, %v1141
        %v1143 = vcombine.high %v1122, %v587
        %v1145 = vunpack.c.l.s4 1983009808
        %v1146 = vunpack.c.0.s8 %v1145
        %v1147 = vlaneseq
        %v1148 = vshrl.u32 %v1147, 7
        %v1149 = vsub.s32 %v1146, %v1148
        %v1150 = vrot.slane %v1122, %v1149
        %v1152 = vunpack.c.l.s4 1983009808
        %v1153 = vunpack.c.0.s8 %v1152
        %v1154 = vlaneseq
        %v1155 = vshrl.u32 %v1154, 7
        %v1156 = vsub.s32 %v1153, %v1155
        %v1157 = vrot.slane %v1143, %v1156
        %v1158 = vcombine.low %v1135, %v1150
        %v1159 = vcombine.high %v1135, %v1150
        %v1161 = vunpack.c.l.s4 1934713408
        %v1162 = vunpack.c.0.s8 %v1161
        %v1163 = vlaneseq
        %v1164 = vshrl.u32 %v1163, 7
        %v1165 = vsub.s32 %v1162, %v1164
        %v1166 = vrot.slane %v1158, %v1165
        %v1168 = vunpack.c.l.s4 1934713408
        %v1169 = vunpack.c.0.s8 %v1168
        %v1170 = vlaneseq
        %v1171 = vshrl.u32 %v1170, 7
        %v1172 = vsub.s32 %v1169, %v1171
        %v1173 = vrot.slane %v1159, %v1172
        %v1174 = vcombine.low %v1142, %v1157
        %v1175 = vcombine.high %v1142, %v1157
        %v1177 = vunpack.c.l.s4 1934713408
        %v1178 = vunpack.c.0.s8 %v1177
        %v1179 = vlaneseq
        %v1180 = vshrl.u32 %v1179, 7
        %v1181 = vsub.s32 %v1178, %v1180
        %v1182 = vrot.slane %v1174, %v1181
        %v1184 = vunpack.c.l.s4 1934713408
        %v1185 = vunpack.c.0.s8 %v1184
        %v1186 = vlaneseq
        %v1187 = vshrl.u32 %v1186, 7
        %v1188 = vsub.s32 %v1185, %v1187
        %v1189 = vrot.slane %v1175, %v1188
        %v1190 = vcombine.high %v1166, 0
        %v1191 = vcombine.high %v1173, 0
        %v1192 = vcombine.high %v1182, 0
        %v1193 = vcombine.high %v1189, 0
        %v1194 = vcombine.high %v1118, %v590
        %v1196 = vunpack.c.l.s4 1983009808
        %v1197 = vunpack.c.0.s8 %v1196
        %v1198 = vlaneseq
        %v1199 = vshrl.u32 %v1198, 7
        %v1200 = vsub.s32 %v1197, %v1199
        %v1201 = vrot.slane %v1118, %v1200
        %v1203 = vunpack.c.l.s4 1983009808
        %v1204 = vunpack.c.0.s8 %v1203
        %v1205 = vlaneseq
        %v1206 = vshrl.u32 %v1205, 7
        %v1207 = vsub.s32 %v1204, %v1206
        %v1208 = vrot.slane %v1194, %v1207
        %v1209 = vcombine.high %v1126, %v590
        %v1211 = vunpack.c.l.s4 1983009808
        %v1212 = vunpack.c.0.s8 %v1211
        %v1213 = vlaneseq
        %v1214 = vshrl.u32 %v1213, 7
        %v1215 = vsub.s32 %v1212, %v1214
        %v1216 = vrot.slane %v1126, %v1215
        %v1218 = vunpack.c.l.s4 1983009808
        %v1219 = vunpack.c.0.s8 %v1218
        %v1220 = vlaneseq
        %v1221 = vshrl.u32 %v1220, 7
        %v1222 = vsub.s32 %v1219, %v1221
        %v1223 = vrot.slane %v1209, %v1222
        %v1224 = vcombine.low %v1201, %v1216
        %v1225 = vcombine.high %v1201, %v1216
        %v1227 = vunpack.c.l.s4 1934713408
        %v1228 = vunpack.c.0.s8 %v1227
        %v1229 = vlaneseq
        %v1230 = vshrl.u32 %v1229, 7
        %v1231 = vsub.s32 %v1228, %v1230
        %v1232 = vrot.slane %v1224, %v1231
        %v1234 = vunpack.c.l.s4 1934713408
        %v1235 = vunpack.c.0.s8 %v1234
        %v1236 = vlaneseq
        %v1237 = vshrl.u32 %v1236, 7
        %v1238 = vsub.s32 %v1235, %v1237
        %v1239 = vrot.slane %v1225, %v1238
        %v1240 = vcombine.low %v1208, %v1223
        %v1241 = vcombine.high %v1208, %v1223
        %v1243 = vunpack.c.l.s4 1934713408
        %v1244 = vunpack.c.0.s8 %v1243
        %v1245 = vlaneseq
        %v1246 = vshrl.u32 %v1245, 7
        %v1247 = vsub.s32 %v1244, %v1246
        %v1248 = vrot.slane %v1240, %v1247
        %v1250 = vunpack.c.l.s4 1934713408
        %v1251 = vunpack.c.0.s8 %v1250
        %v1252 = vlaneseq
        %v1253 = vshrl.u32 %v1252, 7
        %v1254 = vsub.s32 %v1251, %v1253
        %v1255 = vrot.slane %v1241, %v1254
        %v1256 = vcombine.high %v1232, 0
        %v1257 = vcombine.high %v1239, 0
        %v1258 = vcombine.high %v1248, 0
        %v1259 = vcombine.high %v1255, 0
        %v1260 = vcombine.low %v1166, %v1173
        %v1262 = vunpack.c.l.s4 1983009808
        %v1263 = vunpack.c.0.s8 %v1262
        %v1264 = vlaneseq
        %v1265 = vshrl.u32 %v1264, 7
        %v1266 = vsub.s32 %v1263, %v1265
        %v1267 = vrot.slane %v1260, %v1266
        %v1268 = vcombine.low %v1190, %v1191
        %v1270 = vunpack.c.l.s4 1983009808
        %v1271 = vunpack.c.0.s8 %v1270
        %v1272 = vlaneseq
        %v1273 = vshrl.u32 %v1272, 7
        %v1274 = vsub.s32 %v1271, %v1273
        %v1275 = vrot.slane %v1268, %v1274
        %v1276 = vcombine.low %v1182, %v1189
        %v1278 = vunpack.c.l.s4 1983009808
        %v1279 = vunpack.c.0.s8 %v1278
        %v1280 = vlaneseq
        %v1281 = vshrl.u32 %v1280, 7
        %v1282 = vsub.s32 %v1279, %v1281
        %v1283 = vrot.slane %v1276, %v1282
        %v1284 = vcombine.low %v1192, %v1193
        %v1286 = vunpack.c.l.s4 1983009808
        %v1287 = vunpack.c.0.s8 %v1286
        %v1288 = vlaneseq
        %v1289 = vshrl.u32 %v1288, 7
        %v1290 = vsub.s32 %v1287, %v1289
        %v1291 = vrot.slane %v1284, %v1290
        %v1292 = vcombine.low %v1267, %v1275
        %v1294 = vunpack.c.l.s4 1934713408
        %v1295 = vunpack.c.0.s8 %v1294
        %v1296 = vlaneseq
        %v1297 = vshrl.u32 %v1296, 7
        %v1298 = vsub.s32 %v1295, %v1297
        %v1299 = vrot.slane %v1292, %v1298
        %v1300 = vcombine.low %v1283, %v1291
        %v1302 = vunpack.c.l.s4 1934713408
        %v1303 = vunpack.c.0.s8 %v1302
        %v1304 = vlaneseq
        %v1305 = vshrl.u32 %v1304, 7
        %v1306 = vsub.s32 %v1303, %v1305
        %v1307 = vrot.slane %v1300, %v1306
        %v1308 = vcombine.low %v1299, %v1307
        %v1309 = vcombine.high %v1299, %v1307
        %v1310 = vcombine.low %v1232, %v1239
        %v1312 = vunpack.c.l.s4 1983009808
        %v1313 = vunpack.c.0.s8 %v1312
        %v1314 = vlaneseq
        %v1315 = vshrl.u32 %v1314, 7
        %v1316 = vsub.s32 %v1313, %v1315
        %v1317 = vrot.slane %v1310, %v1316
        %v1318 = vcombine.low %v1256, %v1257
        %v1320 = vunpack.c.l.s4 1983009808
        %v1321 = vunpack.c.0.s8 %v1320
        %v1322 = vlaneseq
        %v1323 = vshrl.u32 %v1322, 7
        %v1324 = vsub.s32 %v1321, %v1323
        %v1325 = vrot.slane %v1318, %v1324
        %v1326 = vcombine.low %v1248, %v1255
        %v1328 = vunpack.c.l.s4 1983009808
        %v1329 = vunpack.c.0.s8 %v1328
        %v1330 = vlaneseq
        %v1331 = vshrl.u32 %v1330, 7
        %v1332 = vsub.s32 %v1329, %v1331
        %v1333 = vrot.slane %v1326, %v1332
        %v1334 = vcombine.low %v1258, %v1259
        %v1336 = vunpack.c.l.s4 1983009808
        %v1337 = vunpack.c.0.s8 %v1336
        %v1338 = vlaneseq
        %v1339 = vshrl.u32 %v1338, 7
        %v1340 = vsub.s32 %v1337, %v1339
        %v1341 = vrot.slane %v1334, %v1340
        %v1342 = vcombine.low %v1317, %v1325
        %v1344 = vunpack.c.l.s4 1934713408
        %v1345 = vunpack.c.0.s8 %v1344
        %v1346 = vlaneseq
        %v1347 = vshrl.u32 %v1346, 7
        %v1348 = vsub.s32 %v1345, %v1347
        %v1349 = vrot.slane %v1342, %v1348
        %v1350 = vcombine.low %v1333, %v1341
        %v1352 = vunpack.c.l.s4 1934713408
        %v1353 = vunpack.c.0.s8 %v1352
        %v1354 = vlaneseq
        %v1355 = vshrl.u32 %v1354, 7
        %v1356 = vsub.s32 %v1353, %v1355
        %v1357 = vrot.slane %v1350, %v1356
        %v1358 = vcombine.low %v1349, %v1357
        %v1359 = vcombine.high %v1349, %v1357
        %v1362 = vpack.i.b16 %v1358, %v1308
        %v1364 = vshrl.u32 %v1308, 16
        %v1365 = vshrl.u32 %v1358, 16
        %v1366 = vpack.i.b16 %v1365, %v1364
        %v1370 = vpack.i.b16 %v1359, %v1309
        %v1372 = vshrl.u32 %v1309, 16
        %v1373 = vshrl.u32 %v1359, 16
        %v1374 = vpack.i.b16 %v1373, %v1372
        %v1376 = vlaneseq
        %v1377 = vand.u32 %v1376, 127
        %vm1378 = vcmp.ge.s32.totalorder %v1377, 8
        %v1379 = vsel %vm1378, -1e+09, 0.0
        %vm1380 = vcmask 64512
        %v1382 = vsel %vm1380, %v826, 0
        %v1385 = vsel %vm1380, %v1094, 0
        %1387 = vmatprep.subr.bf16.mxu0 0
        %1388 = vmatpush1.bf16.xpose.msra.mxu0 %v1385
        %1389 = vmatprep.subr.bf16.mxu0 0
        %1390 = vmatpush1.bf16.xpose.msra.mxu0 0
        %1391 = vmatprep.subr.bf16.mxu0 0
        %1392 = vmatpush1.bf16.xpose.msra.mxu0 0
        %1393 = vmatprep.subr.bf16.mxu0 0
        %1394 = vmatpush1.bf16.xpose.msra.mxu0 0
        %1395 = vmatprep.subr.bf16.mxu0 0
        %1396 = vmatpush1.bf16.xpose.msra.mxu0 0
        %1397 = vmatprep.subr.bf16.mxu0 0
        %1398 = vmatpush1.bf16.xpose.msra.mxu0 0
        %1399 = vmatprep.subr.bf16.mxu0 0
        %1400 = vmatpush1.bf16.xpose.msra.mxu0 0
        %1401 = vmatprep.subr.bf16.mxu0 0
        %1402 = vmatpush1.bf16.xpose.msra.mxu0 0
        %1403 = vmatprep.subr.bf16.mxu0 0
        %1404 = vmatpush1.bf16.xpose.msra.mxu0 0
        %1405 = vmatprep.subr.bf16.mxu0 0
        %1406 = vmatpush1.bf16.xpose.msra.mxu0 0
        %1407 = vmatprep.subr.bf16.mxu0 0
        %1408 = vmatpush1.bf16.xpose.msra.mxu0 0
        %1409 = vmatprep.subr.bf16.mxu0 0
        %1410 = vmatpush1.bf16.xpose.msra.mxu0 0
        %1411 = vmatprep.subr.bf16.mxu0 0
        %1412 = vmatpush1.bf16.xpose.msra.mxu0 0
        %1413 = vmatprep.subr.bf16.mxu0 0
        %1414 = vmatpush1.bf16.xpose.msra.mxu0 0
        %1415 = vmatprep.subr.bf16.mxu0 0
        %1416 = vmatpush1.bf16.xpose.msra.mxu0 0
        %1417 = vmatprep.subr.bf16.mxu0 0
        %1418 = vmatpush1.bf16.xpose.msra.mxu0 0
        %1419 = vmatprep.mubr.bf16.mxu0 0
        %1420 = vmatmul.mubr.bf16.gmra.mrb[0].mxu0 %v1382
        %v1421 = vpop.f32.mrb[0].mxu0
        %v1422 = vadd.f32 %v1379, %v1421
        %v1423 = vpop.f32.mrb[0].mxu0
        %v1424 = vpop.f32.mrb[0].mxu0
        %v1425 = vadd.f32 %v1379, %v1424
        %v1426 = vpop.f32.mrb[0].mxu0
        %1427 = vdwg.mxu0
        %v1429 = vsel %vm1380, %v829, 0
        %v1432 = vsel %vm1380, %v1097, 0
        %1434 = vmatprep.subr.bf16.mxu0 0
        %1435 = vmatpush1.bf16.xpose.msra.mxu0 %v1432
        %1436 = vmatprep.subr.bf16.mxu0 0
        %1437 = vmatpush1.bf16.xpose.msra.mxu0 0
        %1438 = vmatprep.subr.bf16.mxu0 0
        %1439 = vmatpush1.bf16.xpose.msra.mxu0 0
        %1440 = vmatprep.subr.bf16.mxu0 0
        %1441 = vmatpush1.bf16.xpose.msra.mxu0 0
        %1442 = vmatprep.subr.bf16.mxu0 0
        %1443 = vmatpush1.bf16.xpose.msra.mxu0 0
        %1444 = vmatprep.subr.bf16.mxu0 0
        %1445 = vmatpush1.bf16.xpose.msra.mxu0 0
        %1446 = vmatprep.subr.bf16.mxu0 0
        %1447 = vmatpush1.bf16.xpose.msra.mxu0 0
        %1448 = vmatprep.subr.bf16.mxu0 0
        %1449 = vmatpush1.bf16.xpose.msra.mxu0 0
        %1450 = vmatprep.subr.bf16.mxu0 0
        %1451 = vmatpush1.bf16.xpose.msra.mxu0 0
        %1452 = vmatprep.subr.bf16.mxu0 0
        %1453 = vmatpush1.bf16.xpose.msra.mxu0 0
        %1454 = vmatprep.subr.bf16.mxu0 0
        %1455 = vmatpush1.bf16.xpose.msra.mxu0 0
        %1456 = vmatprep.subr.bf16.mxu0 0
        %1457 = vmatpush1.bf16.xpose.msra.mxu0 0
        %1458 = vmatprep.subr.bf16.mxu0 0
        %1459 = vmatpush1.bf16.xpose.msra.mxu0 0
        %1460 = vmatprep.subr.bf16.mxu0 0
        %1461 = vmatpush1.bf16.xpose.msra.mxu0 0
        %1462 = vmatprep.subr.bf16.mxu0 0
        %1463 = vmatpush1.bf16.xpose.msra.mxu0 0
        %1464 = vmatprep.subr.bf16.mxu0 0
        %1465 = vmatpush1.bf16.xpose.msra.mxu0 0
        %1466 = vmatprep.mubr.bf16.mxu0 0
        %1467 = vmatmul.mubr.bf16.gmra.mrb[0].mxu0 %v1429
        %v1468 = vpop.f32.mrb[0].mxu0
        %v1469 = vadd.f32 %v1379, %v1468
        %v1470 = vpop.f32.mrb[0].mxu0
        %v1471 = vpop.f32.mrb[0].mxu0
        %v1472 = vadd.f32 %v1379, %v1471
        %v1473 = vpop.f32.mrb[0].mxu0
        %1474 = vdwg.mxu0
        %v1476 = vsel %vm1380, %v832, 0
        %v1479 = vsel %vm1380, %v1100, 0
        %1481 = vmatprep.subr.bf16.mxu0 0
        %1482 = vmatpush1.bf16.xpose.msra.mxu0 %v1479
        %1483 = vmatprep.subr.bf16.mxu0 0
        %1484 = vmatpush1.bf16.xpose.msra.mxu0 0
        %1485 = vmatprep.subr.bf16.mxu0 0
        %1486 = vmatpush1.bf16.xpose.msra.mxu0 0
        %1487 = vmatprep.subr.bf16.mxu0 0
        %1488 = vmatpush1.bf16.xpose.msra.mxu0 0
        %1489 = vmatprep.subr.bf16.mxu0 0
        %1490 = vmatpush1.bf16.xpose.msra.mxu0 0
        %1491 = vmatprep.subr.bf16.mxu0 0
        %1492 = vmatpush1.bf16.xpose.msra.mxu0 0
        %1493 = vmatprep.subr.bf16.mxu0 0
        %1494 = vmatpush1.bf16.xpose.msra.mxu0 0
        %1495 = vmatprep.subr.bf16.mxu0 0
        %1496 = vmatpush1.bf16.xpose.msra.mxu0 0
        %1497 = vmatprep.subr.bf16.mxu0 0
        %1498 = vmatpush1.bf16.xpose.msra.mxu0 0
        %1499 = vmatprep.subr.bf16.mxu0 0
        %1500 = vmatpush1.bf16.xpose.msra.mxu0 0
        %1501 = vmatprep.subr.bf16.mxu0 0
        %1502 = vmatpush1.bf16.xpose.msra.mxu0 0
        %1503 = vmatprep.subr.bf16.mxu0 0
        %1504 = vmatpush1.bf16.xpose.msra.mxu0 0
        %1505 = vmatprep.subr.bf16.mxu0 0
        %1506 = vmatpush1.bf16.xpose.msra.mxu0 0
        %1507 = vmatprep.subr.bf16.mxu0 0
        %1508 = vmatpush1.bf16.xpose.msra.mxu0 0
        %1509 = vmatprep.subr.bf16.mxu0 0
        %1510 = vmatpush1.bf16.xpose.msra.mxu0 0
        %1511 = vmatprep.subr.bf16.mxu0 0
        %1512 = vmatpush1.bf16.xpose.msra.mxu0 0
        %1513 = vmatprep.mubr.bf16.mxu0 0
        %1514 = vmatmul.mubr.bf16.gmra.mrb[0].mxu0 %v1476
        %v1515 = vpop.f32.mrb[0].mxu0
        %v1516 = vadd.f32 %v1379, %v1515
        %v1517 = vpop.f32.mrb[0].mxu0
        %v1518 = vpop.f32.mrb[0].mxu0
        %v1519 = vadd.f32 %v1379, %v1518
        %v1520 = vpop.f32.mrb[0].mxu0
        %1521 = vdwg.mxu0
        %v1523 = vsel %vm1380, %v835, 0
        %v1526 = vsel %vm1380, %v1103, 0
        %1528 = vmatprep.subr.bf16.mxu0 0
        %1529 = vmatpush1.bf16.xpose.msra.mxu0 %v1526
        %1530 = vmatprep.subr.bf16.mxu0 0
        %1531 = vmatpush1.bf16.xpose.msra.mxu0 0
        %1532 = vmatprep.subr.bf16.mxu0 0
        %1533 = vmatpush1.bf16.xpose.msra.mxu0 0
        %1534 = vmatprep.subr.bf16.mxu0 0
        %1535 = vmatpush1.bf16.xpose.msra.mxu0 0
        %1536 = vmatprep.subr.bf16.mxu0 0
        %1537 = vmatpush1.bf16.xpose.msra.mxu0 0
        %1538 = vmatprep.subr.bf16.mxu0 0
        %1539 = vmatpush1.bf16.xpose.msra.mxu0 0
        %1540 = vmatprep.subr.bf16.mxu0 0
        %1541 = vmatpush1.bf16.xpose.msra.mxu0 0
        %1542 = vmatprep.subr.bf16.mxu0 0
        %1543 = vmatpush1.bf16.xpose.msra.mxu0 0
        %1544 = vmatprep.subr.bf16.mxu0 0
        %1545 = vmatpush1.bf16.xpose.msra.mxu0 0
        %1546 = vmatprep.subr.bf16.mxu0 0
        %1547 = vmatpush1.bf16.xpose.msra.mxu0 0
        %1548 = vmatprep.subr.bf16.mxu0 0
        %1549 = vmatpush1.bf16.xpose.msra.mxu0 0
        %1550 = vmatprep.subr.bf16.mxu0 0
        %1551 = vmatpush1.bf16.xpose.msra.mxu0 0
        %1552 = vmatprep.subr.bf16.mxu0 0
        %1553 = vmatpush1.bf16.xpose.msra.mxu0 0
        %1554 = vmatprep.subr.bf16.mxu0 0
        %1555 = vmatpush1.bf16.xpose.msra.mxu0 0
        %1556 = vmatprep.subr.bf16.mxu0 0
        %1557 = vmatpush1.bf16.xpose.msra.mxu0 0
        %1558 = vmatprep.subr.bf16.mxu0 0
        %1559 = vmatpush1.bf16.xpose.msra.mxu0 0
        %1560 = vmatprep.mubr.bf16.mxu0 0
        %1561 = vmatmul.mubr.bf16.gmra.mrb[0].mxu0 %v1523
        %v1562 = vpop.f32.mrb[0].mxu0
        %v1563 = vadd.f32 %v1379, %v1562
        %v1564 = vpop.f32.mrb[0].mxu0
        %v1565 = vpop.f32.mrb[0].mxu0
        %v1566 = vadd.f32 %v1379, %v1565
        %v1567 = vpop.f32.mrb[0].mxu0
        %1568 = vdwg.mxu0
        %vm1569 = vcmask 130048
        %v1570 = vsel %vm1569, %v1422, -inf
        %1571 = vmax.xlane.f32.xlu0 %v1570
        %v1572 = vpop.xlane.xlu0 %1571
        %v1573 = vsel %vm1569, %v1425, -inf
        %1574 = vmax.xlane.f32.xlu0 %v1573
        %v1575 = vpop.xlane.xlu0 %1574
        %v1576 = vsel %vm1569, %v1469, -inf
        %1577 = vmax.xlane.f32.xlu0 %v1576
        %v1578 = vpop.xlane.xlu0 %1577
        %v1579 = vsel %vm1569, %v1472, -inf
        %1580 = vmax.xlane.f32.xlu0 %v1579
        %v1581 = vpop.xlane.xlu0 %1580
        %v1582 = vsel %vm1569, %v1516, -inf
        %1583 = vmax.xlane.f32.xlu0 %v1582
        %v1584 = vpop.xlane.xlu0 %1583
        %v1585 = vsel %vm1569, %v1519, -inf
        %1586 = vmax.xlane.f32.xlu0 %v1585
        %v1587 = vpop.xlane.xlu0 %1586
        %v1588 = vsel %vm1569, %v1563, -inf
        %1589 = vmax.xlane.f32.xlu0 %v1588
        %v1590 = vpop.xlane.xlu0 %1589
        %v1591 = vsel %vm1569, %v1566, -inf
        %1592 = vmax.xlane.f32.xlu0 %v1591
        %v1593 = vpop.xlane.xlu0 %1592
        %v1594 = vsub.f32 %v1422, %v1572
        %v1595 = vsub.f32 %v1425, %v1575
        %v1596 = vsub.f32 %v1469, %v1578
        %v1597 = vsub.f32 %v1472, %v1581
        %v1598 = vsub.f32 %v1516, %v1584
        %v1599 = vsub.f32 %v1519, %v1587
        %v1600 = vsub.f32 %v1563, %v1590
        %v1601 = vsub.f32 %v1566, %v1593
        %v1602 = vmul.f32 %v1594, 1.442695
        %v1603 = vpow.pop %v1602
        %v1604 = vmul.f32 %v1595, 1.442695
        %v1605 = vpow.pop %v1604
        %v1606 = vmul.f32 %v1596, 1.442695
        %v1607 = vpow.pop %v1606
        %v1608 = vmul.f32 %v1597, 1.442695
        %v1609 = vpow.pop %v1608
        %v1610 = vmul.f32 %v1598, 1.442695
        %v1611 = vpow.pop %v1610
        %v1612 = vmul.f32 %v1599, 1.442695
        %v1613 = vpow.pop %v1612
        %v1614 = vmul.f32 %v1600, 1.442695
        %v1615 = vpow.pop %v1614
        %v1616 = vmul.f32 %v1601, 1.442695
        %v1617 = vpow.pop %v1616
        %v1618 = vsel %vm1569, %v1603, 0.0
        %1619 = vadd.xlane.f32.xlu0 %v1618
        %v1620 = vpop.xlane.xlu0 %1619
        %v1621 = vsel %vm1569, %v1605, 0.0
        %1622 = vadd.xlane.f32.xlu0 %v1621
        %v1623 = vpop.xlane.xlu0 %1622
        %v1624 = vsel %vm1569, %v1607, 0.0
        %1625 = vadd.xlane.f32.xlu0 %v1624
        %v1626 = vpop.xlane.xlu0 %1625
        %v1627 = vsel %vm1569, %v1609, 0.0
        %1628 = vadd.xlane.f32.xlu0 %v1627
        %v1629 = vpop.xlane.xlu0 %1628
        %v1630 = vsel %vm1569, %v1611, 0.0
        %1631 = vadd.xlane.f32.xlu0 %v1630
        %v1632 = vpop.xlane.xlu0 %1631
        %v1633 = vsel %vm1569, %v1613, 0.0
        %1634 = vadd.xlane.f32.xlu0 %v1633
        %v1635 = vpop.xlane.xlu0 %1634
        %v1636 = vsel %vm1569, %v1615, 0.0
        %1637 = vadd.xlane.f32.xlu0 %v1636
        %v1638 = vpop.xlane.xlu0 %1637
        %v1639 = vsel %vm1569, %v1617, 0.0
        %1640 = vadd.xlane.f32.xlu0 %v1639
        %v1641 = vpop.xlane.xlu0 %1640
        %v1642 = vrcp.pop %v1620
        %v1643 = vrcp.pop %v1623
        %v1644 = vrcp.pop %v1626
        %v1645 = vrcp.pop %v1629
        %v1646 = vrcp.pop %v1632
        %v1647 = vrcp.pop %v1635
        %v1648 = vrcp.pop %v1638
        %v1649 = vrcp.pop %v1641
        %v1650 = vmul.f32 %v1603, %v1642
        %v1651 = vmul.f32 %v1605, %v1643
        %v1652 = vmul.f32 %v1607, %v1644
        %v1653 = vmul.f32 %v1609, %v1645
        %v1654 = vmul.f32 %v1611, %v1646
        %v1655 = vmul.f32 %v1613, %v1647
        %v1656 = vmul.f32 %v1615, %v1648
        %v1657 = vmul.f32 %v1617, %v1649
        %v1658 = vpack.c.bf16 %v1651, %v1650
        %v1659 = vpack.c.bf16 %v1653, %v1652
        %v1660 = vpack.c.bf16 %v1655, %v1654
        %v1661 = vpack.c.bf16 %v1657, %v1656
        %v1663 = vsel %vm1569, %v1658, 0
        %1665 = vmatprep.subr.bf16.mxu0 0
        %1666 = vmatpush1.bf16.msra.mxu0 %v1362
        %1667 = vmatprep.subr.bf16.mxu0 0
        %1668 = vmatpush1.bf16.msra.mxu0 0
        %1669 = vmatprep.subr.bf16.mxu0 0
        %1670 = vmatpush1.bf16.msra.mxu0 0
        %1671 = vmatprep.subr.bf16.mxu0 0
        %1672 = vmatpush1.bf16.msra.mxu0 0
        %1673 = vmatprep.subr.bf16.mxu0 0
        %1674 = vmatpush1.bf16.msra.mxu0 0
        %1675 = vmatprep.subr.bf16.mxu0 0
        %1676 = vmatpush1.bf16.msra.mxu0 0
        %1677 = vmatprep.subr.bf16.mxu0 0
        %1678 = vmatpush1.bf16.msra.mxu0 0
        %1679 = vmatprep.subr.bf16.mxu0 0
        %1680 = vmatpush1.bf16.msra.mxu0 0
        %1681 = vmatprep.subr.bf16.mxu0 0
        %1682 = vmatpush1.bf16.msra.mxu0 0
        %1683 = vmatprep.subr.bf16.mxu0 0
        %1684 = vmatpush1.bf16.msra.mxu0 0
        %1685 = vmatprep.subr.bf16.mxu0 0
        %1686 = vmatpush1.bf16.msra.mxu0 0
        %1687 = vmatprep.subr.bf16.mxu0 0
        %1688 = vmatpush1.bf16.msra.mxu0 0
        %1689 = vmatprep.subr.bf16.mxu0 0
        %1690 = vmatpush1.bf16.msra.mxu0 0
        %1691 = vmatprep.subr.bf16.mxu0 0
        %1692 = vmatpush1.bf16.msra.mxu0 0
        %1693 = vmatprep.subr.bf16.mxu0 0
        %1694 = vmatpush1.bf16.msra.mxu0 0
        %1695 = vmatprep.subr.bf16.mxu0 0
        %1696 = vmatpush1.bf16.msra.mxu0 0
        %1697 = vmatprep.mubr.bf16.mxu0 0
        %1698 = vmatmul.mubr.bf16.gmra.mrb[0].mxu0 %v1663
        %v1699 = vpop.f32.mrb[0].mxu0
        %v1700 = vadd.f32 0.0, %v1699
        %v1701 = vpop.f32.mrb[0].mxu0
        %v1702 = vpop.f32.mrb[0].mxu0
        %v1703 = vadd.f32 0.0, %v1702
        %v1704 = vpop.f32.mrb[0].mxu0
        %1705 = vdwg.mxu0
        %v1707 = vsel %vm1569, %v1659, 0
        %1709 = vmatprep.subr.bf16.mxu0 0
        %1710 = vmatpush1.bf16.msra.mxu0 %v1366
        %1711 = vmatprep.subr.bf16.mxu0 0
        %1712 = vmatpush1.bf16.msra.mxu0 0
        %1713 = vmatprep.subr.bf16.mxu0 0
        %1714 = vmatpush1.bf16.msra.mxu0 0
        %1715 = vmatprep.subr.bf16.mxu0 0
        %1716 = vmatpush1.bf16.msra.mxu0 0
        %1717 = vmatprep.subr.bf16.mxu0 0
        %1718 = vmatpush1.bf16.msra.mxu0 0
        %1719 = vmatprep.subr.bf16.mxu0 0
        %1720 = vmatpush1.bf16.msra.mxu0 0
        %1721 = vmatprep.subr.bf16.mxu0 0
        %1722 = vmatpush1.bf16.msra.mxu0 0
        %1723 = vmatprep.subr.bf16.mxu0 0
        %1724 = vmatpush1.bf16.msra.mxu0 0
        %1725 = vmatprep.subr.bf16.mxu0 0
        %1726 = vmatpush1.bf16.msra.mxu0 0
        %1727 = vmatprep.subr.bf16.mxu0 0
        %1728 = vmatpush1.bf16.msra.mxu0 0
        %1729 = vmatprep.subr.bf16.mxu0 0
        %1730 = vmatpush1.bf16.msra.mxu0 0
        %1731 = vmatprep.subr.bf16.mxu0 0
        %1732 = vmatpush1.bf16.msra.mxu0 0
        %1733 = vmatprep.subr.bf16.mxu0 0
        %1734 = vmatpush1.bf16.msra.mxu0 0
        %1735 = vmatprep.subr.bf16.mxu0 0
        %1736 = vmatpush1.bf16.msra.mxu0 0
        %1737 = vmatprep.subr.bf16.mxu0 0
        %1738 = vmatpush1.bf16.msra.mxu0 0
        %1739 = vmatprep.subr.bf16.mxu0 0
        %1740 = vmatpush1.bf16.msra.mxu0 0
        %1741 = vmatprep.mubr.bf16.mxu0 0
        %1742 = vmatmul.mubr.bf16.gmra.mrb[0].mxu0 %v1707
        %v1743 = vpop.f32.mrb[0].mxu0
        %v1744 = vadd.f32 0.0, %v1743
        %v1745 = vpop.f32.mrb[0].mxu0
        %v1746 = vpop.f32.mrb[0].mxu0
        %v1747 = vadd.f32 0.0, %v1746
        %v1748 = vpop.f32.mrb[0].mxu0
        %1749 = vdwg.mxu0
        %v1751 = vsel %vm1569, %v1660, 0
        %1753 = vmatprep.subr.bf16.mxu0 0
        %1754 = vmatpush1.bf16.msra.mxu0 %v1370
        %1755 = vmatprep.subr.bf16.mxu0 0
        %1756 = vmatpush1.bf16.msra.mxu0 0
        %1757 = vmatprep.subr.bf16.mxu0 0
        %1758 = vmatpush1.bf16.msra.mxu0 0
        %1759 = vmatprep.subr.bf16.mxu0 0
        %1760 = vmatpush1.bf16.msra.mxu0 0
        %1761 = vmatprep.subr.bf16.mxu0 0
        %1762 = vmatpush1.bf16.msra.mxu0 0
        %1763 = vmatprep.subr.bf16.mxu0 0
        %1764 = vmatpush1.bf16.msra.mxu0 0
        %1765 = vmatprep.subr.bf16.mxu0 0
        %1766 = vmatpush1.bf16.msra.mxu0 0
        %1767 = vmatprep.subr.bf16.mxu0 0
        %1768 = vmatpush1.bf16.msra.mxu0 0
        %1769 = vmatprep.subr.bf16.mxu0 0
        %1770 = vmatpush1.bf16.msra.mxu0 0
        %1771 = vmatprep.subr.bf16.mxu0 0
        %1772 = vmatpush1.bf16.msra.mxu0 0
        %1773 = vmatprep.subr.bf16.mxu0 0
        %1774 = vmatpush1.bf16.msra.mxu0 0
        %1775 = vmatprep.subr.bf16.mxu0 0
        %1776 = vmatpush1.bf16.msra.mxu0 0
        %1777 = vmatprep.subr.bf16.mxu0 0
        %1778 = vmatpush1.bf16.msra.mxu0 0
        %1779 = vmatprep.subr.bf16.mxu0 0
        %1780 = vmatpush1.bf16.msra.mxu0 0
        %1781 = vmatprep.subr.bf16.mxu0 0
        %1782 = vmatpush1.bf16.msra.mxu0 0
        %1783 = vmatprep.subr.bf16.mxu0 0
        %1784 = vmatpush1.bf16.msra.mxu0 0
        %1785 = vmatprep.mubr.bf16.mxu0 0
        %1786 = vmatmul.mubr.bf16.gmra.mrb[0].mxu0 %v1751
        %v1787 = vpop.f32.mrb[0].mxu0
        %v1788 = vadd.f32 0.0, %v1787
        %v1789 = vpop.f32.mrb[0].mxu0
        %v1790 = vpop.f32.mrb[0].mxu0
        %v1791 = vadd.f32 0.0, %v1790
        %v1792 = vpop.f32.mrb[0].mxu0
        %1793 = vdwg.mxu0
        %v1795 = vsel %vm1569, %v1661, 0
        %1797 = vmatprep.subr.bf16.mxu0 0
        %1798 = vmatpush1.bf16.msra.mxu0 %v1374
        %1799 = vmatprep.subr.bf16.mxu0 0
        %1800 = vmatpush1.bf16.msra.mxu0 0
        %1801 = vmatprep.subr.bf16.mxu0 0
        %1802 = vmatpush1.bf16.msra.mxu0 0
        %1803 = vmatprep.subr.bf16.mxu0 0
        %1804 = vmatpush1.bf16.msra.mxu0 0
        %1805 = vmatprep.subr.bf16.mxu0 0
        %1806 = vmatpush1.bf16.msra.mxu0 0
        %1807 = vmatprep.subr.bf16.mxu0 0
        %1808 = vmatpush1.bf16.msra.mxu0 0
        %1809 = vmatprep.subr.bf16.mxu0 0
        %1810 = vmatpush1.bf16.msra.mxu0 0
        %1811 = vmatprep.subr.bf16.mxu0 0
        %1812 = vmatpush1.bf16.msra.mxu0 0
        %1813 = vmatprep.subr.bf16.mxu0 0
        %1814 = vmatpush1.bf16.msra.mxu0 0
        %1815 = vmatprep.subr.bf16.mxu0 0
        %1816 = vmatpush1.bf16.msra.mxu0 0
        %1817 = vmatprep.subr.bf16.mxu0 0
        %1818 = vmatpush1.bf16.msra.mxu0 0
        %1819 = vmatprep.subr.bf16.mxu0 0
        %1820 = vmatpush1.bf16.msra.mxu0 0
        %1821 = vmatprep.subr.bf16.mxu0 0
        %1822 = vmatpush1.bf16.msra.mxu0 0
        %1823 = vmatprep.subr.bf16.mxu0 0
        %1824 = vmatpush1.bf16.msra.mxu0 0
        %1825 = vmatprep.subr.bf16.mxu0 0
        %1826 = vmatpush1.bf16.msra.mxu0 0
        %1827 = vmatprep.subr.bf16.mxu0 0
        %1828 = vmatpush1.bf16.msra.mxu0 0
        %1829 = vmatprep.mubr.bf16.mxu0 0
        %1830 = vmatmul.mubr.bf16.gmra.mrb[0].mxu0 %v1795
        %v1831 = vpop.f32.mrb[0].mxu0
        %v1832 = vadd.f32 0.0, %v1831
        %v1833 = vpop.f32.mrb[0].mxu0
        %v1834 = vpop.f32.mrb[0].mxu0
        %v1835 = vadd.f32 0.0, %v1834
        %v1836 = vpop.f32.mrb[0].mxu0
        %1837 = vdwg.mxu0
        %v1838 = vcombine.low %v1700, %v1788
        %v1839 = vcombine.high %v1700, %v1788
        %v1841 = vunpack.c.l.s4 1983009808
        %v1842 = vunpack.c.0.s8 %v1841
        %v1843 = vlaneseq
        %v1844 = vshrl.u32 %v1843, 7
        %v1845 = vsub.s32 %v1842, %v1844
        %v1846 = vrot.slane %v1838, %v1845
        %v1848 = vunpack.c.l.s4 1983009808
        %v1849 = vunpack.c.0.s8 %v1848
        %v1850 = vlaneseq
        %v1851 = vshrl.u32 %v1850, 7
        %v1852 = vsub.s32 %v1849, %v1851
        %v1853 = vrot.slane %v1839, %v1852
        %v1854 = vcombine.low %v1744, %v1832
        %v1855 = vcombine.high %v1744, %v1832
        %v1857 = vunpack.c.l.s4 1983009808
        %v1858 = vunpack.c.0.s8 %v1857
        %v1859 = vlaneseq
        %v1860 = vshrl.u32 %v1859, 7
        %v1861 = vsub.s32 %v1858, %v1860
        %v1862 = vrot.slane %v1854, %v1861
        %v1864 = vunpack.c.l.s4 1983009808
        %v1865 = vunpack.c.0.s8 %v1864
        %v1866 = vlaneseq
        %v1867 = vshrl.u32 %v1866, 7
        %v1868 = vsub.s32 %v1865, %v1867
        %v1869 = vrot.slane %v1855, %v1868
        %v1870 = vcombine.low %v1846, %v1862
        %v1871 = vcombine.high %v1846, %v1862
        %v1873 = vunpack.c.l.s4 1934713408
        %v1874 = vunpack.c.0.s8 %v1873
        %v1875 = vlaneseq
        %v1876 = vshrl.u32 %v1875, 7
        %v1877 = vsub.s32 %v1874, %v1876
        %v1878 = vrot.slane %v1870, %v1877
        %v1880 = vunpack.c.l.s4 1934713408
        %v1881 = vunpack.c.0.s8 %v1880
        %v1882 = vlaneseq
        %v1883 = vshrl.u32 %v1882, 7
        %v1884 = vsub.s32 %v1881, %v1883
        %v1885 = vrot.slane %v1871, %v1884
        %v1886 = vcombine.low %v1853, %v1869
        %v1887 = vcombine.high %v1853, %v1869
        %v1889 = vunpack.c.l.s4 1934713408
        %v1890 = vunpack.c.0.s8 %v1889
        %v1891 = vlaneseq
        %v1892 = vshrl.u32 %v1891, 7
        %v1893 = vsub.s32 %v1890, %v1892
        %v1894 = vrot.slane %v1886, %v1893
        %v1896 = vunpack.c.l.s4 1934713408
        %v1897 = vunpack.c.0.s8 %v1896
        %v1898 = vlaneseq
        %v1899 = vshrl.u32 %v1898, 7
        %v1900 = vsub.s32 %v1897, %v1899
        %v1901 = vrot.slane %v1887, %v1900
        %v1902 = vcombine.high %v1878, 0.0
        %v1903 = vcombine.high %v1885, 0.0
        %v1904 = vcombine.high %v1894, 0.0
        %v1905 = vcombine.high %v1901, 0.0
        %v1906 = vcombine.low %v1703, %v1791
        %v1907 = vcombine.high %v1703, %v1791
        %v1909 = vunpack.c.l.s4 1983009808
        %v1910 = vunpack.c.0.s8 %v1909
        %v1911 = vlaneseq
        %v1912 = vshrl.u32 %v1911, 7
        %v1913 = vsub.s32 %v1910, %v1912
        %v1914 = vrot.slane %v1906, %v1913
        %v1916 = vunpack.c.l.s4 1983009808
        %v1917 = vunpack.c.0.s8 %v1916
        %v1918 = vlaneseq
        %v1919 = vshrl.u32 %v1918, 7
        %v1920 = vsub.s32 %v1917, %v1919
        %v1921 = vrot.slane %v1907, %v1920
        %v1922 = vcombine.low %v1747, %v1835
        %v1923 = vcombine.high %v1747, %v1835
        %v1925 = vunpack.c.l.s4 1983009808
        %v1926 = vunpack.c.0.s8 %v1925
        %v1927 = vlaneseq
        %v1928 = vshrl.u32 %v1927, 7
        %v1929 = vsub.s32 %v1926, %v1928
        %v1930 = vrot.slane %v1922, %v1929
        %v1932 = vunpack.c.l.s4 1983009808
        %v1933 = vunpack.c.0.s8 %v1932
        %v1934 = vlaneseq
        %v1935 = vshrl.u32 %v1934, 7
        %v1936 = vsub.s32 %v1933, %v1935
        %v1937 = vrot.slane %v1923, %v1936
        %v1938 = vcombine.low %v1914, %v1930
        %v1939 = vcombine.high %v1914, %v1930
        %v1941 = vunpack.c.l.s4 1934713408
        %v1942 = vunpack.c.0.s8 %v1941
        %v1943 = vlaneseq
        %v1944 = vshrl.u32 %v1943, 7
        %v1945 = vsub.s32 %v1942, %v1944
        %v1946 = vrot.slane %v1938, %v1945
        %v1948 = vunpack.c.l.s4 1934713408
        %v1949 = vunpack.c.0.s8 %v1948
        %v1950 = vlaneseq
        %v1951 = vshrl.u32 %v1950, 7
        %v1952 = vsub.s32 %v1949, %v1951
        %v1953 = vrot.slane %v1939, %v1952
        %v1954 = vcombine.low %v1921, %v1937
        %v1955 = vcombine.high %v1921, %v1937
        %v1957 = vunpack.c.l.s4 1934713408
        %v1958 = vunpack.c.0.s8 %v1957
        %v1959 = vlaneseq
        %v1960 = vshrl.u32 %v1959, 7
        %v1961 = vsub.s32 %v1958, %v1960
        %v1962 = vrot.slane %v1954, %v1961
        %v1964 = vunpack.c.l.s4 1934713408
        %v1965 = vunpack.c.0.s8 %v1964
        %v1966 = vlaneseq
        %v1967 = vshrl.u32 %v1966, 7
        %v1968 = vsub.s32 %v1965, %v1967
        %v1969 = vrot.slane %v1955, %v1968
        %v1970 = vcombine.high %v1946, 0.0
        %v1971 = vcombine.high %v1953, 0.0
        %v1972 = vcombine.high %v1962, 0.0
        %v1973 = vcombine.high %v1969, 0.0
        %v1974 = vcombine.low %v1878, %v1885
        %v1976 = vunpack.c.l.s4 1983009808
        %v1977 = vunpack.c.0.s8 %v1976
        %v1978 = vlaneseq
        %v1979 = vshrl.u32 %v1978, 7
        %v1980 = vsub.s32 %v1977, %v1979
        %v1981 = vrot.slane %v1974, %v1980
        %v1982 = vcombine.low %v1902, %v1903
        %v1984 = vunpack.c.l.s4 1983009808
        %v1985 = vunpack.c.0.s8 %v1984
        %v1986 = vlaneseq
        %v1987 = vshrl.u32 %v1986, 7
        %v1988 = vsub.s32 %v1985, %v1987
        %v1989 = vrot.slane %v1982, %v1988
        %v1990 = vcombine.low %v1894, %v1901
        %v1992 = vunpack.c.l.s4 1983009808
        %v1993 = vunpack.c.0.s8 %v1992
        %v1994 = vlaneseq
        %v1995 = vshrl.u32 %v1994, 7
        %v1996 = vsub.s32 %v1993, %v1995
        %v1997 = vrot.slane %v1990, %v1996
        %v1998 = vcombine.low %v1904, %v1905
        %v2000 = vunpack.c.l.s4 1983009808
        %v2001 = vunpack.c.0.s8 %v2000
        %v2002 = vlaneseq
        %v2003 = vshrl.u32 %v2002, 7
        %v2004 = vsub.s32 %v2001, %v2003
        %v2005 = vrot.slane %v1998, %v2004
        %v2006 = vcombine.low %v1981, %v1989
        %v2007 = vcombine.high %v1981, %v1989
        %v2009 = vunpack.c.l.s4 1934713408
        %v2010 = vunpack.c.0.s8 %v2009
        %v2011 = vlaneseq
        %v2012 = vshrl.u32 %v2011, 7
        %v2013 = vsub.s32 %v2010, %v2012
        %v2014 = vrot.slane %v2006, %v2013
        %v2016 = vunpack.c.l.s4 1934713408
        %v2017 = vunpack.c.0.s8 %v2016
        %v2018 = vlaneseq
        %v2019 = vshrl.u32 %v2018, 7
        %v2020 = vsub.s32 %v2017, %v2019
        %v2021 = vrot.slane %v2007, %v2020
        %v2022 = vcombine.low %v1997, %v2005
        %v2023 = vcombine.high %v1997, %v2005
        %v2025 = vunpack.c.l.s4 1934713408
        %v2026 = vunpack.c.0.s8 %v2025
        %v2027 = vlaneseq
        %v2028 = vshrl.u32 %v2027, 7
        %v2029 = vsub.s32 %v2026, %v2028
        %v2030 = vrot.slane %v2022, %v2029
        %v2032 = vunpack.c.l.s4 1934713408
        %v2033 = vunpack.c.0.s8 %v2032
        %v2034 = vlaneseq
        %v2035 = vshrl.u32 %v2034, 7
        %v2036 = vsub.s32 %v2033, %v2035
        %v2037 = vrot.slane %v2023, %v2036
        %v2038 = vcombine.low %v2014, %v2030
        %v2039 = vcombine.high %v2014, %v2030
        %v2040 = vcombine.low %v2021, %v2037
        %v2041 = vcombine.high %v2021, %v2037
        %v2042 = vcombine.low %v1946, %v1953
        %v2044 = vunpack.c.l.s4 1983009808
        %v2045 = vunpack.c.0.s8 %v2044
        %v2046 = vlaneseq
        %v2047 = vshrl.u32 %v2046, 7
        %v2048 = vsub.s32 %v2045, %v2047
        %v2049 = vrot.slane %v2042, %v2048
        %v2050 = vcombine.low %v1970, %v1971
        %v2052 = vunpack.c.l.s4 1983009808
        %v2053 = vunpack.c.0.s8 %v2052
        %v2054 = vlaneseq
        %v2055 = vshrl.u32 %v2054, 7
        %v2056 = vsub.s32 %v2053, %v2055
        %v2057 = vrot.slane %v2050, %v2056
        %v2058 = vcombine.low %v1962, %v1969
        %v2060 = vunpack.c.l.s4 1983009808
        %v2061 = vunpack.c.0.s8 %v2060
        %v2062 = vlaneseq
        %v2063 = vshrl.u32 %v2062, 7
        %v2064 = vsub.s32 %v2061, %v2063
        %v2065 = vrot.slane %v2058, %v2064
        %v2066 = vcombine.low %v1972, %v1973
        %v2068 = vunpack.c.l.s4 1983009808
        %v2069 = vunpack.c.0.s8 %v2068
        %v2070 = vlaneseq
        %v2071 = vshrl.u32 %v2070, 7
        %v2072 = vsub.s32 %v2069, %v2071
        %v2073 = vrot.slane %v2066, %v2072
        %v2074 = vcombine.low %v2049, %v2057
        %v2075 = vcombine.high %v2049, %v2057
        %v2077 = vunpack.c.l.s4 1934713408
        %v2078 = vunpack.c.0.s8 %v2077
        %v2079 = vlaneseq
        %v2080 = vshrl.u32 %v2079, 7
        %v2081 = vsub.s32 %v2078, %v2080
        %v2082 = vrot.slane %v2074, %v2081
        %v2084 = vunpack.c.l.s4 1934713408
        %v2085 = vunpack.c.0.s8 %v2084
        %v2086 = vlaneseq
        %v2087 = vshrl.u32 %v2086, 7
        %v2088 = vsub.s32 %v2085, %v2087
        %v2089 = vrot.slane %v2075, %v2088
        %v2090 = vcombine.low %v2065, %v2073
        %v2091 = vcombine.high %v2065, %v2073
        %v2093 = vunpack.c.l.s4 1934713408
        %v2094 = vunpack.c.0.s8 %v2093
        %v2095 = vlaneseq
        %v2096 = vshrl.u32 %v2095, 7
        %v2097 = vsub.s32 %v2094, %v2096
        %v2098 = vrot.slane %v2090, %v2097
        %v2100 = vunpack.c.l.s4 1934713408
        %v2101 = vunpack.c.0.s8 %v2100
        %v2102 = vlaneseq
        %v2103 = vshrl.u32 %v2102, 7
        %v2104 = vsub.s32 %v2101, %v2103
        %v2105 = vrot.slane %v2091, %v2104
        %v2106 = vcombine.low %v2082, %v2098
        %v2107 = vcombine.high %v2082, %v2098
        %v2108 = vcombine.low %v2089, %v2105
        %v2109 = vcombine.high %v2089, %v2105
        %2112 = vrot.lane.b32.xlu0 %v2039, 8
        %v2113 = vpop.permute.xlu0 %2112
        %2114 = vrot.lane.b32.xlu0 %v2107, 8
        %v2115 = vpop.permute.xlu0 %2114
        %2120 = vrot.lane.b32.xlu0 %v2040, 16
        %v2121 = vpop.permute.xlu0 %2120
        %2122 = vrot.lane.b32.xlu0 %v2108, 16
        %v2123 = vpop.permute.xlu0 %2122
        %2128 = vrot.lane.b32.xlu0 %v2041, 24
        %v2129 = vpop.permute.xlu0 %2128
        %2130 = vrot.lane.b32.xlu0 %v2109, 24
        %v2131 = vpop.permute.xlu0 %2130
        %v2134 = vsel %vm1380, %v2038, %v2113
        %v2135 = vsel %vm1380, %v2106, %v2115
        %v2136 = vsel %vm1569, %v2134, %v2121
        %v2137 = vsel %vm1569, %v2135, %v2123
        %vm2138 = vcmask 195584
        %v2139 = vsel %vm2138, %v2136, %v2129
        %v2140 = vsel %vm2138, %v2137, %v2131
        %v2141 = vpack.c.bf16 %v2140, %v2139
        %v2142 = vld [vmem:[%s5] sm:$0xf]
        %v2143 = vld [vmem:[%s5 + $0x4] sm:$0xf]
        %v2144 = vld [vmem:[%s5 + $0x8] sm:$0xf]
        %v2145 = vld [vmem:[%s5 + $0xc] sm:$0xf]
        %v2146 = vld [vmem:[%s6] sm:$0x1]
        %v2148 = vlaneseq
        %v2149 = vshrl.u32 %v2148, 7
        %v2150 = vsub.s32 0, %v2149
        %v2151 = vrot.slane %v2146, %v2150
        %v2157 = vunpack.c.l.b16 %v2142
        %v2158 = vunpack.c.l.b16 %v2143
        %v2159 = vunpack.c.l.b16 %v2144
        %v2160 = vunpack.c.l.b16 %v2145
        %v2161 = vpack.c.b16 %v2158, %v2157
        %v2162 = vpack.c.b16 %v2160, %v2159
        %v2166 = vsel %vm444, %v2141, 0
        %2168 = vmatprep.subr.bf16.mxu0 0
        %2169 = vmatpush1.bf16.msra.mxu0 %v2161
        %2170 = vmatprep.subr.bf16.mxu0 0
        %2171 = vmatpush1.bf16.msra.mxu0 %v2162
        %2172 = vmatprep.subr.bf16.mxu0 0
        %2173 = vmatpush1.bf16.msra.mxu0 0
        %2174 = vmatprep.subr.bf16.mxu0 0
        %2175 = vmatpush1.bf16.msra.mxu0 0
        %2176 = vmatprep.subr.bf16.mxu0 0
        %2177 = vmatpush1.bf16.msra.mxu0 0
        %2178 = vmatprep.subr.bf16.mxu0 0
        %2179 = vmatpush1.bf16.msra.mxu0 0
        %2180 = vmatprep.subr.bf16.mxu0 0
        %2181 = vmatpush1.bf16.msra.mxu0 0
        %2182 = vmatprep.subr.bf16.mxu0 0
        %2183 = vmatpush1.bf16.msra.mxu0 0
        %2184 = vmatprep.subr.bf16.mxu0 0
        %2185 = vmatpush1.bf16.msra.mxu0 0
        %2186 = vmatprep.subr.bf16.mxu0 0
        %2187 = vmatpush1.bf16.msra.mxu0 0
        %2188 = vmatprep.subr.bf16.mxu0 0
        %2189 = vmatpush1.bf16.msra.mxu0 0
        %2190 = vmatprep.subr.bf16.mxu0 0
        %2191 = vmatpush1.bf16.msra.mxu0 0
        %2192 = vmatprep.subr.bf16.mxu0 0
        %2193 = vmatpush1.bf16.msra.mxu0 0
        %2194 = vmatprep.subr.bf16.mxu0 0
        %2195 = vmatpush1.bf16.msra.mxu0 0
        %2196 = vmatprep.subr.bf16.mxu0 0
        %2197 = vmatpush1.bf16.msra.mxu0 0
        %2198 = vmatprep.subr.bf16.mxu0 0
        %2199 = vmatpush1.bf16.msra.mxu0 0
        %2200 = vmatprep.mubr.bf16.mxu0 0
        %2201 = vmatmul.mubr.bf16.gmra.mrb[0].mxu0 %v2166
        %v2202 = vpop.f32.mrb[0].mxu0
        %v2203 = vadd.f32 %v2151, %v2202
        %v2204 = vpop.f32.mrb[0].mxu0
        %v2205 = vpop.f32.mrb[0].mxu0
        %v2206 = vadd.f32 %v2151, %v2205
        %v2207 = vpop.f32.mrb[0].mxu0
        %2208 = vdwg.mxu0
        %v2209 = vadd.f32 %v440, %v2203
        %v2210 = vadd.f32 %v441, %v2206
        %v2211 = vld [vmem:[%s7] sm:$0x1]
        %v2212 = vld [vmem:[%s8] sm:$0x1]
        %v2213 = vsel %vm444, %v2209, 0.0
        %2214 = vadd.xlane.f32.xlu0 %v2213
        %v2215 = vpop.xlane.xlu0 %2214
        %v2216 = vsel %vm444, %v2210, 0.0
        %2217 = vadd.xlane.f32.xlu0 %v2216
        %v2218 = vpop.xlane.xlu0 %2217
        %v2219 = vmul.f32 %v2215, %v451
        %v2220 = vmul.f32 %v2218, %v451
        %v2221 = vmul.f32 %v2209, %v2209
        %v2222 = vmul.f32 %v2210, %v2210
        %v2223 = vsel %vm444, %v2221, 0.0
        %2224 = vadd.xlane.f32.xlu0 %v2223
        %v2225 = vpop.xlane.xlu0 %2224
        %v2226 = vsel %vm444, %v2222, 0.0
        %2227 = vadd.xlane.f32.xlu0 %v2226
        %v2228 = vpop.xlane.xlu0 %2227
        %v2229 = vmul.f32 %v2225, %v451
        %v2230 = vmul.f32 %v2228, %v451
        %v2231 = vmul.f32 %v2219, %v2219
        %v2232 = vmul.f32 %v2220, %v2220
        %v2233 = vsub.f32 %v2229, %v2231
        %v2234 = vsub.f32 %v2230, %v2232
        %v2235 = vmax.f32 %v2233, 0.0
        %v2236 = vmax.f32 %v2234, 0.0
        %v2237 = vsub.f32 %v2209, %v2219
        %v2238 = vsub.f32 %v2210, %v2220
        %v2239 = vadd.f32 %v2235, 1e-05
        %v2240 = vadd.f32 %v2236, 1e-05
        %v2241 = vrsqrt.pop %v2239
        %v2242 = vrsqrt.pop %v2240
        %v2243 = vmul.f32 %v2237, %v2241
        %v2244 = vmul.f32 %v2238, %v2242
        %v2246 = vlaneseq
        %v2247 = vshrl.u32 %v2246, 7
        %v2248 = vsub.s32 0, %v2247
        %v2249 = vrot.slane %v2211, %v2248
        %v2251 = vmul.f32 %v2243, %v2249
        %v2252 = vmul.f32 %v2244, %v2249
        %v2254 = vlaneseq
        %v2255 = vshrl.u32 %v2254, 7
        %v2256 = vsub.s32 0, %v2255
        %v2257 = vrot.slane %v2212, %v2256
        %v2259 = vadd.f32 %v2251, %v2257
        %v2260 = vadd.f32 %v2252, %v2257
        %v2261 = vpack.c.bf16 %v2260, %v2259
        %v2262 = vld [vmem:[%s9] sm:$0xf]
        %v2263 = vld [vmem:[%s9 + $0x4] sm:$0xf]
        %v2264 = vld [vmem:[%s9 + $0x8] sm:$0xf]
        %v2265 = vld [vmem:[%s9 + $0xc] sm:$0xf]
        %v2266 = vld [vmem:[%s10] sm:$0x1]
        %v2268 = vlaneseq
        %v2269 = vshrl.u32 %v2268, 7
        %v2270 = vsub.s32 0, %v2269
        %v2271 = vrot.slane %v2266, %v2270
        %v2277 = vunpack.c.l.b16 %v2262
        %v2278 = vunpack.c.l.b16 %v2263
        %v2279 = vunpack.c.l.b16 %v2264
        %v2280 = vunpack.c.l.b16 %v2265
        %v2281 = vpack.c.b16 %v2278, %v2277
        %v2282 = vpack.c.b16 %v2280, %v2279
        %v2286 = vsel %vm444, %v2261, 0
        %2288 = vmatprep.subr.bf16.mxu0 0
        %2289 = vmatpush1.bf16.msra.mxu0 %v2281
        %2290 = vmatprep.subr.bf16.mxu0 0
        %2291 = vmatpush1.bf16.msra.mxu0 %v2282
        %2292 = vmatprep.subr.bf16.mxu0 0
        %2293 = vmatpush1.bf16.msra.mxu0 0
        %2294 = vmatprep.subr.bf16.mxu0 0
        %2295 = vmatpush1.bf16.msra.mxu0 0
        %2296 = vmatprep.subr.bf16.mxu0 0
        %2297 = vmatpush1.bf16.msra.mxu0 0
        %2298 = vmatprep.subr.bf16.mxu0 0
        %2299 = vmatpush1.bf16.msra.mxu0 0
        %2300 = vmatprep.subr.bf16.mxu0 0
        %2301 = vmatpush1.bf16.msra.mxu0 0
        %2302 = vmatprep.subr.bf16.mxu0 0
        %2303 = vmatpush1.bf16.msra.mxu0 0
        %2304 = vmatprep.subr.bf16.mxu0 0
        %2305 = vmatpush1.bf16.msra.mxu0 0
        %2306 = vmatprep.subr.bf16.mxu0 0
        %2307 = vmatpush1.bf16.msra.mxu0 0
        %2308 = vmatprep.subr.bf16.mxu0 0
        %2309 = vmatpush1.bf16.msra.mxu0 0
        %2310 = vmatprep.subr.bf16.mxu0 0
        %2311 = vmatpush1.bf16.msra.mxu0 0
        %2312 = vmatprep.subr.bf16.mxu0 0
        %2313 = vmatpush1.bf16.msra.mxu0 0
        %2314 = vmatprep.subr.bf16.mxu0 0
        %2315 = vmatpush1.bf16.msra.mxu0 0
        %2316 = vmatprep.subr.bf16.mxu0 0
        %2317 = vmatpush1.bf16.msra.mxu0 0
        %2318 = vmatprep.subr.bf16.mxu0 0
        %2319 = vmatpush1.bf16.msra.mxu0 0
        %2320 = vmatprep.mubr.bf16.mxu0 0
        %2321 = vmatmul.mubr.bf16.gmra.mrb[0].mxu0 %v2286
        %v2322 = vpop.f32.mrb[0].mxu0
        %v2323 = vadd.f32 %v2271, %v2322
        %v2324 = vpop.f32.mrb[0].mxu0
        %v2325 = vpop.f32.mrb[0].mxu0
        %v2326 = vadd.f32 %v2271, %v2325
        %v2327 = vpop.f32.mrb[0].mxu0
        %2328 = vdwg.mxu0
        %v2329 = vmul.f32 %v2323, %v2323
        %v2330 = vmul.f32 %v2326, %v2326
        %v2331 = vmul.f32 %v2323, %v2329
        %v2332 = vmul.f32 %v2326, %v2330
        %v2333 = vmul.f32 %v2331, 0.044715
        %v2334 = vmul.f32 %v2332, 0.044715
        %v2335 = vadd.f32 %v2323, %v2333
        %v2336 = vadd.f32 %v2326, %v2334
        %v2337 = vmul.f32 %v2335, 0.7978846
        %v2338 = vmul.f32 %v2336, 0.7978846
        %v2339 = vtanh.pop %v2337
        %v2340 = vtanh.pop %v2338
        %v2341 = vadd.f32 %v2339, 1.0
        %v2342 = vadd.f32 %v2340, 1.0
        %v2343 = vmul.f32 %v2341, 0.5
        %v2344 = vmul.f32 %v2342, 0.5
        %v2345 = vmul.f32 %v2323, %v2343
        %v2346 = vmul.f32 %v2326, %v2344
        %v2347 = vpack.c.bf16 %v2346, %v2345
        %v2348 = vld [vmem:[%s11] sm:$0xf]
        %v2349 = vld [vmem:[%s11 + $0x4] sm:$0xf]
        %v2350 = vld [vmem:[%s11 + $0x8] sm:$0xf]
        %v2351 = vld [vmem:[%s11 + $0xc] sm:$0xf]
        %v2352 = vld [vmem:[%s11 + $0x10] sm:$0xf]
        %v2353 = vld [vmem:[%s11 + $0x14] sm:$0xf]
        %v2354 = vld [vmem:[%s11 + $0x18] sm:$0xf]
        %v2355 = vld [vmem:[%s11 + $0x1c] sm:$0xf]
        %v2356 = vld [vmem:[%s11 + $0x20] sm:$0xf]
        %v2357 = vld [vmem:[%s11 + $0x24] sm:$0xf]
        %v2358 = vld [vmem:[%s11 + $0x28] sm:$0xf]
        %v2359 = vld [vmem:[%s11 + $0x2c] sm:$0xf]
        %v2360 = vld [vmem:[%s11 + $0x30] sm:$0xf]
        %v2361 = vld [vmem:[%s11 + $0x34] sm:$0xf]
        %v2362 = vld [vmem:[%s11 + $0x38] sm:$0xf]
        %v2363 = vld [vmem:[%s11 + $0x3c] sm:$0xf]
        %v2364 = vld [vmem:[%s12] sm:$0x1]
        %v2366 = vlaneseq
        %v2367 = vshrl.u32 %v2366, 7
        %v2368 = vsub.s32 0, %v2367
        %v2369 = vrot.slane %v2364, %v2368
        %v2387 = vunpack.c.l.b16 %v2348
        %v2388 = vunpack.c.l.b16 %v2349
        %v2389 = vunpack.c.l.b16 %v2350
        %v2390 = vunpack.c.l.b16 %v2351
        %v2391 = vunpack.c.l.b16 %v2352
        %v2392 = vunpack.c.l.b16 %v2353
        %v2393 = vunpack.c.l.b16 %v2354
        %v2394 = vunpack.c.l.b16 %v2355
        %v2395 = vunpack.c.l.b16 %v2356
        %v2396 = vunpack.c.l.b16 %v2357
        %v2397 = vunpack.c.l.b16 %v2358
        %v2398 = vunpack.c.l.b16 %v2359
        %v2399 = vunpack.c.l.b16 %v2360
        %v2400 = vunpack.c.l.b16 %v2361
        %v2401 = vunpack.c.l.b16 %v2362
        %v2402 = vunpack.c.l.b16 %v2363
        %v2403 = vpack.c.b16 %v2388, %v2387
        %v2404 = vpack.c.b16 %v2390, %v2389
        %v2405 = vpack.c.b16 %v2392, %v2391
        %v2406 = vpack.c.b16 %v2394, %v2393
        %v2407 = vpack.c.b16 %v2396, %v2395
        %v2408 = vpack.c.b16 %v2398, %v2397
        %v2409 = vpack.c.b16 %v2400, %v2399
        %v2410 = vpack.c.b16 %v2402, %v2401
        %2419 = vmatprep.subr.bf16.mxu0 0
        %2420 = vmatpush1.bf16.msra.mxu0 %v2403
        %2421 = vmatprep.subr.bf16.mxu0 0
        %2422 = vmatpush1.bf16.msra.mxu0 %v2404
        %2423 = vmatprep.subr.bf16.mxu0 0
        %2424 = vmatpush1.bf16.msra.mxu0 %v2405
        %2425 = vmatprep.subr.bf16.mxu0 0
        %2426 = vmatpush1.bf16.msra.mxu0 %v2406
        %2427 = vmatprep.subr.bf16.mxu0 0
        %2428 = vmatpush1.bf16.msra.mxu0 %v2407
        %2429 = vmatprep.subr.bf16.mxu0 0
        %2430 = vmatpush1.bf16.msra.mxu0 %v2408
        %2431 = vmatprep.subr.bf16.mxu0 0
        %2432 = vmatpush1.bf16.msra.mxu0 %v2409
        %2433 = vmatprep.subr.bf16.mxu0 0
        %2434 = vmatpush1.bf16.msra.mxu0 %v2410
        %2435 = vmatprep.subr.bf16.mxu0 0
        %2436 = vmatpush1.bf16.msra.mxu0 0
        %2437 = vmatprep.subr.bf16.mxu0 0
        %2438 = vmatpush1.bf16.msra.mxu0 0
        %2439 = vmatprep.subr.bf16.mxu0 0
        %2440 = vmatpush1.bf16.msra.mxu0 0
        %2441 = vmatprep.subr.bf16.mxu0 0
        %2442 = vmatpush1.bf16.msra.mxu0 0
        %2443 = vmatprep.subr.bf16.mxu0 0
        %2444 = vmatpush1.bf16.msra.mxu0 0
        %2445 = vmatprep.subr.bf16.mxu0 0
        %2446 = vmatpush1.bf16.msra.mxu0 0
        %2447 = vmatprep.subr.bf16.mxu0 0
        %2448 = vmatpush1.bf16.msra.mxu0 0
        %2449 = vmatprep.subr.bf16.mxu0 0
        %2450 = vmatpush1.bf16.msra.mxu0 0
        %2451 = vmatprep.mubr.bf16.mxu0 0
        %2452 = vmatmul.mubr.bf16.gmra.mrb[0].mxu0 %v2347
        %v2453 = vpop.f32.mrb[0].mxu0
        %v2454 = vadd.f32 %v2369, %v2453
        %v2455 = vpop.f32.mrb[0].mxu0
        %v2456 = vpop.f32.mrb[0].mxu0
        %v2457 = vadd.f32 %v2369, %v2456
        %v2458 = vpop.f32.mrb[0].mxu0
        %2459 = vdwg.mxu0
        %v2460 = vadd.f32 %v2209, %v2454
        %v2461 = vadd.f32 %v2210, %v2457
        %2462 = vst.msk [vmem:[%s433] sm:$0xff] %vm444, %v2460
        %2463 = vst.msk [vmem:[%s433 + $0x8] sm:$0xff] %vm444, %v2461
        %s2464 = sand.u32 %s313, 1
        %s2465 = scalar_lea.sflag [#allocation3], %s2464
        %s2466 = sand.u32 %s313, 1
        %s2467 = smul.addr %s2466, 16
        %s2468 = scalar_lea.vmem [#allocation2], %s2467
        // Predicated region
        $region73: #{tpu_custom_call.1} parent=71 // pred_check
          %p2469 = pneg %p323
        $region74: #{tpu_custom_call.1} parent=71 // pred_check_branch
          %2471 = sbr.rel (%p2469) target = $region76
        $region75: #{tpu_custom_call.1} parent=71 // pred_region
          %s2473 = ssub.s32 256, 256
          %2474 = vsyncadd %s2465, %s2473
          %s2475 = smul.addr %s27, 2
          %s2476 = smul.addr %s2475, 128
          %s2477 = scalar_lea.hbm %s13, %s2476
          %s2478 = sshll.u32 %s2468, 4
          %s2479 = int_to_ptr.vmem [resolvable:$true] %s2478
          %2484 = dma.vmem_to_hbm [thread:$0]  %s2479, 256, %s2477, %s2465, 128, 128, 8
        $region76: #{tpu_custom_call.1} parent=71 // pred_fallthru
          _
      $region72: #{tpu_custom_call.1} parent=5 // pred_fallthru
        _
      %p2485 = scmp.le.s32.totalorder 2, %s22
      // Predicated region
      $region77: #{tpu_custom_call.1} parent=5 // pred_check
        %p2486 = pneg %p2485
      $region78: #{tpu_custom_call.1} parent=5 // pred_check_branch
        %2488 = sbr.rel (%p2486) target = $region80
      $region79: #{tpu_custom_call.1} parent=5 // pred_region
        %s2489 = ssub.s32 %s22, 2
        // Predicated region
        $region81: #{tpu_custom_call.1} parent=79 // pred_check
          %p2490 = pneg %p329
        $region82: #{tpu_custom_call.1} parent=79 // pred_check_branch
          %2492 = sbr.rel (%p2490) target = $region84
        $region83: #{tpu_custom_call.1} parent=79 // pred_region
          %s2493 = sand.u32 %s314, 1
          %s2494 = scalar_lea.sflag [#allocation3], %s2493
          %s2495 = sand.u32 %s314, 1
          %s2496 = smul.addr %s2495, 16
          %s2497 = scalar_lea.vmem [#allocation2], %s2496
          %2498 = dma.done %s2494, 256
        $region84: #{tpu_custom_call.1} parent=79 // pred_fallthru
          _
      $region80: #{tpu_custom_call.1} parent=5 // pred_fallthru
        _
    $region6: #{tpu_custom_call.1} parent=1 // loop_footer
      %s26 = sadd.s32 1, %s22
    $region7: #{tpu_custom_call.1} parent=1 // loop_footer_branch
      %21 = sbr.rel target = $region3
    $region8: #{tpu_custom_call.1} parent=1 // loop_exit
      _
    %2499 = vsyncpa [#allocation3], 1
    %s2500 = scalar_lea.sflag [#allocation3], 1
    %2501 = vsyncpa %s2500, 1

// kernel: tpu_custom_call.1
$region0: #{tpu_custom_call.1}
  #allocation0 [shape = 'u32[]', space=smem, size = 0x4, offset = 0x4, fixed_abs, tag = 'smem constant byte address 0x4 - core index']
  #allocation1 [shape = 'u32[144,128]{1,0:T(1,128)}', space=vmem, size = 0x12000, scoped, tag = 'internal scratch']
  %s0 = inlined_call_operand.vmem [shape: f32[2,16,32], index: 0, kind: input, shape index: {}]
  %s1 = inlined_call_operand.vmem [shape: f32[1,32], index: 1, kind: input, shape index: {}]
  %s2 = inlined_call_operand.vmem [shape: f32[1,32], index: 2, kind: input, shape index: {}]
  %s3 = inlined_call_operand.vmem [shape: bf16[32,96], index: 3, kind: input, shape index: {}]
  %s4 = inlined_call_operand.vmem [shape: f32[1,96], index: 4, kind: input, shape index: {}]
  %s5 = inlined_call_operand.vmem [shape: bf16[32,32], index: 5, kind: input, shape index: {}]
  %s6 = inlined_call_operand.vmem [shape: f32[1,32], index: 6, kind: input, shape index: {}]
  %s7 = inlined_call_operand.vmem [shape: f32[1,32], index: 7, kind: input, shape index: {}]
  %s8 = inlined_call_operand.vmem [shape: f32[1,32], index: 8, kind: input, shape index: {}]
  %s9 = inlined_call_operand.vmem [shape: bf16[32,128], index: 9, kind: input, shape index: {}]
  %s10 = inlined_call_operand.vmem [shape: f32[1,128], index: 10, kind: input, shape index: {}]
  %s11 = inlined_call_operand.vmem [shape: bf16[128,32], index: 11, kind: input, shape index: {}]
  %s12 = inlined_call_operand.vmem [shape: f32[1,32], index: 12, kind: input, shape index: {}]
  %s13 = inlined_call_operand.hbm [shape: f32[2,16,32], index: 13, kind: output, shape index: {}]
  %s14 = sld [smem:[#allocation0]]
  $region85: #{tpu_custom_call.1} parent=0
    _
  %s16 = ssub.s32 1, %s14
  %s17 = scalar_select 0, %s16, %s14
  $region1: #{tpu_custom_call.1} parent=0
    #allocation2 [shape = 'u8[16384]{0}', space=vmem, size = 0x4000, scoped, tag = 'output window, operand 0']
    #allocation3 [shape = 's32[2]{0}', space=sflag, size = 0x8, scoped, tag = 'scoped memory for tpu_custom_call.1']
    %18 = vsyncpa [#allocation3], 0
    %s19 = scalar_lea.sflag [#allocation3], 1
    %20 = vsyncpa %s19, 0
    loop: start=0, step=1, limit=4
    $region2: #{tpu_custom_call.1} parent=1 // loop_pre_header
      _
    $region3: #{tpu_custom_call.1} parent=1 // loop_header
      %s22 = sphi 0, %s26
      %p23 = scmp.ge.s32.totalorder %s22, 4
      %s32 = sphi 0, %s34
      %s35 = sphi 0, %s32
      %s36 = sphi 0, %s35
      %s52 = sphi 0, %s36
      %s56 = sphi 0, %s56
      %s58 = sphi 0, %s56
      %s59 = sphi 0, %s58
      %s73 = sphi 0, %s59
      %s77 = sphi 0, %s77
      %s79 = sphi 0, %s77
      %s80 = sphi 0, %s79
      %s94 = sphi 0, %s80
      %s98 = sphi 0, %s98
      %s100 = sphi 0, %s98
      %s101 = sphi 0, %s100
      %s115 = sphi 0, %s101
      %s119 = sphi 0, %s119
      %s121 = sphi 0, %s119
      %s122 = sphi 0, %s121
      %s136 = sphi 0, %s122
      %s140 = sphi 0, %s140
      %s142 = sphi 0, %s140
      %s143 = sphi 0, %s142
      %s157 = sphi 0, %s143
      %s161 = sphi 0, %s161
      %s163 = sphi 0, %s161
      %s164 = sphi 0, %s163
      %s178 = sphi 0, %s164
      %s182 = sphi 0, %s182
      %s184 = sphi 0, %s182
      %s185 = sphi 0, %s184
      %s199 = sphi 0, %s185
      %s203 = sphi 0, %s203
      %s205 = sphi 0, %s203
      %s206 = sphi 0, %s205
      %s220 = sphi 0, %s206
      %s224 = sphi 0, %s224
      %s226 = sphi 0, %s224
      %s227 = sphi 0, %s226
      %s241 = sphi 0, %s227
      %s245 = sphi 0, %s245
      %s247 = sphi 0, %s245
      %s248 = sphi 0, %s247
      %s262 = sphi 0, %s248
      %s266 = sphi 0, %s266
      %s268 = sphi 0, %s266
      %s269 = sphi 0, %s268
      %s283 = sphi 0, %s269
      %s287 = sphi 0, %s287
      %s289 = sphi 0, %s287
      %s290 = sphi 0, %s289
      %s304 = sphi 0, %s290
      %s310 = sphi 0, %s312
      %s313 = sphi 0, %s310
      %s314 = sphi 0, %s313
      %s330 = sphi 0, %s314
    $region4: #{tpu_custom_call.1} parent=1 // loop_header_branch
      %25 = sbr.rel (%p23) target = $region8
    $region5: #{tpu_custom_call.1} parent=1 // loop_body
      %s27 = ssub.s32 %s22, 1
      %s28 = ssub.s32 %s22, 2
      %s29 = sadd.s32 %s22, 1
      %s30 = ssub.s32 %s22, %s29
      %p31 = scmp.eq.s32.totalorder %s30, 0
      %s33 = sadd.s32 %s32, 1
      %s34 = scalar_select %p31, %s32, %s33
      %p37 = pneg %p31
      %p38 = scmp.eq.s32.totalorder %s22, 1
      %p39 = por %p37, %p38
      %p40 = scmp.ne.s32.totalorder %s32, %s35
      %p41 = scmp.eq.s32.totalorder %s22, 0
      %p42 = por %p40, %p41
      %p43 = scmp.ne.s32.totalorder %s32, %s35
      %p44 = scmp.eq.s32.totalorder %s27, 1
      %p45 = por %p43, %p44
      %p46 = scmp.ne.s32.totalorder %s35, %s36
      %p47 = scmp.eq.s32.totalorder %s27, 0
      %p48 = por %p46, %p47
      %p49 = scmp.ne.s32.totalorder %s35, %s36
      %p50 = scmp.eq.s32.totalorder %s28, 1
      %p51 = por %p49, %p50
      %p53 = scmp.ne.s32.totalorder %s36, %s52
      %p54 = scmp.eq.s32.totalorder %s28, 0
      %p55 = por %p53, %p54
      %s57 = sadd.s32 %s56, 1
      %p60 = scmp.eq.s32.totalorder %s22, 1
      %p61 = scmp.ne.s32.totalorder %s56, %s58
      %p62 = scmp.eq.s32.totalorder %s22, 0
      %p63 = por %p61, %p62
      %p64 = scmp.ne.s32.totalorder %s56, %s58
      %p65 = scmp.eq.s32.totalorder %s27, 1
      %p66 = por %p64, %p65
      %p67 = scmp.ne.s32.totalorder %s58, %s59
      %p68 = scmp.eq.s32.totalorder %s27, 0
      %p69 = por %p67, %p68
      %p70 = scmp.ne.s32.totalorder %s58, %s59
      %p71 = scmp.eq.s32.totalorder %s28, 1
      %p72 = por %p70, %p71
      %p74 = scmp.ne.s32.totalorder %s59, %s73
      %p75 = scmp.eq.s32.totalorder %s28, 0
      %p76 = por %p74, %p75
      %s78 = sadd.s32 %s77, 1
      %p81 = scmp.eq.s32.totalorder %s22, 1
      %p82 = scmp.ne.s32.totalorder %s77, %s79
      %p83 = scmp.eq.s32.totalorder %s22, 0
      %p84 = por %p82, %p83
      %p85 = scmp.ne.s32.totalorder %s77, %s79
      %p86 = scmp.eq.s32.totalorder %s27, 1
      %p87 = por %p85, %p86
      %p88 = scmp.ne.s32.totalorder %s79, %s80
      %p89 = scmp.eq.s32.totalorder %s27, 0
      %p90 = por %p88, %p89
      %p91 = scmp.ne.s32.totalorder %s79, %s80
      %p92 = scmp.eq.s32.totalorder %s28, 1
      %p93 = por %p91, %p92
      %p95 = scmp.ne.s32.totalorder %s80, %s94
      %p96 = scmp.eq.s32.totalorder %s28, 0
      %p97 = por %p95, %p96
      %s99 = sadd.s32 %s98, 1
      %p102 = scmp.eq.s32.totalorder %s22, 1
      %p103 = scmp.ne.s32.totalorder %s98, %s100
      %p104 = scmp.eq.s32.totalorder %s22, 0
      %p105 = por %p103, %p104
      %p106 = scmp.ne.s32.totalorder %s98, %s100
      %p107 = scmp.eq.s32.totalorder %s27, 1
      %p108 = por %p106, %p107
      %p109 = scmp.ne.s32.totalorder %s100, %s101
      %p110 = scmp.eq.s32.totalorder %s27, 0
      %p111 = por %p109, %p110
      %p112 = scmp.ne.s32.totalorder %s100, %s101
      %p113 = scmp.eq.s32.totalorder %s28, 1
      %p114 = por %p112, %p113
      %p116 = scmp.ne.s32.totalorder %s101, %s115
      %p117 = scmp.eq.s32.totalorder %s28, 0
      %p118 = por %p116, %p117
      %s120 = sadd.s32 %s119, 1
      %p123 = scmp.eq.s32.totalorder %s22, 1
      %p124 = scmp.ne.s32.totalorder %s119, %s121
      %p125 = scmp.eq.s32.totalorder %s22, 0
      %p126 = por %p124, %p125
      %p127 = scmp.ne.s32.totalorder %s119, %s121
      %p128 = scmp.eq.s32.totalorder %s27, 1
      %p129 = por %p127, %p128
      %p130 = scmp.ne.s32.totalorder %s121, %s122
      %p131 = scmp.eq.s32.totalorder %s27, 0
      %p132 = por %p130, %p131
      %p133 = scmp.ne.s32.totalorder %s121, %s122
      %p134 = scmp.eq.s32.totalorder %s28, 1
      %p135 = por %p133, %p134
      %p137 = scmp.ne.s32.totalorder %s122, %s136
      %p138 = scmp.eq.s32.totalorder %s28, 0
      %p139 = por %p137, %p138
      %s141 = sadd.s32 %s140, 1
      %p144 = scmp.eq.s32.totalorder %s22, 1
      %p145 = scmp.ne.s32.totalorder %s140, %s142
      %p146 = scmp.eq.s32.totalorder %s22, 0
      %p147 = por %p145, %p146
      %p148 = scmp.ne.s32.totalorder %s140, %s142
      %p149 = scmp.eq.s32.totalorder %s27, 1
      %p150 = por %p148, %p149
      %p151 = scmp.ne.s32.totalorder %s142, %s143
      %p152 = scmp.eq.s32.totalorder %s27, 0
      %p153 = por %p151, %p152
      %p154 = scmp.ne.s32.totalorder %s142, %s143
      %p155 = scmp.eq.s32.totalorder %s28, 1
      %p156 = por %p154, %p155
      %p158 = scmp.ne.s32.totalorder %s143, %s157
      %p159 = scmp.eq.s32.totalorder %s28, 0
      %p160 = por %p158, %p159
      %s162 = sadd.s32 %s161, 1
      %p165 = scmp.eq.s32.totalorder %s22, 1
      %p166 = scmp.ne.s32.totalorder %s161, %s163
      %p167 = scmp.eq.s32.totalorder %s22, 0
      %p168 = por %p166, %p167
      %p169 = scmp.ne.s32.totalorder %s161, %s163
      %p170 = scmp.eq.s32.totalorder %s27, 1
      %p171 = por %p169, %p170
      %p172 = scmp.ne.s32.totalorder %s163, %s164
      %p173 = scmp.eq.s32.totalorder %s27, 0
      %p174 = por %p172, %p173
      %p175 = scmp.ne.s32.totalorder %s163, %s164
      %p176 = scmp.eq.s32.totalorder %s28, 1
      %p177 = por %p175, %p176
      %p179 = scmp.ne.s32.totalorder %s164, %s178
      %p180 = scmp.eq.s32.totalorder %s28, 0
      %p181 = por %p179, %p180
      %s183 = sadd.s32 %s182, 1
      %p186 = scmp.eq.s32.totalorder %s22, 1
      %p187 = scmp.ne.s32.totalorder %s182, %s184
      %p188 = scmp.eq.s32.totalorder %s22, 0
      %p189 = por %p187, %p188
      %p190 = scmp.ne.s32.totalorder %s182, %s184
      %p191 = scmp.eq.s32.totalorder %s27, 1
      %p192 = por %p190, %p191
      %p193 = scmp.ne.s32.totalorder %s184, %s185
      %p194 = scmp.eq.s32.totalorder %s27, 0
      %p195 = por %p193, %p194
      %p196 = scmp.ne.s32.totalorder %s184, %s185
      %p197 = scmp.eq.s32.totalorder %s28, 1
      %p198 = por %p196, %p197
      %p200 = scmp.ne.s32.totalorder %s185, %s199
      %p201 = scmp.eq.s32.totalorder %s28, 0
      %p202 = por %p200, %p201
      %s204 = sadd.s32 %s203, 1
      %p207 = scmp.eq.s32.totalorder %s22, 1
      %p208 = scmp.ne.s32.totalorder %s203, %s205
      %p209 = scmp.eq.s32.totalorder %s22, 0
      %p210 = por %p208, %p209
      %p211 = scmp.ne.s32.totalorder %s203, %s205
      %p212 = scmp.eq.s32.totalorder %s27, 1
      %p213 = por %p211, %p212
      %p214 = scmp.ne.s32.totalorder %s205, %s206
      %p215 = scmp.eq.s32.totalorder %s27, 0
      %p216 = por %p214, %p215
      %p217 = scmp.ne.s32.totalorder %s205, %s206
      %p218 = scmp.eq.s32.totalorder %s28, 1
      %p219 = por %p217, %p218
      %p221 = scmp.ne.s32.totalorder %s206, %s220
      %p222 = scmp.eq.s32.totalorder %s28, 0
      %p223 = por %p221, %p222
      %s225 = sadd.s32 %s224, 1
      %p228 = scmp.eq.s32.totalorder %s22, 1
      %p229 = scmp.ne.s32.totalorder %s224, %s226
      %p230 = scmp.eq.s32.totalorder %s22, 0
      %p231 = por %p229, %p230
      %p232 = scmp.ne.s32.totalorder %s224, %s226
      %p233 = scmp.eq.s32.totalorder %s27, 1
      %p234 = por %p232, %p233
      %p235 = scmp.ne.s32.totalorder %s226, %s227
      %p236 = scmp.eq.s32.totalorder %s27, 0
      %p237 = por %p235, %p236
      %p238 = scmp.ne.s32.totalorder %s226, %s227
      %p239 = scmp.eq.s32.totalorder %s28, 1
      %p240 = por %p238, %p239
      %p242 = scmp.ne.s32.totalorder %s227, %s241
      %p243 = scmp.eq.s32.totalorder %s28, 0
      %p244 = por %p242, %p243
      %s246 = sadd.s32 %s245, 1
      %p249 = scmp.eq.s32.totalorder %s22, 1
      %p250 = scmp.ne.s32.totalorder %s245, %s247
      %p251 = scmp.eq.s32.totalorder %s22, 0
      %p252 = por %p250, %p251
      %p253 = scmp.ne.s32.totalorder %s245, %s247
      %p254 = scmp.eq.s32.totalorder %s27, 1
      %p255 = por %p253, %p254
      %p256 = scmp.ne.s32.totalorder %s247, %s248
      %p257 = scmp.eq.s32.totalorder %s27, 0
      %p258 = por %p256, %p257
      %p259 = scmp.ne.s32.totalorder %s247, %s248
      %p260 = scmp.eq.s32.totalorder %s28, 1
      %p261 = por %p259, %p260
      %p263 = scmp.ne.s32.totalorder %s248, %s262
      %p264 = scmp.eq.s32.totalorder %s28, 0
      %p265 = por %p263, %p264
      %s267 = sadd.s32 %s266, 1
      %p270 = scmp.eq.s32.totalorder %s22, 1
      %p271 = scmp.ne.s32.totalorder %s266, %s268
      %p272 = scmp.eq.s32.totalorder %s22, 0
      %p273 = por %p271, %p272
      %p274 = scmp.ne.s32.totalorder %s266, %s268
      %p275 = scmp.eq.s32.totalorder %s27, 1
      %p276 = por %p274, %p275
      %p277 = scmp.ne.s32.totalorder %s268, %s269
      %p278 = scmp.eq.s32.totalorder %s27, 0
      %p279 = por %p277, %p278
      %p280 = scmp.ne.s32.totalorder %s268, %s269
      %p281 = scmp.eq.s32.totalorder %s28, 1
      %p282 = por %p280, %p281
      %p284 = scmp.ne.s32.totalorder %s269, %s283
      %p285 = scmp.eq.s32.totalorder %s28, 0
      %p286 = por %p284, %p285
      %s288 = sadd.s32 %s287, 1
      %p291 = scmp.eq.s32.totalorder %s22, 1
      %p292 = scmp.ne.s32.totalorder %s287, %s289
      %p293 = scmp.eq.s32.totalorder %s22, 0
      %p294 = por %p292, %p293
      %p295 = scmp.ne.s32.totalorder %s287, %s289
      %p296 = scmp.eq.s32.totalorder %s27, 1
      %p297 = por %p295, %p296
      %p298 = scmp.ne.s32.totalorder %s289, %s290
      %p299 = scmp.eq.s32.totalorder %s27, 0
      %p300 = por %p298, %p299
      %p301 = scmp.ne.s32.totalorder %s289, %s290
      %p302 = scmp.eq.s32.totalorder %s28, 1
      %p303 = por %p301, %p302
      %p305 = scmp.ne.s32.totalorder %s290, %s304
      %p306 = scmp.eq.s32.totalorder %s28, 0
      %p307 = por %p305, %p306
      %s308 = ssub.s32 %s22, %s29
      %p309 = scmp.eq.s32.totalorder %s308, 0
      %s311 = sadd.s32 %s310, 1
      %s312 = scalar_select %p309, %s310, %s311
      %p315 = pneg %p309
      %p316 = scmp.eq.s32.totalorder %s22, 1
      %p317 = por %p315, %p316
      %p318 = scmp.ne.s32.totalorder %s310, %s313
      %p319 = scmp.eq.s32.totalorder %s22, 0
      %p320 = por %p318, %p319
      %p321 = scmp.ne.s32.totalorder %s310, %s313
      %p322 = scmp.eq.s32.totalorder %s27, 1
      %p323 = por %p321, %p322
      %p324 = scmp.ne.s32.totalorder %s313, %s314
      %p325 = scmp.eq.s32.totalorder %s27, 0
      %p326 = por %p324, %p325
      %p327 = scmp.ne.s32.totalorder %s313, %s314
      %p328 = scmp.eq.s32.totalorder %s28, 1
      %p329 = por %p327, %p328
      %p331 = scmp.ne.s32.totalorder %s314, %s330
      %p332 = scmp.eq.s32.totalorder %s28, 0
      %p333 = por %p331, %p332
      %p334 = scmp.le.s32.totalorder 1, %s22
      %p335 = scmp.lt.s32.totalorder %s22, 3
      %p336 = pnand %p334, %p335
      %p337 = pneg %p336
      // Predicated region
      $region9: #{tpu_custom_call.1} parent=5 // pred_check
        _
      $region10: #{tpu_custom_call.1} parent=5 // pred_check_branch
        %339 = sbr.rel (%p336) target = $region12
      $region11: #{tpu_custom_call.1} parent=5 // pred_region
        %s340 = ssub.s32 %s22, 1
        // Predicated region
        $region13: #{tpu_custom_call.1} parent=11 // pred_check
          %p341 = pneg %p69
        $region14: #{tpu_custom_call.1} parent=11 // pred_check_branch
          %343 = sbr.rel (%p341) target = $region16
        $region15: #{tpu_custom_call.1} parent=11 // pred_region
          _
        $region16: #{tpu_custom_call.1} parent=11 // pred_fallthru
          _
        // Predicated region
        $region17: #{tpu_custom_call.1} parent=11 // pred_check
          %p344 = pneg %p90
        $region18: #{tpu_custom_call.1} parent=11 // pred_check_branch
          %346 = sbr.rel (%p344) target = $region20
        $region19: #{tpu_custom_call.1} parent=11 // pred_region
          _
        $region20: #{tpu_custom_call.1} parent=11 // pred_fallthru
          _
        // Predicated region
        $region21: #{tpu_custom_call.1} parent=11 // pred_check
          %p347 = pneg %p111
        $region22: #{tpu_custom_call.1} parent=11 // pred_check_branch
          %349 = sbr.rel (%p347) target = $region24
        $region23: #{tpu_custom_call.1} parent=11 // pred_region
          _
        $region24: #{tpu_custom_call.1} parent=11 // pred_fallthru
          _
        // Predicated region
        $region25: #{tpu_custom_call.1} parent=11 // pred_check
          %p350 = pneg %p132
        $region26: #{tpu_custom_call.1} parent=11 // pred_check_branch
          %352 = sbr.rel (%p350) target = $region28
        $region27: #{tpu_custom_call.1} parent=11 // pred_region
          _
        $region28: #{tpu_custom_call.1} parent=11 // pred_fallthru
          _
        // Predicated region
        $region29: #{tpu_custom_call.1} parent=11 // pred_check
          %p353 = pneg %p153
        $region30: #{tpu_custom_call.1} parent=11 // pred_check_branch
          %355 = sbr.rel (%p353) target = $region32
        $region31: #{tpu_custom_call.1} parent=11 // pred_region
          _
        $region32: #{tpu_custom_call.1} parent=11 // pred_fallthru
          _
        // Predicated region
        $region33: #{tpu_custom_call.1} parent=11 // pred_check
          %p356 = pneg %p174
        $region34: #{tpu_custom_call.1} parent=11 // pred_check_branch
          %358 = sbr.rel (%p356) target = $region36
        $region35: #{tpu_custom_call.1} parent=11 // pred_region
          _
        $region36: #{tpu_custom_call.1} parent=11 // pred_fallthru
          _
        // Predicated region
        $region37: #{tpu_custom_call.1} parent=11 // pred_check
          %p359 = pneg %p195
        $region38: #{tpu_custom_call.1} parent=11 // pred_check_branch
          %361 = sbr.rel (%p359) target = $region40
        $region39: #{tpu_custom_call.1} parent=11 // pred_region
          _
        $region40: #{tpu_custom_call.1} parent=11 // pred_fallthru
          _
        // Predicated region
        $region41: #{tpu_custom_call.1} parent=11 // pred_check
          %p362 = pneg %p216
        $region42: #{tpu_custom_call.1} parent=11 // pred_check_branch
          %364 = sbr.rel (%p362) target = $region44
        $region43: #{tpu_custom_call.1} parent=11 // pred_region
          _
        $region44: #{tpu_custom_call.1} parent=11 // pred_fallthru
          _
        // Predicated region
        $region45: #{tpu_custom_call.1} parent=11 // pred_check
          %p365 = pneg %p237
        $region46: #{tpu_custom_call.1} parent=11 // pred_check_branch
          %367 = sbr.rel (%p365) target = $region48
        $region47: #{tpu_custom_call.1} parent=11 // pred_region
          _
        $region48: #{tpu_custom_call.1} parent=11 // pred_fallthru
          _
        // Predicated region
        $region49: #{tpu_custom_call.1} parent=11 // pred_check
          %p368 = pneg %p258
        $region50: #{tpu_custom_call.1} parent=11 // pred_check_branch
          %370 = sbr.rel (%p368) target = $region52
        $region51: #{tpu_custom_call.1} parent=11 // pred_region
          _
        $region52: #{tpu_custom_call.1} parent=11 // pred_fallthru
          _
        // Predicated region
        $region53: #{tpu_custom_call.1} parent=11 // pred_check
          %p371 = pneg %p279
        $region54: #{tpu_custom_call.1} parent=11 // pred_check_branch
          %373 = sbr.rel (%p371) target = $region56
        $region55: #{tpu_custom_call.1} parent=11 // pred_region
          _
        $region56: #{tpu_custom_call.1} parent=11 // pred_fallthru
          _
        // Predicated region
        $region57: #{tpu_custom_call.1} parent=11 // pred_check
          %p374 = pneg %p300
        $region58: #{tpu_custom_call.1} parent=11 // pred_check_branch
          %376 = sbr.rel (%p374) target = $region60
        $region59: #{tpu_custom_call.1} parent=11 // pred_region
          _
        $region60: #{tpu_custom_call.1} parent=11 // pred_fallthru
          _
      $region12: #{tpu_custom_call.1} parent=5 // pred_fallthru
        _
      %p377 = scmp.lt.s32.totalorder %s22, 2
      // Predicated region
      $region61: #{tpu_custom_call.1} parent=5 // pred_check
        %p378 = pneg %p377
      $region62: #{tpu_custom_call.1} parent=5 // pred_check_branch
        %380 = sbr.rel (%p378) target = $region64
      $region63: #{tpu_custom_call.1} parent=5 // pred_region
        // Predicated region
        $region65: #{tpu_custom_call.1} parent=63 // pred_check
          %p381 = pneg %p42
        $region66: #{tpu_custom_call.1} parent=63 // pred_check_branch
          %383 = sbr.rel (%p381) target = $region68
        $region67: #{tpu_custom_call.1} parent=63 // pred_region
          %p384 = scmp.lt.s32.totalorder %s22, 1
          %s385 = scalar_select %p384, %s22, 1
          %s386 = smul.addr %s385, 2
          %s387 = smul.addr %s386, 8
          %s388 = scalar_lea.vmem %s0, %s387
        $region68: #{tpu_custom_call.1} parent=63 // pred_fallthru
          _
      $region64: #{tpu_custom_call.1} parent=5 // pred_fallthru
        _
      %p389 = scmp.le.s32.totalorder 1, %s22
      %p390 = scmp.lt.s32.totalorder %s22, 3
      %p391 = pnand %p389, %p390
      %p392 = pneg %p391
      // Predicated region
      $region69: #{tpu_custom_call.1} parent=5 // pred_check
        _
      $region70: #{tpu_custom_call.1} parent=5 // pred_check_branch
        %394 = sbr.rel (%p391) target = $region72
      $region71: #{tpu_custom_call.1} parent=5 // pred_region
        %s395 = ssub.s32 %s22, 1
        %p396 = scmp.lt.s32.totalorder %s27, 1
        %s397 = scalar_select %p396, %s27, 1
        %s398 = smul.addr %s397, 2
        %s399 = smul.addr %s398, 8
        %s400 = scalar_lea.vmem %s0, %s399
        %p401 = pneg %p48
        %p402 = pneg %p45
        %p403 = pneg %p69
        %p404 = pneg %p66
        %p405 = pneg %p90
        %p406 = pneg %p87
        %p407 = pneg %p111
        %p408 = pneg %p108
        %p409 = pneg %p132
        %p410 = pneg %p129
        %p411 = pneg %p153
        %p412 = pneg %p150
        %p413 = pneg %p174
        %p414 = pneg %p171
        %p415 = pneg %p195
        %p416 = pneg %p192
        %p417 = pneg %p216
        %p418 = pneg %p213
        %p419 = pneg %p237
        %p420 = pneg %p234
        %p421 = pneg %p258
        %p422 = pneg %p255
        %p423 = pneg %p279
        %p424 = pneg %p276
        %p425 = pneg %p300
        %p426 = pneg %p297
        %p427 = pneg %p326
        %p428 = pneg %p323
        %s429 = sand.u32 %s313, 1
        %s430 = scalar_lea.sflag [#allocation3], %s429
        %s431 = sand.u32 %s313, 1
        %s432 = smul.addr %s431, 16
        %s433 = scalar_lea.vmem [#allocation2], %s432
        %p434 = scmp.lt.s32.totalorder %s27, 1
        %s435 = scalar_select %p434, %s27, 1
        %s436 = smul.addr %s435, 2
        %s437 = smul.addr %s436, 8
        %s438 = scalar_lea.vmem %s0, %s437
        %v440 = vld [vmem:[%s438] sm:$0xff]
        %v441 = vld [vmem:[%s438 + $0x8] sm:$0xff]
        %v442 = vld [vmem:[%s1] sm:$0x1]
        %v443 = vld [vmem:[%s2] sm:$0x1]
        %vm444 = vcmask 261120
        %v445 = vsel %vm444, %v440, 0.0
        %446 = vadd.xlane.f32.xlu0 %v445
        %v447 = vpop.xlane.xlu0 %446
        %v448 = vsel %vm444, %v441, 0.0
        %449 = vadd.xlane.f32.xlu0 %v448
        %v450 = vpop.xlane.xlu0 %449
        %v451 = vrcp.pop 32.0
        %v452 = vmul.f32 %v447, %v451
        %v453 = vmul.f32 %v450, %v451
        %v454 = vmul.f32 %v440, %v440
        %v455 = vmul.f32 %v441, %v441
        %v456 = vsel %vm444, %v454, 0.0
        %457 = vadd.xlane.f32.xlu0 %v456
        %v458 = vpop.xlane.xlu0 %457
        %v459 = vsel %vm444, %v455, 0.0
        %460 = vadd.xlane.f32.xlu0 %v459
        %v461 = vpop.xlane.xlu0 %460
        %v462 = vmul.f32 %v458, %v451
        %v463 = vmul.f32 %v461, %v451
        %v464 = vmul.f32 %v452, %v452
        %v465 = vmul.f32 %v453, %v453
        %v466 = vsub.f32 %v462, %v464
        %v467 = vsub.f32 %v463, %v465
        %v468 = vmax.f32 %v466, 0.0
        %v469 = vmax.f32 %v467, 0.0
        %v470 = vsub.f32 %v440, %v452
        %v471 = vsub.f32 %v441, %v453
        %v472 = vadd.f32 %v468, 1e-05
        %v473 = vadd.f32 %v469, 1e-05
        %v474 = vrsqrt.pop %v472
        %v475 = vrsqrt.pop %v473
        %v476 = vmul.f32 %v470, %v474
        %v477 = vmul.f32 %v471, %v475
        %v479 = vlaneseq
        %v480 = vshrl.u32 %v479, 7
        %v481 = vsub.s32 0, %v480
        %v482 = vrot.slane %v442, %v481
        %v484 = vmul.f32 %v476, %v482
        %v485 = vmul.f32 %v477, %v482
        %v487 = vlaneseq
        %v488 = vshrl.u32 %v487, 7
        %v489 = vsub.s32 0, %v488
        %v490 = vrot.slane %v443, %v489
        %v492 = vadd.f32 %v484, %v490
        %v493 = vadd.f32 %v485, %v490
        %v494 = vpack.c.bf16 %v493, %v492
        %v495 = vld [vmem:[%s3] sm:$0xf]
        %v496 = vld [vmem:[%s3 + $0x4] sm:$0xf]
        %v497 = vld [vmem:[%s3 + $0x8] sm:$0xf]
        %v498 = vld [vmem:[%s3 + $0xc] sm:$0xf]
        %v499 = vld [vmem:[%s4] sm:$0x1]
        %v501 = vlaneseq
        %v502 = vshrl.u32 %v501, 7
        %v503 = vsub.s32 0, %v502
        %v504 = vrot.slane %v499, %v503
        %v510 = vunpack.c.l.b16 %v495
        %v511 = vunpack.c.l.b16 %v496
        %v512 = vunpack.c.l.b16 %v497
        %v513 = vunpack.c.l.b16 %v498
        %v514 = vpack.c.b16 %v511, %v510
        %v515 = vpack.c.b16 %v513, %v512
        %v519 = vsel %vm444, %v494, 0
        %521 = vmatprep.subr.bf16.mxu0 0
        %522 = vmatpush1.bf16.msra.mxu0 %v514
        %523 = vmatprep.subr.bf16.mxu0 0
        %524 = vmatpush1.bf16.msra.mxu0 %v515
        %525 = vmatprep.subr.bf16.mxu0 0
        %526 = vmatpush1.bf16.msra.mxu0 0
        %527 = vmatprep.subr.bf16.mxu0 0
        %528 = vmatpush1.bf16.msra.mxu0 0
        %529 = vmatprep.subr.bf16.mxu0 0
        %530 = vmatpush1.bf16.msra.mxu0 0
        %531 = vmatprep.subr.bf16.mxu0 0
        %532 = vmatpush1.bf16.msra.mxu0 0
        %533 = vmatprep.subr.bf16.mxu0 0
        %534 = vmatpush1.bf16.msra.mxu0 0
        %535 = vmatprep.subr.bf16.mxu0 0
        %536 = vmatpush1.bf16.msra.mxu0 0
        %537 = vmatprep.subr.bf16.mxu0 0
        %538 = vmatpush1.bf16.msra.mxu0 0
        %539 = vmatprep.subr.bf16.mxu0 0
        %540 = vmatpush1.bf16.msra.mxu0 0
        %541 = vmatprep.subr.bf16.mxu0 0
        %542 = vmatpush1.bf16.msra.mxu0 0
        %543 = vmatprep.subr.bf16.mxu0 0
        %544 = vmatpush1.bf16.msra.mxu0 0
        %545 = vmatprep.subr.bf16.mxu0 0
        %546 = vmatpush1.bf16.msra.mxu0 0
        %547 = vmatprep.subr.bf16.mxu0 0
        %548 = vmatpush1.bf16.msra.mxu0 0
        %549 = vmatprep.subr.bf16.mxu0 0
        %550 = vmatpush1.bf16.msra.mxu0 0
        %551 = vmatprep.subr.bf16.mxu0 0
        %552 = vmatpush1.bf16.msra.mxu0 0
        %553 = vmatprep.mubr.bf16.mxu0 0
        %554 = vmatmul.mubr.bf16.gmra.mrb[0].mxu0 %v519
        %v555 = vpop.f32.mrb[0].mxu0
        %v556 = vadd.f32 %v504, %v555
        %v557 = vpop.f32.mrb[0].mxu0
        %v558 = vpop.f32.mrb[0].mxu0
        %v559 = vadd.f32 %v504, %v558
        %v560 = vpop.f32.mrb[0].mxu0
        %561 = vdwg.mxu0
        %v562 = vpack.c.bf16 %v559, %v556
        %564 = vrot.lane.b32.xlu0 %v562, 120
        %v565 = vpop.permute.xlu0 %564
        %566 = vrot.lane.b32.xlu0 %v562, 112
        %v567 = vpop.permute.xlu0 %566
        %568 = vrot.lane.b32.xlu0 %v562, 104
        %v569 = vpop.permute.xlu0 %568
        %v572 = vpack.i.b16 %v565, %v562
        %v574 = vshrl.u32 %v562, 16
        %v575 = vshrl.u32 %v565, 16
        %v576 = vpack.i.b16 %v575, %v574
        %v580 = vpack.i.b16 %v569, %v567
        %v582 = vshrl.u32 %v567, 16
        %v583 = vshrl.u32 %v569, 16
        %v584 = vpack.i.b16 %v583, %v582
        %v587 = vpack.i.b16 0, 0
        %v589 = vshrl.u32 0, 16
        %v590 = vpack.i.b16 %v589, %v589
        %v592 = vcombine.high %v572, %v587
        %v594 = vunpack.c.l.s4 1983009808
        %v595 = vunpack.c.0.s8 %v594
        %v596 = vlaneseq
        %v597 = vshrl.u32 %v596, 7
        %v598 = vsub.s32 %v595, %v597
        %v599 = vrot.slane %v572, %v598
        %v601 = vunpack.c.l.s4 1983009808
        %v602 = vunpack.c.0.s8 %v601
        %v603 = vlaneseq
        %v604 = vshrl.u32 %v603, 7
        %v605 = vsub.s32 %v602, %v604
        %v606 = vrot.slane %v592, %v605
        %v607 = vcombine.high %v580, %v587
        %v609 = vunpack.c.l.s4 1983009808
        %v610 = vunpack.c.0.s8 %v609
        %v611 = vlaneseq
        %v612 = vshrl.u32 %v611, 7
        %v613 = vsub.s32 %v610, %v612
        %v614 = vrot.slane %v580, %v613
        %v616 = vunpack.c.l.s4 1983009808
        %v617 = vunpack.c.0.s8 %v616
        %v618 = vlaneseq
        %v619 = vshrl.u32 %v618, 7
        %v620 = vsub.s32 %v617, %v619
        %v621 = vrot.slane %v607, %v620
        %v622 = vcombine.low %v599, %v614
        %v623 = vcombine.high %v599, %v614
        %v625 = vunpack.c.l.s4 1934713408
        %v626 = vunpack.c.0.s8 %v625
        %v627 = vlaneseq
        %v628 = vshrl.u32 %v627, 7
        %v629 = vsub.s32 %v626, %v628
        %v630 = vrot.slane %v622, %v629
        %v632 = vunpack.c.l.s4 1934713408
        %v633 = vunpack.c.0.s8 %v632
        %v634 = vlaneseq
        %v635 = vshrl.u32 %v634, 7
        %v636 = vsub.s32 %v633, %v635
        %v637 = vrot.slane %v623, %v636
        %v638 = vcombine.low %v606, %v621
        %v639 = vcombine.high %v606, %v621
        %v641 = vunpack.c.l.s4 1934713408
        %v642 = vunpack.c.0.s8 %v641
        %v643 = vlaneseq
        %v644 = vshrl.u32 %v643, 7
        %v645 = vsub.s32 %v642, %v644
        %v646 = vrot.slane %v638, %v645
        %v648 = vunpack.c.l.s4 1934713408
        %v649 = vunpack.c.0.s8 %v648
        %v650 = vlaneseq
        %v651 = vshrl.u32 %v650, 7
        %v652 = vsub.s32 %v649, %v651
        %v653 = vrot.slane %v639, %v652
        %v654 = vcombine.high %v630, 0
        %v655 = vcombine.high %v637, 0
        %v656 = vcombine.high %v646, 0
        %v657 = vcombine.high %v653, 0
        %v658 = vcombine.high %v576, %v590
        %v660 = vunpack.c.l.s4 1983009808
        %v661 = vunpack.c.0.s8 %v660
        %v662 = vlaneseq
        %v663 = vshrl.u32 %v662, 7
        %v664 = vsub.s32 %v661, %v663
        %v665 = vrot.slane %v576, %v664
        %v667 = vunpack.c.l.s4 1983009808
        %v668 = vunpack.c.0.s8 %v667
        %v669 = vlaneseq
        %v670 = vshrl.u32 %v669, 7
        %v671 = vsub.s32 %v668, %v670
        %v672 = vrot.slane %v658, %v671
        %v673 = vcombine.high %v584, %v590
        %v675 = vunpack.c.l.s4 1983009808
        %v676 = vunpack.c.0.s8 %v675
        %v677 = vlaneseq
        %v678 = vshrl.u32 %v677, 7
        %v679 = vsub.s32 %v676, %v678
        %v680 = vrot.slane %v584, %v679
        %v682 = vunpack.c.l.s4 1983009808
        %v683 = vunpack.c.0.s8 %v682
        %v684 = vlaneseq
        %v685 = vshrl.u32 %v684, 7
        %v686 = vsub.s32 %v683, %v685
        %v687 = vrot.slane %v673, %v686
        %v688 = vcombine.low %v665, %v680
        %v689 = vcombine.high %v665, %v680
        %v691 = vunpack.c.l.s4 1934713408
        %v692 = vunpack.c.0.s8 %v691
        %v693 = vlaneseq
        %v694 = vshrl.u32 %v693, 7
        %v695 = vsub.s32 %v692, %v694
        %v696 = vrot.slane %v688, %v695
        %v698 = vunpack.c.l.s4 1934713408
        %v699 = vunpack.c.0.s8 %v698
        %v700 = vlaneseq
        %v701 = vshrl.u32 %v700, 7
        %v702 = vsub.s32 %v699, %v701
        %v703 = vrot.slane %v689, %v702
        %v704 = vcombine.low %v672, %v687
        %v705 = vcombine.high %v672, %v687
        %v707 = vunpack.c.l.s4 1934713408
        %v708 = vunpack.c.0.s8 %v707
        %v709 = vlaneseq
        %v710 = vshrl.u32 %v709, 7
        %v711 = vsub.s32 %v708, %v710
        %v712 = vrot.slane %v704, %v711
        %v714 = vunpack.c.l.s4 1934713408
        %v715 = vunpack.c.0.s8 %v714
        %v716 = vlaneseq
        %v717 = vshrl.u32 %v716, 7
        %v718 = vsub.s32 %v715, %v717
        %v719 = vrot.slane %v705, %v718
        %v720 = vcombine.high %v696, 0
        %v721 = vcombine.high %v703, 0
        %v722 = vcombine.high %v712, 0
        %v723 = vcombine.high %v719, 0
        %v724 = vcombine.low %v630, %v637
        %v726 = vunpack.c.l.s4 1983009808
        %v727 = vunpack.c.0.s8 %v726
        %v728 = vlaneseq
        %v729 = vshrl.u32 %v728, 7
        %v730 = vsub.s32 %v727, %v729
        %v731 = vrot.slane %v724, %v730
        %v732 = vcombine.low %v654, %v655
        %v734 = vunpack.c.l.s4 1983009808
        %v735 = vunpack.c.0.s8 %v734
        %v736 = vlaneseq
        %v737 = vshrl.u32 %v736, 7
        %v738 = vsub.s32 %v735, %v737
        %v739 = vrot.slane %v732, %v738
        %v740 = vcombine.low %v646, %v653
        %v742 = vunpack.c.l.s4 1983009808
        %v743 = vunpack.c.0.s8 %v742
        %v744 = vlaneseq
        %v745 = vshrl.u32 %v744, 7
        %v746 = vsub.s32 %v743, %v745
        %v747 = vrot.slane %v740, %v746
        %v748 = vcombine.low %v656, %v657
        %v750 = vunpack.c.l.s4 1983009808
        %v751 = vunpack.c.0.s8 %v750
        %v752 = vlaneseq
        %v753 = vshrl.u32 %v752, 7
        %v754 = vsub.s32 %v751, %v753
        %v755 = vrot.slane %v748, %v754
        %v756 = vcombine.low %v731, %v739
        %v758 = vunpack.c.l.s4 1934713408
        %v759 = vunpack.c.0.s8 %v758
        %v760 = vlaneseq
        %v761 = vshrl.u32 %v760, 7
        %v762 = vsub.s32 %v759, %v761
        %v763 = vrot.slane %v756, %v762
        %v764 = vcombine.low %v747, %v755
        %v766 = vunpack.c.l.s4 1934713408
        %v767 = vunpack.c.0.s8 %v766
        %v768 = vlaneseq
        %v769 = vshrl.u32 %v768, 7
        %v770 = vsub.s32 %v767, %v769
        %v771 = vrot.slane %v764, %v770
        %v772 = vcombine.low %v763, %v771
        %v773 = vcombine.high %v763, %v771
        %v774 = vcombine.low %v696, %v703
        %v776 = vunpack.c.l.s4 1983009808
        %v777 = vunpack.c.0.s8 %v776
        %v778 = vlaneseq
        %v779 = vshrl.u32 %v778, 7
        %v780 = vsub.s32 %v777, %v779
        %v781 = vrot.slane %v774, %v780
        %v782 = vcombine.low %v720, %v721
        %v784 = vunpack.c.l.s4 1983009808
        %v785 = vunpack.c.0.s8 %v784
        %v786 = vlaneseq
        %v787 = vshrl.u32 %v786, 7
        %v788 = vsub.s32 %v785, %v787
        %v789 = vrot.slane %v782, %v788
        %v790 = vcombine.low %v712, %v719
        %v792 = vunpack.c.l.s4 1983009808
        %v793 = vunpack.c.0.s8 %v792
        %v794 = vlaneseq
        %v795 = vshrl.u32 %v794, 7
        %v796 = vsub.s32 %v793, %v795
        %v797 = vrot.slane %v790, %v796
        %v798 = vcombine.low %v722, %v723
        %v800 = vunpack.c.l.s4 1983009808
        %v801 = vunpack.c.0.s8 %v800
        %v802 = vlaneseq
        %v803 = vshrl.u32 %v802, 7
        %v804 = vsub.s32 %v801, %v803
        %v805 = vrot.slane %v798, %v804
        %v806 = vcombine.low %v781, %v789
        %v808 = vunpack.c.l.s4 1934713408
        %v809 = vunpack.c.0.s8 %v808
        %v810 = vlaneseq
        %v811 = vshrl.u32 %v810, 7
        %v812 = vsub.s32 %v809, %v811
        %v813 = vrot.slane %v806, %v812
        %v814 = vcombine.low %v797, %v805
        %v816 = vunpack.c.l.s4 1934713408
        %v817 = vunpack.c.0.s8 %v816
        %v818 = vlaneseq
        %v819 = vshrl.u32 %v818, 7
        %v820 = vsub.s32 %v817, %v819
        %v821 = vrot.slane %v814, %v820
        %v822 = vcombine.low %v813, %v821
        %v823 = vcombine.high %v813, %v821
        %v826 = vpack.i.b16 %v822, %v772
        %v827 = vshrl.u32 %v772, 16
        %v828 = vshrl.u32 %v822, 16
        %v829 = vpack.i.b16 %v828, %v827
        %v832 = vpack.i.b16 %v823, %v773
        %v833 = vshrl.u32 %v773, 16
        %v834 = vshrl.u32 %v823, 16
        %v835 = vpack.i.b16 %v834, %v833
        %836 = vrot.lane.b32.xlu0 %v562, 96
        %v837 = vpop.permute.xlu0 %836
        %838 = vrot.lane.b32.xlu0 %v565, 96
        %v839 = vpop.permute.xlu0 %838
        %840 = vrot.lane.b32.xlu0 %v567, 96
        %v841 = vpop.permute.xlu0 %840
        %842 = vrot.lane.b32.xlu0 %v569, 96
        %v843 = vpop.permute.xlu0 %842
        %v846 = vpack.i.b16 %v839, %v837
        %v848 = vshrl.u32 %v837, 16
        %v849 = vshrl.u32 %v839, 16
        %v850 = vpack.i.b16 %v849, %v848
        %v854 = vpack.i.b16 %v843, %v841
        %v856 = vshrl.u32 %v841, 16
        %v857 = vshrl.u32 %v843, 16
        %v858 = vpack.i.b16 %v857, %v856
        %v860 = vcombine.high %v846, %v587
        %v862 = vunpack.c.l.s4 1983009808
        %v863 = vunpack.c.0.s8 %v862
        %v864 = vlaneseq
        %v865 = vshrl.u32 %v864, 7
        %v866 = vsub.s32 %v863, %v865
        %v867 = vrot.slane %v846, %v866
        %v869 = vunpack.c.l.s4 1983009808
        %v870 = vunpack.c.0.s8 %v869
        %v871 = vlaneseq
        %v872 = vshrl.u32 %v871, 7
        %v873 = vsub.s32 %v870, %v872
        %v874 = vrot.slane %v860, %v873
        %v875 = vcombine.high %v854, %v587
        %v877 = vunpack.c.l.s4 1983009808
        %v878 = vunpack.c.0.s8 %v877
        %v879 = vlaneseq
        %v880 = vshrl.u32 %v879, 7
        %v881 = vsub.s32 %v878, %v880
        %v882 = vrot.slane %v854, %v881
        %v884 = vunpack.c.l.s4 1983009808
        %v885 = vunpack.c.0.s8 %v884
        %v886 = vlaneseq
        %v887 = vshrl.u32 %v886, 7
        %v888 = vsub.s32 %v885, %v887
        %v889 = vrot.slane %v875, %v888
        %v890 = vcombine.low %v867, %v882
        %v891 = vcombine.high %v867, %v882
        %v893 = vunpack.c.l.s4 1934713408
        %v894 = vunpack.c.0.s8 %v893
        %v895 = vlaneseq
        %v896 = vshrl.u32 %v895, 7
        %v897 = vsub.s32 %v894, %v896
        %v898 = vrot.slane %v890, %v897
        %v900 = vunpack.c.l.s4 1934713408
        %v901 = vunpack.c.0.s8 %v900
        %v902 = vlaneseq
        %v903 = vshrl.u32 %v902, 7
        %v904 = vsub.s32 %v901, %v903
        %v905 = vrot.slane %v891, %v904
        %v906 = vcombine.low %v874, %v889
        %v907 = vcombine.high %v874, %v889
        %v909 = vunpack.c.l.s4 1934713408
        %v910 = vunpack.c.0.s8 %v909
        %v911 = vlaneseq
        %v912 = vshrl.u32 %v911, 7
        %v913 = vsub.s32 %v910, %v912
        %v914 = vrot.slane %v906, %v913
        %v916 = vunpack.c.l.s4 1934713408
        %v917 = vunpack.c.0.s8 %v916
        %v918 = vlaneseq
        %v919 = vshrl.u32 %v918, 7
        %v920 = vsub.s32 %v917, %v919
        %v921 = vrot.slane %v907, %v920
        %v922 = vcombine.high %v898, 0
        %v923 = vcombine.high %v905, 0
        %v924 = vcombine.high %v914, 0
        %v925 = vcombine.high %v921, 0
        %v926 = vcombine.high %v850, %v590
        %v928 = vunpack.c.l.s4 1983009808
        %v929 = vunpack.c.0.s8 %v928
        %v930 = vlaneseq
        %v931 = vshrl.u32 %v930, 7
        %v932 = vsub.s32 %v929, %v931
        %v933 = vrot.slane %v850, %v932
        %v935 = vunpack.c.l.s4 1983009808
        %v936 = vunpack.c.0.s8 %v935
        %v937 = vlaneseq
        %v938 = vshrl.u32 %v937, 7
        %v939 = vsub.s32 %v936, %v938
        %v940 = vrot.slane %v926, %v939
        %v941 = vcombine.high %v858, %v590
        %v943 = vunpack.c.l.s4 1983009808
        %v944 = vunpack.c.0.s8 %v943
        %v945 = vlaneseq
        %v946 = vshrl.u32 %v945, 7
        %v947 = vsub.s32 %v944, %v946
        %v948 = vrot.slane %v858, %v947
        %v950 = vunpack.c.l.s4 1983009808
        %v951 = vunpack.c.0.s8 %v950
        %v952 = vlaneseq
        %v953 = vshrl.u32 %v952, 7
        %v954 = vsub.s32 %v951, %v953
        %v955 = vrot.slane %v941, %v954
        %v956 = vcombine.low %v933, %v948
        %v957 = vcombine.high %v933, %v948
        %v959 = vunpack.c.l.s4 1934713408
        %v960 = vunpack.c.0.s8 %v959
        %v961 = vlaneseq
        %v962 = vshrl.u32 %v961, 7
        %v963 = vsub.s32 %v960, %v962
        %v964 = vrot.slane %v956, %v963
        %v966 = vunpack.c.l.s4 1934713408
        %v967 = vunpack.c.0.s8 %v966
        %v968 = vlaneseq
        %v969 = vshrl.u32 %v968, 7
        %v970 = vsub.s32 %v967, %v969
        %v971 = vrot.slane %v957, %v970
        %v972 = vcombine.low %v940, %v955
        %v973 = vcombine.high %v940, %v955
        %v975 = vunpack.c.l.s4 1934713408
        %v976 = vunpack.c.0.s8 %v975
        %v977 = vlaneseq
        %v978 = vshrl.u32 %v977, 7
        %v979 = vsub.s32 %v976, %v978
        %v980 = vrot.slane %v972, %v979
        %v982 = vunpack.c.l.s4 1934713408
        %v983 = vunpack.c.0.s8 %v982
        %v984 = vlaneseq
        %v985 = vshrl.u32 %v984, 7
        %v986 = vsub.s32 %v983, %v985
        %v987 = vrot.slane %v973, %v986
        %v988 = vcombine.high %v964, 0
        %v989 = vcombine.high %v971, 0
        %v990 = vcombine.high %v980, 0
        %v991 = vcombine.high %v987, 0
        %v992 = vcombine.low %v898, %v905
        %v994 = vunpack.c.l.s4 1983009808
        %v995 = vunpack.c.0.s8 %v994
        %v996 = vlaneseq
        %v997 = vshrl.u32 %v996, 7
        %v998 = vsub.s32 %v995, %v997
        %v999 = vrot.slane %v992, %v998
        %v1000 = vcombine.low %v922, %v923
        %v1002 = vunpack.c.l.s4 1983009808
        %v1003 = vunpack.c.0.s8 %v1002
        %v1004 = vlaneseq
        %v1005 = vshrl.u32 %v1004, 7
        %v1006 = vsub.s32 %v1003, %v1005
        %v1007 = vrot.slane %v1000, %v1006
        %v1008 = vcombine.low %v914, %v921
        %v1010 = vunpack.c.l.s4 1983009808
        %v1011 = vunpack.c.0.s8 %v1010
        %v1012 = vlaneseq
        %v1013 = vshrl.u32 %v1012, 7
        %v1014 = vsub.s32 %v1011, %v1013
        %v1015 = vrot.slane %v1008, %v1014
        %v1016 = vcombine.low %v924, %v925
        %v1018 = vunpack.c.l.s4 1983009808
        %v1019 = vunpack.c.0.s8 %v1018
        %v1020 = vlaneseq
        %v1021 = vshrl.u32 %v1020, 7
        %v1022 = vsub.s32 %v1019, %v1021
        %v1023 = vrot.slane %v1016, %v1022
        %v1024 = vcombine.low %v999, %v1007
        %v1026 = vunpack.c.l.s4 1934713408
        %v1027 = vunpack.c.0.s8 %v1026
        %v1028 = vlaneseq
        %v1029 = vshrl.u32 %v1028, 7
        %v1030 = vsub.s32 %v1027, %v1029
        %v1031 = vrot.slane %v1024, %v1030
        %v1032 = vcombine.low %v1015, %v1023
        %v1034 = vunpack.c.l.s4 1934713408
        %v1035 = vunpack.c.0.s8 %v1034
        %v1036 = vlaneseq
        %v1037 = vshrl.u32 %v1036, 7
        %v1038 = vsub.s32 %v1035, %v1037
        %v1039 = vrot.slane %v1032, %v1038
        %v1040 = vcombine.low %v1031, %v1039
        %v1041 = vcombine.high %v1031, %v1039
        %v1042 = vcombine.low %v964, %v971
        %v1044 = vunpack.c.l.s4 1983009808
        %v1045 = vunpack.c.0.s8 %v1044
        %v1046 = vlaneseq
        %v1047 = vshrl.u32 %v1046, 7
        %v1048 = vsub.s32 %v1045, %v1047
        %v1049 = vrot.slane %v1042, %v1048
        %v1050 = vcombine.low %v988, %v989
        %v1052 = vunpack.c.l.s4 1983009808
        %v1053 = vunpack.c.0.s8 %v1052
        %v1054 = vlaneseq
        %v1055 = vshrl.u32 %v1054, 7
        %v1056 = vsub.s32 %v1053, %v1055
        %v1057 = vrot.slane %v1050, %v1056
        %v1058 = vcombine.low %v980, %v987
        %v1060 = vunpack.c.l.s4 1983009808
        %v1061 = vunpack.c.0.s8 %v1060
        %v1062 = vlaneseq
        %v1063 = vshrl.u32 %v1062, 7
        %v1064 = vsub.s32 %v1061, %v1063
        %v1065 = vrot.slane %v1058, %v1064
        %v1066 = vcombine.low %v990, %v991
        %v1068 = vunpack.c.l.s4 1983009808
        %v1069 = vunpack.c.0.s8 %v1068
        %v1070 = vlaneseq
        %v1071 = vshrl.u32 %v1070, 7
        %v1072 = vsub.s32 %v1069, %v1071
        %v1073 = vrot.slane %v1066, %v1072
        %v1074 = vcombine.low %v1049, %v1057
        %v1076 = vunpack.c.l.s4 1934713408
        %v1077 = vunpack.c.0.s8 %v1076
        %v1078 = vlaneseq
        %v1079 = vshrl.u32 %v1078, 7
        %v1080 = vsub.s32 %v1077, %v1079
        %v1081 = vrot.slane %v1074, %v1080
        %v1082 = vcombine.low %v1065, %v1073
        %v1084 = vunpack.c.l.s4 1934713408
        %v1085 = vunpack.c.0.s8 %v1084
        %v1086 = vlaneseq
        %v1087 = vshrl.u32 %v1086, 7
        %v1088 = vsub.s32 %v1085, %v1087
        %v1089 = vrot.slane %v1082, %v1088
        %v1090 = vcombine.low %v1081, %v1089
        %v1091 = vcombine.high %v1081, %v1089
        %v1094 = vpack.i.b16 %v1090, %v1040
        %v1095 = vshrl.u32 %v1040, 16
        %v1096 = vshrl.u32 %v1090, 16
        %v1097 = vpack.i.b16 %v1096, %v1095
        %v1100 = vpack.i.b16 %v1091, %v1041
        %v1101 = vshrl.u32 %v1041, 16
        %v1102 = vshrl.u32 %v1091, 16
        %v1103 = vpack.i.b16 %v1102, %v1101
        %1104 = vrot.lane.b32.xlu0 %v562, 64
        %v1105 = vpop.permute.xlu0 %1104
        %1106 = vrot.lane.b32.xlu0 %v565, 64
        %v1107 = vpop.permute.xlu0 %1106
        %1108 = vrot.lane.b32.xlu0 %v567, 64
        %v1109 = vpop.permute.xlu0 %1108
        %1110 = vrot.lane.b32.xlu0 %v569, 64
        %v1111 = vpop.permute.xlu0 %1110
        %v1114 = vpack.i.b16 %v1107, %v1105
        %v1116 = vshrl.u32 %v1105, 16
        %v1117 = vshrl.u32 %v1107, 16
        %v1118 = vpack.i.b16 %v1117, %v1116
        %v1122 = vpack.i.b16 %v1111, %v1109
        %v1124 = vshrl.u32 %v1109, 16
        %v1125 = vshrl.u32 %v1111, 16
        %v1126 = vpack.i.b16 %v1125, %v1124
        %v1128 = vcombine.high %v1114, %v587
        %v1130 = vunpack.c.l.s4 1983009808
        %v1131 = vunpack.c.0.s8 %v1130
        %v1132 = vlaneseq
        %v1133 = vshrl.u32 %v1132, 7
        %v1134 = vsub.s32 %v1131, %v1133
        %v1135 = vrot.slane %v1114, %v1134
        %v1137 = vunpack.c.l.s4 1983009808
        %v1138 = vunpack.c.0.s8 %v1137
        %v1139 = vlaneseq
        %v1140 = vshrl.u32 %v1139, 7
        %v1141 = vsub.s32 %v1138, %v1140
        %v1142 = vrot.slane %v1128, %v1141
        %v1143 = vcombine.high %v1122, %v587
        %v1145 = vunpack.c.l.s4 1983009808
        %v1146 = vunpack.c.0.s8 %v1145
        %v1147 = vlaneseq
        %v1148 = vshrl.u32 %v1147, 7
        %v1149 = vsub.s32 %v1146, %v1148
        %v1150 = vrot.slane %v1122, %v1149
        %v1152 = vunpack.c.l.s4 1983009808
        %v1153 = vunpack.c.0.s8 %v1152
        %v1154 = vlaneseq
        %v1155 = vshrl.u32 %v1154, 7
        %v1156 = vsub.s32 %v1153, %v1155
        %v1157 = vrot.slane %v1143, %v1156
        %v1158 = vcombine.low %v1135, %v1150
        %v1159 = vcombine.high %v1135, %v1150
        %v1161 = vunpack.c.l.s4 1934713408
        %v1162 = vunpack.c.0.s8 %v1161
        %v1163 = vlaneseq
        %v1164 = vshrl.u32 %v1163, 7
        %v1165 = vsub.s32 %v1162, %v1164
        %v1166 = vrot.slane %v1158, %v1165
        %v1168 = vunpack.c.l.s4 1934713408
        %v1169 = vunpack.c.0.s8 %v1168
        %v1170 = vlaneseq
        %v1171 = vshrl.u32 %v1170, 7
        %v1172 = vsub.s32 %v1169, %v1171
        %v1173 = vrot.slane %v1159, %v1172
        %v1174 = vcombine.low %v1142, %v1157
        %v1175 = vcombine.high %v1142, %v1157
        %v1177 = vunpack.c.l.s4 1934713408
        %v1178 = vunpack.c.0.s8 %v1177
        %v1179 = vlaneseq
        %v1180 = vshrl.u32 %v1179, 7
        %v1181 = vsub.s32 %v1178, %v1180
        %v1182 = vrot.slane %v1174, %v1181
        %v1184 = vunpack.c.l.s4 1934713408
        %v1185 = vunpack.c.0.s8 %v1184
        %v1186 = vlaneseq
        %v1187 = vshrl.u32 %v1186, 7
        %v1188 = vsub.s32 %v1185, %v1187
        %v1189 = vrot.slane %v1175, %v1188
        %v1190 = vcombine.high %v1166, 0
        %v1191 = vcombine.high %v1173, 0
        %v1192 = vcombine.high %v1182, 0
        %v1193 = vcombine.high %v1189, 0
        %v1194 = vcombine.high %v1118, %v590
        %v1196 = vunpack.c.l.s4 1983009808
        %v1197 = vunpack.c.0.s8 %v1196
        %v1198 = vlaneseq
        %v1199 = vshrl.u32 %v1198, 7
        %v1200 = vsub.s32 %v1197, %v1199
        %v1201 = vrot.slane %v1118, %v1200
        %v1203 = vunpack.c.l.s4 1983009808
        %v1204 = vunpack.c.0.s8 %v1203
        %v1205 = vlaneseq
        %v1206 = vshrl.u32 %v1205, 7
        %v1207 = vsub.s32 %v1204, %v1206
        %v1208 = vrot.slane %v1194, %v1207
        %v1209 = vcombine.high %v1126, %v590
        %v1211 = vunpack.c.l.s4 1983009808
        %v1212 = vunpack.c.0.s8 %v1211
        %v1213 = vlaneseq
        %v1214 = vshrl.u32 %v1213, 7
        %v1215 = vsub.s32 %v1212, %v1214
        %v1216 = vrot.slane %v1126, %v1215
        %v1218 = vunpack.c.l.s4 1983009808
        %v1219 = vunpack.c.0.s8 %v1218
        %v1220 = vlaneseq
        %v1221 = vshrl.u32 %v1220, 7
        %v1222 = vsub.s32 %v1219, %v1221
        %v1223 = vrot.slane %v1209, %v1222
        %v1224 = vcombine.low %v1201, %v1216
        %v1225 = vcombine.high %v1201, %v1216
        %v1227 = vunpack.c.l.s4 1934713408
        %v1228 = vunpack.c.0.s8 %v1227
        %v1229 = vlaneseq
        %v1230 = vshrl.u32 %v1229, 7
        %v1231 = vsub.s32 %v1228, %v1230
        %v1232 = vrot.slane %v1224, %v1231
        %v1234 = vunpack.c.l.s4 1934713408
        %v1235 = vunpack.c.0.s8 %v1234
        %v1236 = vlaneseq
        %v1237 = vshrl.u32 %v1236, 7
        %v1238 = vsub.s32 %v1235, %v1237
        %v1239 = vrot.slane %v1225, %v1238
        %v1240 = vcombine.low %v1208, %v1223
        %v1241 = vcombine.high %v1208, %v1223
        %v1243 = vunpack.c.l.s4 1934713408
        %v1244 = vunpack.c.0.s8 %v1243
        %v1245 = vlaneseq
        %v1246 = vshrl.u32 %v1245, 7
        %v1247 = vsub.s32 %v1244, %v1246
        %v1248 = vrot.slane %v1240, %v1247
        %v1250 = vunpack.c.l.s4 1934713408
        %v1251 = vunpack.c.0.s8 %v1250
        %v1252 = vlaneseq
        %v1253 = vshrl.u32 %v1252, 7
        %v1254 = vsub.s32 %v1251, %v1253
        %v1255 = vrot.slane %v1241, %v1254
        %v1256 = vcombine.high %v1232, 0
        %v1257 = vcombine.high %v1239, 0
        %v1258 = vcombine.high %v1248, 0
        %v1259 = vcombine.high %v1255, 0
        %v1260 = vcombine.low %v1166, %v1173
        %v1262 = vunpack.c.l.s4 1983009808
        %v1263 = vunpack.c.0.s8 %v1262
        %v1264 = vlaneseq
        %v1265 = vshrl.u32 %v1264, 7
        %v1266 = vsub.s32 %v1263, %v1265
        %v1267 = vrot.slane %v1260, %v1266
        %v1268 = vcombine.low %v1190, %v1191
        %v1270 = vunpack.c.l.s4 1983009808
        %v1271 = vunpack.c.0.s8 %v1270
        %v1272 = vlaneseq
        %v1273 = vshrl.u32 %v1272, 7
        %v1274 = vsub.s32 %v1271, %v1273
        %v1275 = vrot.slane %v1268, %v1274
        %v1276 = vcombine.low %v1182, %v1189
        %v1278 = vunpack.c.l.s4 1983009808
        %v1279 = vunpack.c.0.s8 %v1278
        %v1280 = vlaneseq
        %v1281 = vshrl.u32 %v1280, 7
        %v1282 = vsub.s32 %v1279, %v1281
        %v1283 = vrot.slane %v1276, %v1282
        %v1284 = vcombine.low %v1192, %v1193
        %v1286 = vunpack.c.l.s4 1983009808
        %v1287 = vunpack.c.0.s8 %v1286
        %v1288 = vlaneseq
        %v1289 = vshrl.u32 %v1288, 7
        %v1290 = vsub.s32 %v1287, %v1289
        %v1291 = vrot.slane %v1284, %v1290
        %v1292 = vcombine.low %v1267, %v1275
        %v1294 = vunpack.c.l.s4 1934713408
        %v1295 = vunpack.c.0.s8 %v1294
        %v1296 = vlaneseq
        %v1297 = vshrl.u32 %v1296, 7
        %v1298 = vsub.s32 %v1295, %v1297
        %v1299 = vrot.slane %v1292, %v1298
        %v1300 = vcombine.low %v1283, %v1291
        %v1302 = vunpack.c.l.s4 1934713408
        %v1303 = vunpack.c.0.s8 %v1302
        %v1304 = vlaneseq
        %v1305 = vshrl.u32 %v1304, 7
        %v1306 = vsub.s32 %v1303, %v1305
        %v1307 = vrot.slane %v1300, %v1306
        %v1308 = vcombine.low %v1299, %v1307
        %v1309 = vcombine.high %v1299, %v1307
        %v1310 = vcombine.low %v1232, %v1239
        %v1312 = vunpack.c.l.s4 1983009808
        %v1313 = vunpack.c.0.s8 %v1312
        %v1314 = vlaneseq
        %v1315 = vshrl.u32 %v1314, 7
        %v1316 = vsub.s32 %v1313, %v1315
        %v1317 = vrot.slane %v1310, %v1316
        %v1318 = vcombine.low %v1256, %v1257
        %v1320 = vunpack.c.l.s4 1983009808
        %v1321 = vunpack.c.0.s8 %v1320
        %v1322 = vlaneseq
        %v1323 = vshrl.u32 %v1322, 7
        %v1324 = vsub.s32 %v1321, %v1323
        %v1325 = vrot.slane %v1318, %v1324
        %v1326 = vcombine.low %v1248, %v1255
        %v1328 = vunpack.c.l.s4 1983009808
        %v1329 = vunpack.c.0.s8 %v1328
        %v1330 = vlaneseq
        %v1331 = vshrl.u32 %v1330, 7
        %v1332 = vsub.s32 %v1329, %v1331
        %v1333 = vrot.slane %v1326, %v1332
        %v1334 = vcombine.low %v1258, %v1259
        %v1336 = vunpack.c.l.s4 1983009808
        %v1337 = vunpack.c.0.s8 %v1336
        %v1338 = vlaneseq
        %v1339 = vshrl.u32 %v1338, 7
        %v1340 = vsub.s32 %v1337, %v1339
        %v1341 = vrot.slane %v1334, %v1340
        %v1342 = vcombine.low %v1317, %v1325
        %v1344 = vunpack.c.l.s4 1934713408
        %v1345 = vunpack.c.0.s8 %v1344
        %v1346 = vlaneseq
        %v1347 = vshrl.u32 %v1346, 7
        %v1348 = vsub.s32 %v1345, %v1347
        %v1349 = vrot.slane %v1342, %v1348
        %v1350 = vcombine.low %v1333, %v1341
        %v1352 = vunpack.c.l.s4 1934713408
        %v1353 = vunpack.c.0.s8 %v1352
        %v1354 = vlaneseq
        %v1355 = vshrl.u32 %v1354, 7
        %v1356 = vsub.s32 %v1353, %v1355
        %v1357 = vrot.slane %v1350, %v1356
        %v1358 = vcombine.low %v1349, %v1357
        %v1359 = vcombine.high %v1349, %v1357
        %v1362 = vpack.i.b16 %v1358, %v1308
        %v1364 = vshrl.u32 %v1308, 16
        %v1365 = vshrl.u32 %v1358, 16
        %v1366 = vpack.i.b16 %v1365, %v1364
        %v1370 = vpack.i.b16 %v1359, %v1309
        %v1372 = vshrl.u32 %v1309, 16
        %v1373 = vshrl.u32 %v1359, 16
        %v1374 = vpack.i.b16 %v1373, %v1372
        %v1376 = vlaneseq
        %v1377 = vand.u32 %v1376, 127
        %vm1378 = vcmp.ge.s32.totalorder %v1377, 8
        %v1379 = vsel %vm1378, -1e+09, 0.0
        %vm1380 = vcmask 64512
        %v1382 = vsel %vm1380, %v826, 0
        %v1385 = vsel %vm1380, %v1094, 0
        %1387 = vmatprep.subr.bf16.mxu0 0
        %1388 = vmatpush1.bf16.xpose.msra.mxu0 %v1385
        %1389 = vmatprep.subr.bf16.mxu0 0
        %1390 = vmatpush1.bf16.xpose.msra.mxu0 0
        %1391 = vmatprep.subr.bf16.mxu0 0
        %1392 = vmatpush1.bf16.xpose.msra.mxu0 0
        %1393 = vmatprep.subr.bf16.mxu0 0
        %1394 = vmatpush1.bf16.xpose.msra.mxu0 0
        %1395 = vmatprep.subr.bf16.mxu0 0
        %1396 = vmatpush1.bf16.xpose.msra.mxu0 0
        %1397 = vmatprep.subr.bf16.mxu0 0
        %1398 = vmatpush1.bf16.xpose.msra.mxu0 0
        %1399 = vmatprep.subr.bf16.mxu0 0
        %1400 = vmatpush1.bf16.xpose.msra.mxu0 0
        %1401 = vmatprep.subr.bf16.mxu0 0
        %1402 = vmatpush1.bf16.xpose.msra.mxu0 0
        %1403 = vmatprep.subr.bf16.mxu0 0
        %1404 = vmatpush1.bf16.xpose.msra.mxu0 0
        %1405 = vmatprep.subr.bf16.mxu0 0
        %1406 = vmatpush1.bf16.xpose.msra.mxu0 0
        %1407 = vmatprep.subr.bf16.mxu0 0
        %1408 = vmatpush1.bf16.xpose.msra.mxu0 0
        %1409 = vmatprep.subr.bf16.mxu0 0
        %1410 = vmatpush1.bf16.xpose.msra.mxu0 0
        %1411 = vmatprep.subr.bf16.mxu0 0
        %1412 = vmatpush1.bf16.xpose.msra.mxu0 0
        %1413 = vmatprep.subr.bf16.mxu0 0
        %1414 = vmatpush1.bf16.xpose.msra.mxu0 0
        %1415 = vmatprep.subr.bf16.mxu0 0
        %1416 = vmatpush1.bf16.xpose.msra.mxu0 0
        %1417 = vmatprep.subr.bf16.mxu0 0
        %1418 = vmatpush1.bf16.xpose.msra.mxu0 0
        %1419 = vmatprep.mubr.bf16.mxu0 0
        %1420 = vmatmul.mubr.bf16.gmra.mrb[0].mxu0 %v1382
        %v1421 = vpop.f32.mrb[0].mxu0
        %v1422 = vadd.f32 %v1379, %v1421
        %v1423 = vpop.f32.mrb[0].mxu0
        %v1424 = vpop.f32.mrb[0].mxu0
        %v1425 = vadd.f32 %v1379, %v1424
        %v1426 = vpop.f32.mrb[0].mxu0
        %1427 = vdwg.mxu0
        %v1429 = vsel %vm1380, %v829, 0
        %v1432 = vsel %vm1380, %v1097, 0
        %1434 = vmatprep.subr.bf16.mxu0 0
        %1435 = vmatpush1.bf16.xpose.msra.mxu0 %v1432
        %1436 = vmatprep.subr.bf16.mxu0 0
        %1437 = vmatpush1.bf16.xpose.msra.mxu0 0
        %1438 = vmatprep.subr.bf16.mxu0 0
        %1439 = vmatpush1.bf16.xpose.msra.mxu0 0
        %1440 = vmatprep.subr.bf16.mxu0 0
        %1441 = vmatpush1.bf16.xpose.msra.mxu0 0
        %1442 = vmatprep.subr.bf16.mxu0 0
        %1443 = vmatpush1.bf16.xpose.msra.mxu0 0
        %1444 = vmatprep.subr.bf16.mxu0 0
        %1445 = vmatpush1.bf16.xpose.msra.mxu0 0
        %1446 = vmatprep.subr.bf16.mxu0 0
        %1447 = vmatpush1.bf16.xpose.msra.mxu0 0
        %1448 = vmatprep.subr.bf16.mxu0 0
        %1449 = vmatpush1.bf16.xpose.msra.mxu0 0
        %1450 = vmatprep.subr.bf16.mxu0 0
        %1451 = vmatpush1.bf16.xpose.msra.mxu0 0
        %1452 = vmatprep.subr.bf16.mxu0 0
        %1453 = vmatpush1.bf16.xpose.msra.mxu0 0
        %1454 = vmatprep.subr.bf16.mxu0 0
        %1455 = vmatpush1.bf16.xpose.msra.mxu0 0
        %1456 = vmatprep.subr.bf16.mxu0 0
        %1457 = vmatpush1.bf16.xpose.msra.mxu0 0
        %1458 = vmatprep.subr.bf16.mxu0 0
        %1459 = vmatpush1.bf16.xpose.msra.mxu0 0
        %1460 = vmatprep.subr.bf16.mxu0 0
        %1461 = vmatpush1.bf16.xpose.msra.mxu0 0
        %1462 = vmatprep.subr.bf16.mxu0 0
        %1463 = vmatpush1.bf16.xpose.msra.mxu0 0
        %1464 = vmatprep.subr.bf16.mxu0 0
        %1465 = vmatpush1.bf16.xpose.msra.mxu0 0
        %1466 = vmatprep.mubr.bf16.mxu0 0
        %1467 = vmatmul.mubr.bf16.gmra.mrb[0].mxu0 %v1429
        %v1468 = vpop.f32.mrb[0].mxu0
        %v1469 = vadd.f32 %v1379, %v1468
        %v1470 = vpop.f32.mrb[0].mxu0
        %v1471 = vpop.f32.mrb[0].mxu0
        %v1472 = vadd.f32 %v1379, %v1471
        %v1473 = vpop.f32.mrb[0].mxu0
        %1474 = vdwg.mxu0
        %v1476 = vsel %vm1380, %v832, 0
        %v1479 = vsel %vm1380, %v1100, 0
        %1481 = vmatprep.subr.bf16.mxu0 0
        %1482 = vmatpush1.bf16.xpose.msra.mxu0 %v1479
        %1483 = vmatprep.subr.bf16.mxu0 0
        %1484 = vmatpush1.bf16.xpose.msra.mxu0 0
        %1485 = vmatprep.subr.bf16.mxu0 0
        %1486 = vmatpush1.bf16.xpose.msra.mxu0 0
        %1487 = vmatprep.subr.bf16.mxu0 0
        %1488 = vmatpush1.bf16.xpose.msra.mxu0 0
        %1489 = vmatprep.subr.bf16.mxu0 0
        %1490 = vmatpush1.bf16.xpose.msra.mxu0 0
        %1491 = vmatprep.subr.bf16.mxu0 0
        %1492 = vmatpush1.bf16.xpose.msra.mxu0 0
        %1493 = vmatprep.subr.bf16.mxu0 0
        %1494 = vmatpush1.bf16.xpose.msra.mxu0 0
        %1495 = vmatprep.subr.bf16.mxu0 0
        %1496 = vmatpush1.bf16.xpose.msra.mxu0 0
        %1497 = vmatprep.subr.bf16.mxu0 0
        %1498 = vmatpush1.bf16.xpose.msra.mxu0 0
        %1499 = vmatprep.subr.bf16.mxu0 0
        %1500 = vmatpush1.bf16.xpose.msra.mxu0 0
        %1501 = vmatprep.subr.bf16.mxu0 0
        %1502 = vmatpush1.bf16.xpose.msra.mxu0 0
        %1503 = vmatprep.subr.bf16.mxu0 0
        %1504 = vmatpush1.bf16.xpose.msra.mxu0 0
        %1505 = vmatprep.subr.bf16.mxu0 0
        %1506 = vmatpush1.bf16.xpose.msra.mxu0 0
        %1507 = vmatprep.subr.bf16.mxu0 0
        %1508 = vmatpush1.bf16.xpose.msra.mxu0 0
        %1509 = vmatprep.subr.bf16.mxu0 0
        %1510 = vmatpush1.bf16.xpose.msra.mxu0 0
        %1511 = vmatprep.subr.bf16.mxu0 0
        %1512 = vmatpush1.bf16.xpose.msra.mxu0 0
        %1513 = vmatprep.mubr.bf16.mxu0 0
        %1514 = vmatmul.mubr.bf16.gmra.mrb[0].mxu0 %v1476
        %v1515 = vpop.f32.mrb[0].mxu0
        %v1516 = vadd.f32 %v1379, %v1515
        %v1517 = vpop.f32.mrb[0].mxu0
        %v1518 = vpop.f32.mrb[0].mxu0
        %v1519 = vadd.f32 %v1379, %v1518
        %v1520 = vpop.f32.mrb[0].mxu0
        %1521 = vdwg.mxu0
        %v1523 = vsel %vm1380, %v835, 0
        %v1526 = vsel %vm1380, %v1103, 0
        %1528 = vmatprep.subr.bf16.mxu0 0
        %1529 = vmatpush1.bf16.xpose.msra.mxu0 %v1526
        %1530 = vmatprep.subr.bf16.mxu0 0
        %1531 = vmatpush1.bf16.xpose.msra.mxu0 0
        %1532 = vmatprep.subr.bf16.mxu0 0
        %1533 = vmatpush1.bf16.xpose.msra.mxu0 0
        %1534 = vmatprep.subr.bf16.mxu0 0
        %1535 = vmatpush1.bf16.xpose.msra.mxu0 0
        %1536 = vmatprep.subr.bf16.mxu0 0
        %1537 = vmatpush1.bf16.xpose.msra.mxu0 0
        %1538 = vmatprep.subr.bf16.mxu0 0
        %1539 = vmatpush1.bf16.xpose.msra.mxu0 0
        %1540 = vmatprep.subr.bf16.mxu0 0
        %1541 = vmatpush1.bf16.xpose.msra.mxu0 0
        %1542 = vmatprep.subr.bf16.mxu0 0
        %1543 = vmatpush1.bf16.xpose.msra.mxu0 0
        %1544 = vmatprep.subr.bf16.mxu0 0
        %1545 = vmatpush1.bf16.xpose.msra.mxu0 0
        %1546 = vmatprep.subr.bf16.mxu0 0
        %1547 = vmatpush1.bf16.xpose.msra.mxu0 0
        %1548 = vmatprep.subr.bf16.mxu0 0
        %1549 = vmatpush1.bf16.xpose.msra.mxu0 0
        %1550 = vmatprep.subr.bf16.mxu0 0
        %1551 = vmatpush1.bf16.xpose.msra.mxu0 0
        %1552 = vmatprep.subr.bf16.mxu0 0
        %1553 = vmatpush1.bf16.xpose.msra.mxu0 0
        %1554 = vmatprep.subr.bf16.mxu0 0
        %1555 = vmatpush1.bf16.xpose.msra.mxu0 0
        %1556 = vmatprep.subr.bf16.mxu0 0
        %1557 = vmatpush1.bf16.xpose.msra.mxu0 0
        %1558 = vmatprep.subr.bf16.mxu0 0
        %1559 = vmatpush1.bf16.xpose.msra.mxu0 0
        %1560 = vmatprep.mubr.bf16.mxu0 0
        %1561 = vmatmul.mubr.bf16.gmra.mrb[0].mxu0 %v1523
        %v1562 = vpop.f32.mrb[0].mxu0
        %v1563 = vadd.f32 %v1379, %v1562
        %v1564 = vpop.f32.mrb[0].mxu0
        %v1565 = vpop.f32.mrb[0].mxu0
        %v1566 = vadd.f32 %v1379, %v1565
        %v1567 = vpop.f32.mrb[0].mxu0
        %1568 = vdwg.mxu0
        %vm1569 = vcmask 130048
        %v1570 = vsel %vm1569, %v1422, -inf
        %1571 = vmax.xlane.f32.xlu0 %v1570
        %v1572 = vpop.xlane.xlu0 %1571
        %v1573 = vsel %vm1569, %v1425, -inf
        %1574 = vmax.xlane.f32.xlu0 %v1573
        %v1575 = vpop.xlane.xlu0 %1574
        %v1576 = vsel %vm1569, %v1469, -inf
        %1577 = vmax.xlane.f32.xlu0 %v1576
        %v1578 = vpop.xlane.xlu0 %1577
        %v1579 = vsel %vm1569, %v1472, -inf
        %1580 = vmax.xlane.f32.xlu0 %v1579
        %v1581 = vpop.xlane.xlu0 %1580
        %v1582 = vsel %vm1569, %v1516, -inf
        %1583 = vmax.xlane.f32.xlu0 %v1582
        %v1584 = vpop.xlane.xlu0 %1583
        %v1585 = vsel %vm1569, %v1519, -inf
        %1586 = vmax.xlane.f32.xlu0 %v1585
        %v1587 = vpop.xlane.xlu0 %1586
        %v1588 = vsel %vm1569, %v1563, -inf
        %1589 = vmax.xlane.f32.xlu0 %v1588
        %v1590 = vpop.xlane.xlu0 %1589
        %v1591 = vsel %vm1569, %v1566, -inf
        %1592 = vmax.xlane.f32.xlu0 %v1591
        %v1593 = vpop.xlane.xlu0 %1592
        %v1594 = vsub.f32 %v1422, %v1572
        %v1595 = vsub.f32 %v1425, %v1575
        %v1596 = vsub.f32 %v1469, %v1578
        %v1597 = vsub.f32 %v1472, %v1581
        %v1598 = vsub.f32 %v1516, %v1584
        %v1599 = vsub.f32 %v1519, %v1587
        %v1600 = vsub.f32 %v1563, %v1590
        %v1601 = vsub.f32 %v1566, %v1593
        %v1602 = vmul.f32 %v1594, 1.442695
        %v1603 = vpow.pop %v1602
        %v1604 = vmul.f32 %v1595, 1.442695
        %v1605 = vpow.pop %v1604
        %v1606 = vmul.f32 %v1596, 1.442695
        %v1607 = vpow.pop %v1606
        %v1608 = vmul.f32 %v1597, 1.442695
        %v1609 = vpow.pop %v1608
        %v1610 = vmul.f32 %v1598, 1.442695
        %v1611 = vpow.pop %v1610
        %v1612 = vmul.f32 %v1599, 1.442695
        %v1613 = vpow.pop %v1612
        %v1614 = vmul.f32 %v1600, 1.442695
        %v1615 = vpow.pop %v1614
        %v1616 = vmul.f32 %v1601, 1.442695
        %v1617 = vpow.pop %v1616
        %v1618 = vsel %vm1569, %v1603, 0.0
        %1619 = vadd.xlane.f32.xlu0 %v1618
        %v1620 = vpop.xlane.xlu0 %1619
        %v1621 = vsel %vm1569, %v1605, 0.0
        %1622 = vadd.xlane.f32.xlu0 %v1621
        %v1623 = vpop.xlane.xlu0 %1622
        %v1624 = vsel %vm1569, %v1607, 0.0
        %1625 = vadd.xlane.f32.xlu0 %v1624
        %v1626 = vpop.xlane.xlu0 %1625
        %v1627 = vsel %vm1569, %v1609, 0.0
        %1628 = vadd.xlane.f32.xlu0 %v1627
        %v1629 = vpop.xlane.xlu0 %1628
        %v1630 = vsel %vm1569, %v1611, 0.0
        %1631 = vadd.xlane.f32.xlu0 %v1630
        %v1632 = vpop.xlane.xlu0 %1631
        %v1633 = vsel %vm1569, %v1613, 0.0
        %1634 = vadd.xlane.f32.xlu0 %v1633
        %v1635 = vpop.xlane.xlu0 %1634
        %v1636 = vsel %vm1569, %v1615, 0.0
        %1637 = vadd.xlane.f32.xlu0 %v1636
        %v1638 = vpop.xlane.xlu0 %1637
        %v1639 = vsel %vm1569, %v1617, 0.0
        %1640 = vadd.xlane.f32.xlu0 %v1639
        %v1641 = vpop.xlane.xlu0 %1640
        %v1642 = vrcp.pop %v1620
        %v1643 = vrcp.pop %v1623
        %v1644 = vrcp.pop %v1626
        %v1645 = vrcp.pop %v1629
        %v1646 = vrcp.pop %v1632
        %v1647 = vrcp.pop %v1635
        %v1648 = vrcp.pop %v1638
        %v1649 = vrcp.pop %v1641
        %v1650 = vmul.f32 %v1603, %v1642
        %v1651 = vmul.f32 %v1605, %v1643
        %v1652 = vmul.f32 %v1607, %v1644
        %v1653 = vmul.f32 %v1609, %v1645
        %v1654 = vmul.f32 %v1611, %v1646
        %v1655 = vmul.f32 %v1613, %v1647
        %v1656 = vmul.f32 %v1615, %v1648
        %v1657 = vmul.f32 %v1617, %v1649
        %v1658 = vpack.c.bf16 %v1651, %v1650
        %v1659 = vpack.c.bf16 %v1653, %v1652
        %v1660 = vpack.c.bf16 %v1655, %v1654
        %v1661 = vpack.c.bf16 %v1657, %v1656
        %v1663 = vsel %vm1569, %v1658, 0
        %1665 = vmatprep.subr.bf16.mxu0 0
        %1666 = vmatpush1.bf16.msra.mxu0 %v1362
        %1667 = vmatprep.subr.bf16.mxu0 0
        %1668 = vmatpush1.bf16.msra.mxu0 0
        %1669 = vmatprep.subr.bf16.mxu0 0
        %1670 = vmatpush1.bf16.msra.mxu0 0
        %1671 = vmatprep.subr.bf16.mxu0 0
        %1672 = vmatpush1.bf16.msra.mxu0 0
        %1673 = vmatprep.subr.bf16.mxu0 0
        %1674 = vmatpush1.bf16.msra.mxu0 0
        %1675 = vmatprep.subr.bf16.mxu0 0
        %1676 = vmatpush1.bf16.msra.mxu0 0
        %1677 = vmatprep.subr.bf16.mxu0 0
        %1678 = vmatpush1.bf16.msra.mxu0 0
        %1679 = vmatprep.subr.bf16.mxu0 0
        %1680 = vmatpush1.bf16.msra.mxu0 0
        %1681 = vmatprep.subr.bf16.mxu0 0
        %1682 = vmatpush1.bf16.msra.mxu0 0
        %1683 = vmatprep.subr.bf16.mxu0 0
        %1684 = vmatpush1.bf16.msra.mxu0 0
        %1685 = vmatprep.subr.bf16.mxu0 0
        %1686 = vmatpush1.bf16.msra.mxu0 0
        %1687 = vmatprep.subr.bf16.mxu0 0
        %1688 = vmatpush1.bf16.msra.mxu0 0
        %1689 = vmatprep.subr.bf16.mxu0 0
        %1690 = vmatpush1.bf16.msra.mxu0 0
        %1691 = vmatprep.subr.bf16.mxu0 0
        %1692 = vmatpush1.bf16.msra.mxu0 0
        %1693 = vmatprep.subr.bf16.mxu0 0
        %1694 = vmatpush1.bf16.msra.mxu0 0
        %1695 = vmatprep.subr.bf16.mxu0 0
        %1696 = vmatpush1.bf16.msra.mxu0 0
        %1697 = vmatprep.mubr.bf16.mxu0 0
        %1698 = vmatmul.mubr.bf16.gmra.mrb[0].mxu0 %v1663
        %v1699 = vpop.f32.mrb[0].mxu0
        %v1700 = vadd.f32 0.0, %v1699
        %v1701 = vpop.f32.mrb[0].mxu0
        %v1702 = vpop.f32.mrb[0].mxu0
        %v1703 = vadd.f32 0.0, %v1702
        %v1704 = vpop.f32.mrb[0].mxu0
        %1705 = vdwg.mxu0
        %v1707 = vsel %vm1569, %v1659, 0
        %1709 = vmatprep.subr.bf16.mxu0 0
        %1710 = vmatpush1.bf16.msra.mxu0 %v1366
        %1711 = vmatprep.subr.bf16.mxu0 0
        %1712 = vmatpush1.bf16.msra.mxu0 0
        %1713 = vmatprep.subr.bf16.mxu0 0
        %1714 = vmatpush1.bf16.msra.mxu0 0
        %1715 = vmatprep.subr.bf16.mxu0 0
        %1716 = vmatpush1.bf16.msra.mxu0 0
        %1717 = vmatprep.subr.bf16.mxu0 0
        %1718 = vmatpush1.bf16.msra.mxu0 0
        %1719 = vmatprep.subr.bf16.mxu0 0
        %1720 = vmatpush1.bf16.msra.mxu0 0
        %1721 = vmatprep.subr.bf16.mxu0 0
        %1722 = vmatpush1.bf16.msra.mxu0 0
        %1723 = vmatprep.subr.bf16.mxu0 0
        %1724 = vmatpush1.bf16.msra.mxu0 0
        %1725 = vmatprep.subr.bf16.mxu0 0
        %1726 = vmatpush1.bf16.msra.mxu0 0
        %1727 = vmatprep.subr.bf16.mxu0 0
        %1728 = vmatpush1.bf16.msra.mxu0 0
        %1729 = vmatprep.subr.bf16.mxu0 0
        %1730 = vmatpush1.bf16.msra.mxu0 0
        %1731 = vmatprep.subr.bf16.mxu0 0
        %1732 = vmatpush1.bf16.msra.mxu0 0
        %1733 = vmatprep.subr.bf16.mxu0 0
        %1734 = vmatpush1.bf16.msra.mxu0 0
        %1735 = vmatprep.subr.bf16.mxu0 0
        %1736 = vmatpush1.bf16.msra.mxu0 0
        %1737 = vmatprep.subr.bf16.mxu0 0
        %1738 = vmatpush1.bf16.msra.mxu0 0
        %1739 = vmatprep.subr.bf16.mxu0 0
        %1740 = vmatpush1.bf16.msra.mxu0 0
        %1741 = vmatprep.mubr.bf16.mxu0 0
        %1742 = vmatmul.mubr.bf16.gmra.mrb[0].mxu0 %v1707
        %v1743 = vpop.f32.mrb[0].mxu0
        %v1744 = vadd.f32 0.0, %v1743
        %v1745 = vpop.f32.mrb[0].mxu0
        %v1746 = vpop.f32.mrb[0].mxu0
        %v1747 = vadd.f32 0.0, %v1746
        %v1748 = vpop.f32.mrb[0].mxu0
        %1749 = vdwg.mxu0
        %v1751 = vsel %vm1569, %v1660, 0
        %1753 = vmatprep.subr.bf16.mxu0 0
        %1754 = vmatpush1.bf16.msra.mxu0 %v1370
        %1755 = vmatprep.subr.bf16.mxu0 0
        %1756 = vmatpush1.bf16.msra.mxu0 0
        %1757 = vmatprep.subr.bf16.mxu0 0
        %1758 = vmatpush1.bf16.msra.mxu0 0
        %1759 = vmatprep.subr.bf16.mxu0 0
        %1760 = vmatpush1.bf16.msra.mxu0 0
        %1761 = vmatprep.subr.bf16.mxu0 0
        %1762 = vmatpush1.bf16.msra.mxu0 0
        %1763 = vmatprep.subr.bf16.mxu0 0
        %1764 = vmatpush1.bf16.msra.mxu0 0
        %1765 = vmatprep.subr.bf16.mxu0 0
        %1766 = vmatpush1.bf16.msra.mxu0 0
        %1767 = vmatprep.subr.bf16.mxu0 0
        %1768 = vmatpush1.bf16.msra.mxu0 0
        %1769 = vmatprep.subr.bf16.mxu0 0
        %1770 = vmatpush1.bf16.msra.mxu0 0
        %1771 = vmatprep.subr.bf16.mxu0 0
        %1772 = vmatpush1.bf16.msra.mxu0 0
        %1773 = vmatprep.subr.bf16.mxu0 0
        %1774 = vmatpush1.bf16.msra.mxu0 0
        %1775 = vmatprep.subr.bf16.mxu0 0
        %1776 = vmatpush1.bf16.msra.mxu0 0
        %1777 = vmatprep.subr.bf16.mxu0 0
        %1778 = vmatpush1.bf16.msra.mxu0 0
        %1779 = vmatprep.subr.bf16.mxu0 0
        %1780 = vmatpush1.bf16.msra.mxu0 0
        %1781 = vmatprep.subr.bf16.mxu0 0
        %1782 = vmatpush1.bf16.msra.mxu0 0
        %1783 = vmatprep.subr.bf16.mxu0 0
        %1784 = vmatpush1.bf16.msra.mxu0 0
        %1785 = vmatprep.mubr.bf16.mxu0 0
        %1786 = vmatmul.mubr.bf16.gmra.mrb[0].mxu0 %v1751
        %v1787 = vpop.f32.mrb[0].mxu0
        %v1788 = vadd.f32 0.0, %v1787
        %v1789 = vpop.f32.mrb[0].mxu0
        %v1790 = vpop.f32.mrb[0].mxu0
        %v1791 = vadd.f32 0.0, %v1790
        %v1792 = vpop.f32.mrb[0].mxu0
        %1793 = vdwg.mxu0
        %v1795 = vsel %vm1569, %v1661, 0
        %1797 = vmatprep.subr.bf16.mxu0 0
        %1798 = vmatpush1.bf16.msra.mxu0 %v1374
        %1799 = vmatprep.subr.bf16.mxu0 0
        %1800 = vmatpush1.bf16.msra.mxu0 0
        %1801 = vmatprep.subr.bf16.mxu0 0
        %1802 = vmatpush1.bf16.msra.mxu0 0
        %1803 = vmatprep.subr.bf16.mxu0 0
        %1804 = vmatpush1.bf16.msra.mxu0 0
        %1805 = vmatprep.subr.bf16.mxu0 0
        %1806 = vmatpush1.bf16.msra.mxu0 0
        %1807 = vmatprep.subr.bf16.mxu0 0
        %1808 = vmatpush1.bf16.msra.mxu0 0
        %1809 = vmatprep.subr.bf16.mxu0 0
        %1810 = vmatpush1.bf16.msra.mxu0 0
        %1811 = vmatprep.subr.bf16.mxu0 0
        %1812 = vmatpush1.bf16.msra.mxu0 0
        %1813 = vmatprep.subr.bf16.mxu0 0
        %1814 = vmatpush1.bf16.msra.mxu0 0
        %1815 = vmatprep.subr.bf16.mxu0 0
        %1816 = vmatpush1.bf16.msra.mxu0 0
        %1817 = vmatprep.subr.bf16.mxu0 0
        %1818 = vmatpush1.bf16.msra.mxu0 0
        %1819 = vmatprep.subr.bf16.mxu0 0
        %1820 = vmatpush1.bf16.msra.mxu0 0
        %1821 = vmatprep.subr.bf16.mxu0 0
        %1822 = vmatpush1.bf16.msra.mxu0 0
        %1823 = vmatprep.subr.bf16.mxu0 0
        %1824 = vmatpush1.bf16.msra.mxu0 0
        %1825 = vmatprep.subr.bf16.mxu0 0
        %1826 = vmatpush1.bf16.msra.mxu0 0
        %1827 = vmatprep.subr.bf16.mxu0 0
        %1828 = vmatpush1.bf16.msra.mxu0 0
        %1829 = vmatprep.mubr.bf16.mxu0 0
        %1830 = vmatmul.mubr.bf16.gmra.mrb[0].mxu0 %v1795
        %v1831 = vpop.f32.mrb[0].mxu0
        %v1832 = vadd.f32 0.0, %v1831
        %v1833 = vpop.f32.mrb[0].mxu0
        %v1834 = vpop.f32.mrb[0].mxu0
        %v1835 = vadd.f32 0.0, %v1834
        %v1836 = vpop.f32.mrb[0].mxu0
        %1837 = vdwg.mxu0
        %v1838 = vcombine.low %v1700, %v1788
        %v1839 = vcombine.high %v1700, %v1788
        %v1841 = vunpack.c.l.s4 1983009808
        %v1842 = vunpack.c.0.s8 %v1841
        %v1843 = vlaneseq
        %v1844 = vshrl.u32 %v1843, 7
        %v1845 = vsub.s32 %v1842, %v1844
        %v1846 = vrot.slane %v1838, %v1845
        %v1848 = vunpack.c.l.s4 1983009808
        %v1849 = vunpack.c.0.s8 %v1848
        %v1850 = vlaneseq
        %v1851 = vshrl.u32 %v1850, 7
        %v1852 = vsub.s32 %v1849, %v1851
        %v1853 = vrot.slane %v1839, %v1852
        %v1854 = vcombine.low %v1744, %v1832
        %v1855 = vcombine.high %v1744, %v1832
        %v1857 = vunpack.c.l.s4 1983009808
        %v1858 = vunpack.c.0.s8 %v1857
        %v1859 = vlaneseq
        %v1860 = vshrl.u32 %v1859, 7
        %v1861 = vsub.s32 %v1858, %v1860
        %v1862 = vrot.slane %v1854, %v1861
        %v1864 = vunpack.c.l.s4 1983009808
        %v1865 = vunpack.c.0.s8 %v1864
        %v1866 = vlaneseq
        %v1867 = vshrl.u32 %v1866, 7
        %v1868 = vsub.s32 %v1865, %v1867
        %v1869 = vrot.slane %v1855, %v1868
        %v1870 = vcombine.low %v1846, %v1862
        %v1871 = vcombine.high %v1846, %v1862
        %v1873 = vunpack.c.l.s4 1934713408
        %v1874 = vunpack.c.0.s8 %v1873
        %v1875 = vlaneseq
        %v1876 = vshrl.u32 %v1875, 7
        %v1877 = vsub.s32 %v1874, %v1876
        %v1878 = vrot.slane %v1870, %v1877
        %v1880 = vunpack.c.l.s4 1934713408
        %v1881 = vunpack.c.0.s8 %v1880
        %v1882 = vlaneseq
        %v1883 = vshrl.u32 %v1882, 7
        %v1884 = vsub.s32 %v1881, %v1883
        %v1885 = vrot.slane %v1871, %v1884
        %v1886 = vcombine.low %v1853, %v1869
        %v1887 = vcombine.high %v1853, %v1869
        %v1889 = vunpack.c.l.s4 1934713408
        %v1890 = vunpack.c.0.s8 %v1889
        %v1891 = vlaneseq
        %v1892 = vshrl.u32 %v1891, 7
        %v1893 = vsub.s32 %v1890, %v1892
        %v1894 = vrot.slane %v1886, %v1893
        %v1896 = vunpack.c.l.s4 1934713408
        %v1897 = vunpack.c.0.s8 %v1896
        %v1898 = vlaneseq
        %v1899 = vshrl.u32 %v1898, 7
        %v1900 = vsub.s32 %v1897, %v1899
        %v1901 = vrot.slane %v1887, %v1900
        %v1902 = vcombine.high %v1878, 0.0
        %v1903 = vcombine.high %v1885, 0.0
        %v1904 = vcombine.high %v1894, 0.0
        %v1905 = vcombine.high %v1901, 0.0
        %v1906 = vcombine.low %v1703, %v1791
        %v1907 = vcombine.high %v1703, %v1791
        %v1909 = vunpack.c.l.s4 1983009808
        %v1910 = vunpack.c.0.s8 %v1909
        %v1911 = vlaneseq
        %v1912 = vshrl.u32 %v1911, 7
        %v1913 = vsub.s32 %v1910, %v1912
        %v1914 = vrot.slane %v1906, %v1913
        %v1916 = vunpack.c.l.s4 1983009808
        %v1917 = vunpack.c.0.s8 %v1916
        %v1918 = vlaneseq
        %v1919 = vshrl.u32 %v1918, 7
        %v1920 = vsub.s32 %v1917, %v1919
        %v1921 = vrot.slane %v1907, %v1920
        %v1922 = vcombine.low %v1747, %v1835
        %v1923 = vcombine.high %v1747, %v1835
        %v1925 = vunpack.c.l.s4 1983009808
        %v1926 = vunpack.c.0.s8 %v1925
        %v1927 = vlaneseq
        %v1928 = vshrl.u32 %v1927, 7
        %v1929 = vsub.s32 %v1926, %v1928
        %v1930 = vrot.slane %v1922, %v1929
        %v1932 = vunpack.c.l.s4 1983009808
        %v1933 = vunpack.c.0.s8 %v1932
        %v1934 = vlaneseq
        %v1935 = vshrl.u32 %v1934, 7
        %v1936 = vsub.s32 %v1933, %v1935
        %v1937 = vrot.slane %v1923, %v1936
        %v1938 = vcombine.low %v1914, %v1930
        %v1939 = vcombine.high %v1914, %v1930
        %v1941 = vunpack.c.l.s4 1934713408
        %v1942 = vunpack.c.0.s8 %v1941
        %v1943 = vlaneseq
        %v1944 = vshrl.u32 %v1943, 7
        %v1945 = vsub.s32 %v1942, %v1944
        %v1946 = vrot.slane %v1938, %v1945
        %v1948 = vunpack.c.l.s4 1934713408
        %v1949 = vunpack.c.0.s8 %v1948
        %v1950 = vlaneseq
        %v1951 = vshrl.u32 %v1950, 7
        %v1952 = vsub.s32 %v1949, %v1951
        %v1953 = vrot.slane %v1939, %v1952
        %v1954 = vcombine.low %v1921, %v1937
        %v1955 = vcombine.high %v1921, %v1937
        %v1957 = vunpack.c.l.s4 1934713408
        %v1958 = vunpack.c.0.s8 %v1957
        %v1959 = vlaneseq
        %v1960 = vshrl.u32 %v1959, 7
        %v1961 = vsub.s32 %v1958, %v1960
        %v1962 = vrot.slane %v1954, %v1961
        %v1964 = vunpack.c.l.s4 1934713408
        %v1965 = vunpack.c.0.s8 %v1964
        %v1966 = vlaneseq
        %v1967 = vshrl.u32 %v1966, 7
        %v1968 = vsub.s32 %v1965, %v1967
        %v1969 = vrot.slane %v1955, %v1968
        %v1970 = vcombine.high %v1946, 0.0
        %v1971 = vcombine.high %v1953, 0.0
        %v1972 = vcombine.high %v1962, 0.0
        %v1973 = vcombine.high %v1969, 0.0
        %v1974 = vcombine.low %v1878, %v1885
        %v1976 = vunpack.c.l.s4 1983009808
        %v1977 = vunpack.c.0.s8 %v1976
        %v1978 = vlaneseq
        %v1979 = vshrl.u32 %v1978, 7
        %v1980 = vsub.s32 %v1977, %v1979
        %v1981 = vrot.slane %v1974, %v1980
        %v1982 = vcombine.low %v1902, %v1903
        %v1984 = vunpack.c.l.s4 1983009808
        %v1985 = vunpack.c.0.s8 %v1984
        %v1986 = vlaneseq
        %v1987 = vshrl.u32 %v1986, 7
        %v1988 = vsub.s32 %v1985, %v1987
        %v1989 = vrot.slane %v1982, %v1988
        %v1990 = vcombine.low %v1894, %v1901
        %v1992 = vunpack.c.l.s4 1983009808
        %v1993 = vunpack.c.0.s8 %v1992
        %v1994 = vlaneseq
        %v1995 = vshrl.u32 %v1994, 7
        %v1996 = vsub.s32 %v1993, %v1995
        %v1997 = vrot.slane %v1990, %v1996
        %v1998 = vcombine.low %v1904, %v1905
        %v2000 = vunpack.c.l.s4 1983009808
        %v2001 = vunpack.c.0.s8 %v2000
        %v2002 = vlaneseq
        %v2003 = vshrl.u32 %v2002, 7
        %v2004 = vsub.s32 %v2001, %v2003
        %v2005 = vrot.slane %v1998, %v2004
        %v2006 = vcombine.low %v1981, %v1989
        %v2007 = vcombine.high %v1981, %v1989
        %v2009 = vunpack.c.l.s4 1934713408
        %v2010 = vunpack.c.0.s8 %v2009
        %v2011 = vlaneseq
        %v2012 = vshrl.u32 %v2011, 7
        %v2013 = vsub.s32 %v2010, %v2012
        %v2014 = vrot.slane %v2006, %v2013
        %v2016 = vunpack.c.l.s4 1934713408
        %v2017 = vunpack.c.0.s8 %v2016
        %v2018 = vlaneseq
        %v2019 = vshrl.u32 %v2018, 7
        %v2020 = vsub.s32 %v2017, %v2019
        %v2021 = vrot.slane %v2007, %v2020
        %v2022 = vcombine.low %v1997, %v2005
        %v2023 = vcombine.high %v1997, %v2005
        %v2025 = vunpack.c.l.s4 1934713408
        %v2026 = vunpack.c.0.s8 %v2025
        %v2027 = vlaneseq
        %v2028 = vshrl.u32 %v2027, 7
        %v2029 = vsub.s32 %v2026, %v2028
        %v2030 = vrot.slane %v2022, %v2029
        %v2032 = vunpack.c.l.s4 1934713408
        %v2033 = vunpack.c.0.s8 %v2032
        %v2034 = vlaneseq
        %v2035 = vshrl.u32 %v2034, 7
        %v2036 = vsub.s32 %v2033, %v2035
        %v2037 = vrot.slane %v2023, %v2036
        %v2038 = vcombine.low %v2014, %v2030
        %v2039 = vcombine.high %v2014, %v2030
        %v2040 = vcombine.low %v2021, %v2037
        %v2041 = vcombine.high %v2021, %v2037
        %v2042 = vcombine.low %v1946, %v1953
        %v2044 = vunpack.c.l.s4 1983009808
        %v2045 = vunpack.c.0.s8 %v2044
        %v2046 = vlaneseq
        %v2047 = vshrl.u32 %v2046, 7
        %v2048 = vsub.s32 %v2045, %v2047
        %v2049 = vrot.slane %v2042, %v2048
        %v2050 = vcombine.low %v1970, %v1971
        %v2052 = vunpack.c.l.s4 1983009808
        %v2053 = vunpack.c.0.s8 %v2052
        %v2054 = vlaneseq
        %v2055 = vshrl.u32 %v2054, 7
        %v2056 = vsub.s32 %v2053, %v2055
        %v2057 = vrot.slane %v2050, %v2056
        %v2058 = vcombine.low %v1962, %v1969
        %v2060 = vunpack.c.l.s4 1983009808
        %v2061 = vunpack.c.0.s8 %v2060
        %v2062 = vlaneseq
        %v2063 = vshrl.u32 %v2062, 7
        %v2064 = vsub.s32 %v2061, %v2063
        %v2065 = vrot.slane %v2058, %v2064
        %v2066 = vcombine.low %v1972, %v1973
        %v2068 = vunpack.c.l.s4 1983009808
        %v2069 = vunpack.c.0.s8 %v2068
        %v2070 = vlaneseq
        %v2071 = vshrl.u32 %v2070, 7
        %v2072 = vsub.s32 %v2069, %v2071
        %v2073 = vrot.slane %v2066, %v2072
        %v2074 = vcombine.low %v2049, %v2057
        %v2075 = vcombine.high %v2049, %v2057
        %v2077 = vunpack.c.l.s4 1934713408
        %v2078 = vunpack.c.0.s8 %v2077
        %v2079 = vlaneseq
        %v2080 = vshrl.u32 %v2079, 7
        %v2081 = vsub.s32 %v2078, %v2080
        %v2082 = vrot.slane %v2074, %v2081
        %v2084 = vunpack.c.l.s4 1934713408
        %v2085 = vunpack.c.0.s8 %v2084
        %v2086 = vlaneseq
        %v2087 = vshrl.u32 %v2086, 7
        %v2088 = vsub.s32 %v2085, %v2087
        %v2089 = vrot.slane %v2075, %v2088
        %v2090 = vcombine.low %v2065, %v2073
        %v2091 = vcombine.high %v2065, %v2073
        %v2093 = vunpack.c.l.s4 1934713408
        %v2094 = vunpack.c.0.s8 %v2093
        %v2095 = vlaneseq
        %v2096 = vshrl.u32 %v2095, 7
        %v2097 = vsub.s32 %v2094, %v2096
        %v2098 = vrot.slane %v2090, %v2097
        %v2100 = vunpack.c.l.s4 1934713408
        %v2101 = vunpack.c.0.s8 %v2100
        %v2102 = vlaneseq
        %v2103 = vshrl.u32 %v2102, 7
        %v2104 = vsub.s32 %v2101, %v2103
        %v2105 = vrot.slane %v2091, %v2104
        %v2106 = vcombine.low %v2082, %v2098
        %v2107 = vcombine.high %v2082, %v2098
        %v2108 = vcombine.low %v2089, %v2105
        %v2109 = vcombine.high %v2089, %v2105
        %2112 = vrot.lane.b32.xlu0 %v2039, 8
        %v2113 = vpop.permute.xlu0 %2112
        %2114 = vrot.lane.b32.xlu0 %v2107, 8
        %v2115 = vpop.permute.xlu0 %2114
        %2120 = vrot.lane.b32.xlu0 %v2040, 16
        %v2121 = vpop.permute.xlu0 %2120
        %2122 = vrot.lane.b32.xlu0 %v2108, 16
        %v2123 = vpop.permute.xlu0 %2122
        %2128 = vrot.lane.b32.xlu0 %v2041, 24
        %v2129 = vpop.permute.xlu0 %2128
        %2130 = vrot.lane.b32.xlu0 %v2109, 24
        %v2131 = vpop.permute.xlu0 %2130
        %v2134 = vsel %vm1380, %v2038, %v2113
        %v2135 = vsel %vm1380, %v2106, %v2115
        %v2136 = vsel %vm1569, %v2134, %v2121
        %v2137 = vsel %vm1569, %v2135, %v2123
        %vm2138 = vcmask 195584
        %v2139 = vsel %vm2138, %v2136, %v2129
        %v2140 = vsel %vm2138, %v2137, %v2131
        %v2141 = vpack.c.bf16 %v2140, %v2139
        %v2142 = vld [vmem:[%s5] sm:$0xf]
        %v2143 = vld [vmem:[%s5 + $0x4] sm:$0xf]
        %v2144 = vld [vmem:[%s5 + $0x8] sm:$0xf]
        %v2145 = vld [vmem:[%s5 + $0xc] sm:$0xf]
        %v2146 = vld [vmem:[%s6] sm:$0x1]
        %v2148 = vlaneseq
        %v2149 = vshrl.u32 %v2148, 7
        %v2150 = vsub.s32 0, %v2149
        %v2151 = vrot.slane %v2146, %v2150
        %v2157 = vunpack.c.l.b16 %v2142
        %v2158 = vunpack.c.l.b16 %v2143
        %v2159 = vunpack.c.l.b16 %v2144
        %v2160 = vunpack.c.l.b16 %v2145
        %v2161 = vpack.c.b16 %v2158, %v2157
        %v2162 = vpack.c.b16 %v2160, %v2159
        %v2166 = vsel %vm444, %v2141, 0
        %2168 = vmatprep.subr.bf16.mxu0 0
        %2169 = vmatpush1.bf16.msra.mxu0 %v2161
        %2170 = vmatprep.subr.bf16.mxu0 0
        %2171 = vmatpush1.bf16.msra.mxu0 %v2162
        %2172 = vmatprep.subr.bf16.mxu0 0
        %2173 = vmatpush1.bf16.msra.mxu0 0
        %2174 = vmatprep.subr.bf16.mxu0 0
        %2175 = vmatpush1.bf16.msra.mxu0 0
        %2176 = vmatprep.subr.bf16.mxu0 0
        %2177 = vmatpush1.bf16.msra.mxu0 0
        %2178 = vmatprep.subr.bf16.mxu0 0
        %2179 = vmatpush1.bf16.msra.mxu0 0
        %2180 = vmatprep.subr.bf16.mxu0 0
        %2181 = vmatpush1.bf16.msra.mxu0 0
        %2182 = vmatprep.subr.bf16.mxu0 0
        %2183 = vmatpush1.bf16.msra.mxu0 0
        %2184 = vmatprep.subr.bf16.mxu0 0
        %2185 = vmatpush1.bf16.msra.mxu0 0
        %2186 = vmatprep.subr.bf16.mxu0 0
        %2187 = vmatpush1.bf16.msra.mxu0 0
        %2188 = vmatprep.subr.bf16.mxu0 0
        %2189 = vmatpush1.bf16.msra.mxu0 0
        %2190 = vmatprep.subr.bf16.mxu0 0
        %2191 = vmatpush1.bf16.msra.mxu0 0
        %2192 = vmatprep.subr.bf16.mxu0 0
        %2193 = vmatpush1.bf16.msra.mxu0 0
        %2194 = vmatprep.subr.bf16.mxu0 0
        %2195 = vmatpush1.bf16.msra.mxu0 0
        %2196 = vmatprep.subr.bf16.mxu0 0
        %2197 = vmatpush1.bf16.msra.mxu0 0
        %2198 = vmatprep.subr.bf16.mxu0 0
        %2199 = vmatpush1.bf16.msra.mxu0 0
        %2200 = vmatprep.mubr.bf16.mxu0 0
        %2201 = vmatmul.mubr.bf16.gmra.mrb[0].mxu0 %v2166
        %v2202 = vpop.f32.mrb[0].mxu0
        %v2203 = vadd.f32 %v2151, %v2202
        %v2204 = vpop.f32.mrb[0].mxu0
        %v2205 = vpop.f32.mrb[0].mxu0
        %v2206 = vadd.f32 %v2151, %v2205
        %v2207 = vpop.f32.mrb[0].mxu0
        %2208 = vdwg.mxu0
        %v2209 = vadd.f32 %v440, %v2203
        %v2210 = vadd.f32 %v441, %v2206
        %v2211 = vld [vmem:[%s7] sm:$0x1]
        %v2212 = vld [vmem:[%s8] sm:$0x1]
        %v2213 = vsel %vm444, %v2209, 0.0
        %2214 = vadd.xlane.f32.xlu0 %v2213
        %v2215 = vpop.xlane.xlu0 %2214
        %v2216 = vsel %vm444, %v2210, 0.0
        %2217 = vadd.xlane.f32.xlu0 %v2216
        %v2218 = vpop.xlane.xlu0 %2217
        %v2219 = vmul.f32 %v2215, %v451
        %v2220 = vmul.f32 %v2218, %v451
        %v2221 = vmul.f32 %v2209, %v2209
        %v2222 = vmul.f32 %v2210, %v2210
        %v2223 = vsel %vm444, %v2221, 0.0
        %2224 = vadd.xlane.f32.xlu0 %v2223
        %v2225 = vpop.xlane.xlu0 %2224
        %v2226 = vsel %vm444, %v2222, 0.0
        %2227 = vadd.xlane.f32.xlu0 %v2226
        %v2228 = vpop.xlane.xlu0 %2227
        %v2229 = vmul.f32 %v2225, %v451
        %v2230 = vmul.f32 %v2228, %v451
        %v2231 = vmul.f32 %v2219, %v2219
        %v2232 = vmul.f32 %v2220, %v2220
        %v2233 = vsub.f32 %v2229, %v2231
        %v2234 = vsub.f32 %v2230, %v2232
        %v2235 = vmax.f32 %v2233, 0.0
        %v2236 = vmax.f32 %v2234, 0.0
        %v2237 = vsub.f32 %v2209, %v2219
        %v2238 = vsub.f32 %v2210, %v2220
        %v2239 = vadd.f32 %v2235, 1e-05
        %v2240 = vadd.f32 %v2236, 1e-05
        %v2241 = vrsqrt.pop %v2239
        %v2242 = vrsqrt.pop %v2240
        %v2243 = vmul.f32 %v2237, %v2241
        %v2244 = vmul.f32 %v2238, %v2242
        %v2246 = vlaneseq
        %v2247 = vshrl.u32 %v2246, 7
        %v2248 = vsub.s32 0, %v2247
        %v2249 = vrot.slane %v2211, %v2248
        %v2251 = vmul.f32 %v2243, %v2249
        %v2252 = vmul.f32 %v2244, %v2249
        %v2254 = vlaneseq
        %v2255 = vshrl.u32 %v2254, 7
        %v2256 = vsub.s32 0, %v2255
        %v2257 = vrot.slane %v2212, %v2256
        %v2259 = vadd.f32 %v2251, %v2257
        %v2260 = vadd.f32 %v2252, %v2257
        %v2261 = vpack.c.bf16 %v2260, %v2259
        %v2262 = vld [vmem:[%s9] sm:$0xf]
        %v2263 = vld [vmem:[%s9 + $0x4] sm:$0xf]
        %v2264 = vld [vmem:[%s9 + $0x8] sm:$0xf]
        %v2265 = vld [vmem:[%s9 + $0xc] sm:$0xf]
        %v2266 = vld [vmem:[%s10] sm:$0x1]
        %v2268 = vlaneseq
        %v2269 = vshrl.u32 %v2268, 7
        %v2270 = vsub.s32 0, %v2269
        %v2271 = vrot.slane %v2266, %v2270
        %v2277 = vunpack.c.l.b16 %v2262
        %v2278 = vunpack.c.l.b16 %v2263
        %v2279 = vunpack.c.l.b16 %v2264
        %v2280 = vunpack.c.l.b16 %v2265
        %v2281 = vpack.c.b16 %v2278, %v2277
        %v2282 = vpack.c.b16 %v2280, %v2279
        %v2286 = vsel %vm444, %v2261, 0
        %2288 = vmatprep.subr.bf16.mxu0 0
        %2289 = vmatpush1.bf16.msra.mxu0 %v2281
        %2290 = vmatprep.subr.bf16.mxu0 0
        %2291 = vmatpush1.bf16.msra.mxu0 %v2282
        %2292 = vmatprep.subr.bf16.mxu0 0
        %2293 = vmatpush1.bf16.msra.mxu0 0
        %2294 = vmatprep.subr.bf16.mxu0 0
        %2295 = vmatpush1.bf16.msra.mxu0 0
        %2296 = vmatprep.subr.bf16.mxu0 0
        %2297 = vmatpush1.bf16.msra.mxu0 0
        %2298 = vmatprep.subr.bf16.mxu0 0
        %2299 = vmatpush1.bf16.msra.mxu0 0
        %2300 = vmatprep.subr.bf16.mxu0 0
        %2301 = vmatpush1.bf16.msra.mxu0 0
        %2302 = vmatprep.subr.bf16.mxu0 0
        %2303 = vmatpush1.bf16.msra.mxu0 0
        %2304 = vmatprep.subr.bf16.mxu0 0
        %2305 = vmatpush1.bf16.msra.mxu0 0
        %2306 = vmatprep.subr.bf16.mxu0 0
        %2307 = vmatpush1.bf16.msra.mxu0 0
        %2308 = vmatprep.subr.bf16.mxu0 0
        %2309 = vmatpush1.bf16.msra.mxu0 0
        %2310 = vmatprep.subr.bf16.mxu0 0
        %2311 = vmatpush1.bf16.msra.mxu0 0
        %2312 = vmatprep.subr.bf16.mxu0 0
        %2313 = vmatpush1.bf16.msra.mxu0 0
        %2314 = vmatprep.subr.bf16.mxu0 0
        %2315 = vmatpush1.bf16.msra.mxu0 0
        %2316 = vmatprep.subr.bf16.mxu0 0
        %2317 = vmatpush1.bf16.msra.mxu0 0
        %2318 = vmatprep.subr.bf16.mxu0 0
        %2319 = vmatpush1.bf16.msra.mxu0 0
        %2320 = vmatprep.mubr.bf16.mxu0 0
        %2321 = vmatmul.mubr.bf16.gmra.mrb[0].mxu0 %v2286
        %v2322 = vpop.f32.mrb[0].mxu0
        %v2323 = vadd.f32 %v2271, %v2322
        %v2324 = vpop.f32.mrb[0].mxu0
        %v2325 = vpop.f32.mrb[0].mxu0
        %v2326 = vadd.f32 %v2271, %v2325
        %v2327 = vpop.f32.mrb[0].mxu0
        %2328 = vdwg.mxu0
        %v2329 = vmul.f32 %v2323, %v2323
        %v2330 = vmul.f32 %v2326, %v2326
        %v2331 = vmul.f32 %v2323, %v2329
        %v2332 = vmul.f32 %v2326, %v2330
        %v2333 = vmul.f32 %v2331, 0.044715
        %v2334 = vmul.f32 %v2332, 0.044715
        %v2335 = vadd.f32 %v2323, %v2333
        %v2336 = vadd.f32 %v2326, %v2334
        %v2337 = vmul.f32 %v2335, 0.7978846
        %v2338 = vmul.f32 %v2336, 0.7978846
        %v2339 = vtanh.pop %v2337
        %v2340 = vtanh.pop %v2338
        %v2341 = vadd.f32 %v2339, 1.0
        %v2342 = vadd.f32 %v2340, 1.0
        %v2343 = vmul.f32 %v2341, 0.5
        %v2344 = vmul.f32 %v2342, 0.5
        %v2345 = vmul.f32 %v2323, %v2343
        %v2346 = vmul.f32 %v2326, %v2344
        %v2347 = vpack.c.bf16 %v2346, %v2345
        %v2348 = vld [vmem:[%s11] sm:$0xf]
        %v2349 = vld [vmem:[%s11 + $0x4] sm:$0xf]
        %v2350 = vld [vmem:[%s11 + $0x8] sm:$0xf]
        %v2351 = vld [vmem:[%s11 + $0xc] sm:$0xf]
        %v2352 = vld [vmem:[%s11 + $0x10] sm:$0xf]
        %v2353 = vld [vmem:[%s11 + $0x14] sm:$0xf]
        %v2354 = vld [vmem:[%s11 + $0x18] sm:$0xf]
        %v2355 = vld [vmem:[%s11 + $0x1c] sm:$0xf]
        %v2356 = vld [vmem:[%s11 + $0x20] sm:$0xf]
        %v2357 = vld [vmem:[%s11 + $0x24] sm:$0xf]
        %v2358 = vld [vmem:[%s11 + $0x28] sm:$0xf]
        %v2359 = vld [vmem:[%s11 + $0x2c] sm:$0xf]
        %v2360 = vld [vmem:[%s11 + $0x30] sm:$0xf]
        %v2361 = vld [vmem:[%s11 + $0x34] sm:$0xf]
        %v2362 = vld [vmem:[%s11 + $0x38] sm:$0xf]
        %v2363 = vld [vmem:[%s11 + $0x3c] sm:$0xf]
        %v2364 = vld [vmem:[%s12] sm:$0x1]
        %v2366 = vlaneseq
        %v2367 = vshrl.u32 %v2366, 7
        %v2368 = vsub.s32 0, %v2367
        %v2369 = vrot.slane %v2364, %v2368
        %v2387 = vunpack.c.l.b16 %v2348
        %v2388 = vunpack.c.l.b16 %v2349
        %v2389 = vunpack.c.l.b16 %v2350
        %v2390 = vunpack.c.l.b16 %v2351
        %v2391 = vunpack.c.l.b16 %v2352
        %v2392 = vunpack.c.l.b16 %v2353
        %v2393 = vunpack.c.l.b16 %v2354
        %v2394 = vunpack.c.l.b16 %v2355
        %v2395 = vunpack.c.l.b16 %v2356
        %v2396 = vunpack.c.l.b16 %v2357
        %v2397 = vunpack.c.l.b16 %v2358
        %v2398 = vunpack.c.l.b16 %v2359
        %v2399 = vunpack.c.l.b16 %v2360
        %v2400 = vunpack.c.l.b16 %v2361
        %v2401 = vunpack.c.l.b16 %v2362
        %v2402 = vunpack.c.l.b16 %v2363
        %v2403 = vpack.c.b16 %v2388, %v2387
        %v2404 = vpack.c.b16 %v2390, %v2389
        %v2405 = vpack.c.b16 %v2392, %v2391
        %v2406 = vpack.c.b16 %v2394, %v2393
        %v2407 = vpack.c.b16 %v2396, %v2395
        %v2408 = vpack.c.b16 %v2398, %v2397
        %v2409 = vpack.c.b16 %v2400, %v2399
        %v2410 = vpack.c.b16 %v2402, %v2401
        %2419 = vmatprep.subr.bf16.mxu0 0
        %2420 = vmatpush1.bf16.msra.mxu0 %v2403
        %2421 = vmatprep.subr.bf16.mxu0 0
        %2422 = vmatpush1.bf16.msra.mxu0 %v2404
        %2423 = vmatprep.subr.bf16.mxu0 0
        %2424 = vmatpush1.bf16.msra.mxu0 %v2405
        %2425 = vmatprep.subr.bf16.mxu0 0
        %2426 = vmatpush1.bf16.msra.mxu0 %v2406
        %2427 = vmatprep.subr.bf16.mxu0 0
        %2428 = vmatpush1.bf16.msra.mxu0 %v2407
        %2429 = vmatprep.subr.bf16.mxu0 0
        %2430 = vmatpush1.bf16.msra.mxu0 %v2408
        %2431 = vmatprep.subr.bf16.mxu0 0
        %2432 = vmatpush1.bf16.msra.mxu0 %v2409
        %2433 = vmatprep.subr.bf16.mxu0 0
        %2434 = vmatpush1.bf16.msra.mxu0 %v2410
        %2435 = vmatprep.subr.bf16.mxu0 0
        %2436 = vmatpush1.bf16.msra.mxu0 0
        %2437 = vmatprep.subr.bf16.mxu0 0
        %2438 = vmatpush1.bf16.msra.mxu0 0
        %2439 = vmatprep.subr.bf16.mxu0 0
        %2440 = vmatpush1.bf16.msra.mxu0 0
        %2441 = vmatprep.subr.bf16.mxu0 0
        %2442 = vmatpush1.bf16.msra.mxu0 0
        %2443 = vmatprep.subr.bf16.mxu0 0
        %2444 = vmatpush1.bf16.msra.mxu0 0
        %2445 = vmatprep.subr.bf16.mxu0 0
        %2446 = vmatpush1.bf16.msra.mxu0 0
        %2447 = vmatprep.subr.bf16.mxu0 0
        %2448 = vmatpush1.bf16.msra.mxu0 0
        %2449 = vmatprep.subr.bf16.mxu0 0
        %2450 = vmatpush1.bf16.msra.mxu0 0
        %2451 = vmatprep.mubr.bf16.mxu0 0
        %2452 = vmatmul.mubr.bf16.gmra.mrb[0].mxu0 %v2347
        %v2453 = vpop.f32.mrb[0].mxu0
        %v2454 = vadd.f32 %v2369, %v2453
        %v2455 = vpop.f32.mrb[0].mxu0
        %v2456 = vpop.f32.mrb[0].mxu0
        %v2457 = vadd.f32 %v2369, %v2456
        %v2458 = vpop.f32.mrb[0].mxu0
        %2459 = vdwg.mxu0
        %v2460 = vadd.f32 %v2209, %v2454
        %v2461 = vadd.f32 %v2210, %v2457
        %2462 = vst.msk [vmem:[%s433] sm:$0xff] %vm444, %v2460
        %2463 = vst.msk [vmem:[%s433 + $0x8] sm:$0xff] %vm444, %v2461
        %s2464 = sand.u32 %s313, 1
        %s2465 = scalar_lea.sflag [#allocation3], %s2464
        %s2466 = sand.u32 %s313, 1
        %s2467 = smul.addr %s2466, 16
        %s2468 = scalar_lea.vmem [#allocation2], %s2467
        // Predicated region
        $region73: #{tpu_custom_call.1} parent=71 // pred_check
          %p2469 = pneg %p323
        $region74: #{tpu_custom_call.1} parent=71 // pred_check_branch
          %2471 = sbr.rel (%p2469) target = $region76
        $region75: #{tpu_custom_call.1} parent=71 // pred_region
          %s2473 = ssub.s32 256, 256
          %2474 = vsyncadd %s2465, %s2473
          %s2475 = smul.addr %s27, 2
          %s2476 = smul.addr %s2475, 128
          %s2477 = scalar_lea.hbm %s13, %s2476
          %s2478 = sshll.u32 %s2468, 4
          %s2479 = int_to_ptr.vmem [resolvable:$true] %s2478
          %2484 = dma.vmem_to_hbm [thread:$0]  %s2479, 256, %s2477, %s2465, 128, 128, 8
        $region76: #{tpu_custom_call.1} parent=71 // pred_fallthru
          _
      $region72: #{tpu_custom_call.1} parent=5 // pred_fallthru
        _
      %p2485 = scmp.le.s32.totalorder 2, %s22
      // Predicated region
      $region77: #{tpu_custom_call.1} parent=5 // pred_check
        %p2486 = pneg %p2485
      $region78: #{tpu_custom_call.1} parent=5 // pred_check_branch
        %2488 = sbr.rel (%p2486) target = $region80
      $region79: #{tpu_custom_call.1} parent=5 // pred_region
        %s2489 = ssub.s32 %s22, 2
        // Predicated region
        $region81: #{tpu_custom_call.1} parent=79 // pred_check
          %p2490 = pneg %p329
        $region82: #{tpu_custom_call.1} parent=79 // pred_check_branch
          %2492 = sbr.rel (%p2490) target = $region84
        $region83: #{tpu_custom_call.1} parent=79 // pred_region
          %s2493 = sand.u32 %s314, 1
          %s2494 = scalar_lea.sflag [#allocation3], %s2493
          %s2495 = sand.u32 %s314, 1
          %s2496 = smul.addr %s2495, 16
          %s2497 = scalar_lea.vmem [#allocation2], %s2496
          %2498 = dma.done %s2494, 256
        $region84: #{tpu_custom_call.1} parent=79 // pred_fallthru
          _
      $region80: #{tpu_custom_call.1} parent=5 // pred_fallthru
        _
    $region6: #{tpu_custom_call.1} parent=1 // loop_footer
      %s26 = sadd.s32 1, %s22
    $region7: #{tpu_custom_call.1} parent=1 // loop_footer_branch
      %21 = sbr.rel target = $region3
    $region8: #{tpu_custom_call.1} parent=1 // loop_exit
      _
    %2499 = vsyncpa [#allocation3], 1
    %s2500 = scalar_lea.sflag [#allocation3], 1
    %2501 = vsyncpa %s2500, 1

</llo_original>
